<compile_context>
chip_gen: v5e
topology: v5e:2x2
jax: 0.10.0
libtpu: 0.0.40
codegen_flags: <defaults>
</compile_context>

<pallas_src>
import functools

import jax
import jax.numpy as jnp
from jax import lax
from jax.experimental import pallas as pl
from jax.experimental.pallas import tpu as pltpu

EPS = 1e-5
_COMPUTE_DTYPE = jnp.bfloat16  # MXU operand dtype; accumulation stays f32.


# ----------------------------------------------------------------------------- utils
@functools.lru_cache(maxsize=None)
def _vmem_limit_bytes():
    """Generation-aware scoped-VMEM cap with headroom for double buffers."""
    cap = 64 * 1024 * 1024
    try:
        info = pltpu.get_tpu_info()
        cap = int(getattr(info, "vmem_capacity_bytes", cap) or cap)
    except Exception:
        pass
    return (cap * 3) // 4


def _compiler_params(semantics):
    return pltpu.CompilerParams(dimension_semantics=semantics,
                                vmem_limit_bytes=_vmem_limit_bytes())


def _pick_row_block(Ho, Wo, Cmid, Cin, Cout, stride, target_rows=2048):
    """Largest divisor of Ho whose row tile fits the VMEM budget / row target."""
    bytes_per_row = (2 * 2 * Wo * (Cmid + stride * stride * Cin + Cout)
                     + 4 * Wo * Cout)
    budget = _vmem_limit_bytes() // 2
    cap = max(1, min(target_rows // max(Wo, 1), budget // max(bytes_per_row, 1)))
    tr = 1
    for cand in range(1, Ho + 1):
        if Ho % cand == 0 and cand <= cap:
            tr = cand
    return tr


def _fold_bn_into_w(w, gamma, beta, mean, var, *, cd):
    """Fold inference BN into the conv weight (f32 multiply, then bf16 cast)."""
    scale = gamma / jnp.sqrt(var + EPS)            # (Cout,)
    bias = beta - mean * scale                     # (Cout,)
    return (w * scale).astype(cd), bias.reshape(1, -1).astype(jnp.float32)


# ----------------------------------------------------------------------------- kernels
def _conv12_kernel(x_ref, w1_ref, b1_ref, w2_ref, b2_ref, o_ref, xpad_ref, *,
                   stride):
    # Fused conv1 (1x1) + bn1 + relu + conv2 (3x3, pad=1, stride) + bn2 + relu
    # for one image per grid step.  BN is pre-folded into the weights/biases.
    _, H, W, Cin = x_ref.shape
    _, Ho, Wo, Cmid = o_ref.shape

    # conv1: 1x1 conv == channel matmul over M = H*W rows of this image.
    y1 = jnp.dot(x_ref[0].reshape(H * W, Cin), w1_ref[...],
                 preferred_element_type=jnp.float32)
    y1 = jnp.maximum(y1 + b1_ref[...], 0.0).astype(xpad_ref.dtype)

    # Place y1 directly into the interior of the persistent padded scratch.
    # Only the 1-px border is (re)zeroed each step — four thin strip stores,
    # safe under "parallel" grid semantics (per-core scratch).
    zrow = jnp.zeros((1, W + 2, Cmid), xpad_ref.dtype)
    zcol = jnp.zeros((H + 2, 1, Cmid), xpad_ref.dtype)
    xpad_ref[0:1, :, :] = zrow
    xpad_ref[H + 1:H + 2, :, :] = zrow
    xpad_ref[:, 0:1, :] = zcol
    xpad_ref[:, W + 1:W + 2, :] = zcol
    xpad_ref[1:H + 1, 1:W + 1, :] = y1.reshape(H, W, Cmid)
    xpad = xpad_ref[...]

    # conv2: 9 taps accumulated into a compiler-managed f32 value
    # (no explicit VMEM-scratch read-modify-write per tap).
    acc = None
    for dy in range(3):
        for dx in range(3):
            patch = lax.slice(
                xpad, (dy, dx, 0),
                (dy + (Ho - 1) * stride + 1, dx + (Wo - 1) * stride + 1, Cmid),
                (stride, stride, 1)).reshape(Ho * Wo, Cmid)
            d = jnp.dot(patch, w2_ref[dy, dx], preferred_element_type=jnp.float32)
            acc = d if acc is None else acc + d

    y2 = jnp.maximum(acc + b2_ref[...], 0.0)
    o_ref[...] = y2.reshape(1, Ho, Wo, Cmid).astype(o_ref.dtype)


def _conv3_proj_kernel(y_ref, x_ref, w3_ref, wsc_ref, b_ref, o_ref, *, stride):
    # conv3 (1x1) + bn3 fused with the projection shortcut (strided 1x1 + bn),
    # residual add and ReLU.  Single f32 accumulator, combined bias b3 + bsc.
    _, TR, Wo, Cmid = y_ref.shape
    _, TRs, Ws, Cin = x_ref.shape
    Cout = o_ref.shape[-1]

    y2 = y_ref[0].reshape(TR * Wo, Cmid)
    xs = lax.slice(x_ref[0], (0, 0, 0), (TRs, Ws, Cin),
                   (stride, stride, 1)).reshape(TR * Wo, Cin)

    acc = jnp.dot(y2, w3_ref[...], preferred_element_type=jnp.float32)
    acc = acc + jnp.dot(xs, wsc_ref[...], preferred_element_type=jnp.float32)
    out = jnp.maximum(acc + b_ref[...], 0.0)
    o_ref[...] = out.reshape(1, TR, Wo, Cout).astype(o_ref.dtype)


def _conv3_identity_kernel(y_ref, x_ref, w3_ref, b_ref, o_ref):
    # conv3 (1x1) + bn3 + identity residual add + ReLU.
    _, TR, Wo, Cmid = y_ref.shape
    Cout = o_ref.shape[-1]

    y2 = y_ref[0].reshape(TR * Wo, Cmid)
    acc = jnp.dot(y2, w3_ref[...], preferred_element_type=jnp.float32)
    acc = acc + b_ref[...] + x_ref[0].reshape(TR * Wo, Cout).astype(jnp.float32)
    o_ref[...] = jnp.maximum(acc, 0.0).reshape(1, TR, Wo, Cout).astype(o_ref.dtype)


# ----------------------------------------------------------------------------- wrappers
def conv12_fused(x, w1f, b1, w2f, b2, *, stride, out_dtype):
    N, H, W, Cin = x.shape
    Cmid = w1f.shape[1]
    Ho = (H - 1) // stride + 1
    Wo = (W - 1) // stride + 1
    return pl.pallas_call(
        functools.partial(_conv12_kernel, stride=stride),
        out_shape=jax.ShapeDtypeStruct((N, Ho, Wo, Cmid), out_dtype),
        grid=(N,),
        in_specs=[pl.BlockSpec((1, H, W, Cin), lambda n: (n, 0, 0, 0)),
                  pl.BlockSpec((Cin, Cmid), lambda n: (0, 0)),
                  pl.BlockSpec((1, Cmid), lambda n: (0, 0)),
                  pl.BlockSpec((3, 3, Cmid, Cmid), lambda n: (0, 0, 0, 0)),
                  pl.BlockSpec((1, Cmid), lambda n: (0, 0))],
        out_specs=pl.BlockSpec((1, Ho, Wo, Cmid), lambda n: (n, 0, 0, 0)),
        scratch_shapes=[pltpu.VMEM((H + 2, W + 2, Cmid), out_dtype)],
        compiler_params=_compiler_params(("parallel",)),
    )(x, w1f, b1, w2f, b2)


def conv3_shortcut_proj(y2, x, w3f, wscf, bias, *, stride, out_dtype):
    N, Ho, Wo, Cmid = y2.shape
    Cin = x.shape[-1]
    Cout = w3f.shape[1]
    Hs, Ws = Ho * stride, Wo * stride
    if x.shape[1] != Hs or x.shape[2] != Ws:
        # Rare: H/W not divisible by stride; pad so row blocks tile exactly.
        x = jnp.pad(x, ((0, 0), (0, Hs - x.shape[1]), (0, Ws - x.shape[2]), (0, 0)))
    TR = _pick_row_block(Ho, Wo, Cmid, Cin, Cout, stride)
    return pl.pallas_call(
        functools.partial(_conv3_proj_kernel, stride=stride),
        out_shape=jax.ShapeDtypeStruct((N, Ho, Wo, Cout), out_dtype),
        grid=(N, Ho // TR),
        in_specs=[pl.BlockSpec((1, TR, Wo, Cmid), lambda n, r: (n, r, 0, 0)),
                  pl.BlockSpec((1, TR * stride, Ws, Cin), lambda n, r: (n, r, 0, 0)),
                  pl.BlockSpec((Cmid, Cout), lambda n, r: (0, 0)),
                  pl.BlockSpec((Cin, Cout), lambda n, r: (0, 0)),
                  pl.BlockSpec((1, Cout), lambda n, r: (0, 0))],
        out_specs=pl.BlockSpec((1, TR, Wo, Cout), lambda n, r: (n, r, 0, 0)),
        compiler_params=_compiler_params(("parallel", "parallel")),
    )(y2, x, w3f, wscf, bias)


def conv3_shortcut_identity(y2, x, w3f, bias, *, out_dtype):
    N, Ho, Wo, Cmid = y2.shape
    Cout = w3f.shape[1]
    TR = _pick_row_block(Ho, Wo, Cmid, Cout, Cout, 1)
    return pl.pallas_call(
        _conv3_identity_kernel,
        out_shape=jax.ShapeDtypeStruct((N, Ho, Wo, Cout), out_dtype),
        grid=(N, Ho // TR),
        in_specs=[pl.BlockSpec((1, TR, Wo, Cmid), lambda n, r: (n, r, 0, 0)),
                  pl.BlockSpec((1, TR, Wo, Cout), lambda n, r: (n, r, 0, 0)),
                  pl.BlockSpec((Cmid, Cout), lambda n, r: (0, 0)),
                  pl.BlockSpec((1, Cout), lambda n, r: (0, 0))],
        out_specs=pl.BlockSpec((1, TR, Wo, Cout), lambda n, r: (n, r, 0, 0)),
        compiler_params=_compiler_params(("parallel", "parallel")),
    )(y2, x, w3f, bias)


# ----------------------------------------------------------------------------- module
def init_bottleneck_params(key, in_planes, planes, stride=1, expansion=4):
    ks = jax.random.split(key, 12)
    out_planes = expansion * planes

    def bn_params(k, c):
        k1, k2, k3, k4 = jax.random.split(k, 4)
        gamma = jax.random.uniform(k1, (c,), jnp.float32, 0.5, 1.5)
        beta = 0.1 * jax.random.normal(k2, (c,), jnp.float32)
        mean = 0.1 * jax.random.normal(k3, (c,), jnp.float32)
        var = jax.random.uniform(k4, (c,), jnp.float32, 0.5, 1.5)
        return gamma, beta, mean, var

    p = {
        # conv weights stored channels-last friendly: 1x1 as (Cin, Cout), 3x3 HWIO.
        "w1": 0.1 * jax.random.normal(ks[0], (in_planes, planes), jnp.float32),
        "bn1": bn_params(ks[1], planes),
        "w2": 0.1 * jax.random.normal(ks[2], (3, 3, planes, planes), jnp.float32),
        "bn2": bn_params(ks[3], planes),
        "w3": 0.1 * jax.random.normal(ks[4], (planes, out_planes), jnp.float32),
        "bn3": bn_params(ks[5], out_planes),
    }
    if stride != 1 or in_planes != out_planes:
        p["w_sc"] = 0.1 * jax.random.normal(ks[6], (in_planes, out_planes), jnp.float32)
        p["bn_sc"] = bn_params(ks[7], out_planes)
    return p


def bottleneck_forward(x_nchw, params, *, planes, stride=1, expansion=4,
                       compute_dtype=_COMPUTE_DTYPE):
    # NCHW in -> NHWC/bf16 internally (one fused transpose+cast pass) -> NCHW out.
    # In a real multi-block network, keep activations NHWC/bf16 between blocks so
    # the boundary transposes disappear entirely.
    cd = compute_dtype
    x = jnp.transpose(x_nchw, (0, 2, 3, 1)).astype(cd)
    N, H, W, Cin = x.shape
    out_planes = expansion * planes

    w1f, b1 = _fold_bn_into_w(params["w1"], *params["bn1"], cd=cd)
    w2f, b2 = _fold_bn_into_w(params["w2"], *params["bn2"], cd=cd)
    w3f, b3 = _fold_bn_into_w(params["w3"], *params["bn3"], cd=cd)

    # conv1 (1x1)+bn1+relu + conv2 (3x3,stride,pad=1)+bn2+relu — fused per image.
    y2 = conv12_fused(x, w1f, b1, w2f, b2, stride=stride, out_dtype=cd)

    # conv3 (1x1)+bn3 + shortcut + add + relu — fused, (batch, row-tile) grid.
    if "w_sc" in params:
        wscf, bsc = _fold_bn_into_w(params["w_sc"], *params["bn_sc"], cd=cd)
        out = conv3_shortcut_proj(y2, x, w3f, wscf, b3 + bsc,
                                  stride=stride, out_dtype=cd)
    else:
        assert stride == 1 and Cin == out_planes, (
            "identity shortcut requires stride=1 and in_planes == expansion*planes")
        out = conv3_shortcut_identity(y2, x, w3f, b3, out_dtype=cd)

    return jnp.transpose(out, (0, 3, 1, 2))


# ----------------------------------------------------------------------------- reference
def reference_forward(x_nchw, params, *, planes, stride=1, expansion=4,
                      compute_dtype=_COMPUTE_DTYPE):
    # f32 reference computed from the same bf16-rounded operands as the kernels.
    def rd(a):
        return a.astype(compute_dtype).astype(jnp.float32)

    x = rd(jnp.transpose(x_nchw, (0, 2, 3, 1)))

    def bn(y, prm):
        g, b, m, v = prm
        return (y - m) / jnp.sqrt(v + EPS) * g + b

    out = jax.nn.relu(bn(jnp.einsum("nhwc,cd->nhwd", x, rd(params["w1"])), params["bn1"]))
    out = lax.conv_general_dilated(
        out, rd(params["w2"]), (stride, stride), ((1, 1), (1, 1)),
        dimension_numbers=("NHWC", "HWIO", "NHWC"))
    out = jax.nn.relu(bn(out, params["bn2"]))
    out = bn(jnp.einsum("nhwc,cd->nhwd", out, rd(params["w3"])), params["bn3"])
    if "w_sc" in params:
        sc = jnp.einsum("nhwc,cd->nhwd", x[:, ::stride, ::stride, :], rd(params["w_sc"]))
        sc = bn(sc, params["bn_sc"])
    else:
        sc = x
    out = jax.nn.relu(out + sc)
    return jnp.transpose(out, (0, 3, 1, 2))


# ----------------------------------------------------------------------------- main
def _check(x, params, planes, stride, expected_shape, tag):
    out = jax.block_until_ready(
        bottleneck_forward(x, params, planes=planes, stride=stride))
    ref = reference_forward(x, params, planes=planes, stride=stride)
    out_f32 = out.astype(jnp.float32)
    assert out.shape == expected_shape, (tag, out.shape)
    assert bool(jnp.all(jnp.isfinite(out_f32))), tag
    assert bool(jnp.allclose(out_f32, ref, atol=3e-2, rtol=5e-2)), (
        tag, float(jnp.max(jnp.abs(out_f32 - ref))))


if __name__ == "__main__":
    key = jax.random.PRNGKey(0)
    kx, kp1, kp2, kp3 = jax.random.split(key, 4)

    # Config 1: stride=1, projection shortcut (in_planes != expansion*planes).
    x1 = jax.random.normal(kx, (2, 4, 16, 16), jnp.float32)   # NCHW like PyTorch
    p1 = init_bottleneck_params(kp1, 4, 4, 1)
    _check(x1, p1, planes=4, stride=1, expected_shape=(2, 16, 16, 16), tag="proj_s1")

    # Config 2: stride=2, projection shortcut (exercises strided conv2 + shortcut).
    x2 = jax.random.normal(kx, (2, 16, 16, 16), jnp.float32)
    p2 = init_bottleneck_params(kp2, 16, 4, 2)
    _check(x2, p2, planes=4, stride=2, expected_shape=(2, 16, 8, 8), tag="proj_s2")

    # Config 3: identity shortcut (in_planes == expansion*planes, stride=1).
    x3 = jax.random.normal(kx, (2, 16, 16, 16), jnp.float32)
    p3 = init_bottleneck_params(kp3, 16, 4, 1)
    _check(x3, p3, planes=4, stride=1, expected_shape=(2, 16, 16, 16), tag="ident_s1")

    print("KERNEL_OK")
</pallas_src>

<mosaic_0001>
module attributes {stable_mosaic.version = 11 : i64} {
  func.func @_conv12_kernel(%arg0: i32, %arg1: memref<1x16x16x4xbf16, #tpu.memory_space<vmem>>, %arg2: memref<4x4xbf16, #tpu.memory_space<vmem>>, %arg3: memref<1x4xf32, #tpu.memory_space<vmem>>, %arg4: memref<3x3x4x4xbf16, #tpu.memory_space<vmem>>, %arg5: memref<1x4xf32, #tpu.memory_space<vmem>>, %arg6: memref<1x16x16x4xbf16, #tpu.memory_space<vmem>>, %arg7: memref<18x18x4xbf16, #tpu.memory_space<vmem>>) attributes {dimension_semantics = [#tpu.dimension_semantics<parallel>], iteration_bounds = array<i64: 2>, scalar_prefetch = 0 : i64, scratch_operands = 1 : i64, tpu.core_type = #tpu.core_type<tc>, window_params = [{transform_indices = @transform_0, window_bounds = array<i64: 1, 16, 16, 4>}, {pipeline_mode = #tpu.pipeline_mode<synchronous>, transform_indices = @transform_1, window_bounds = array<i64: 4, 4>}, {pipeline_mode = #tpu.pipeline_mode<synchronous>, transform_indices = @transform_2, window_bounds = array<i64: 1, 4>}, {pipeline_mode = #tpu.pipeline_mode<synchronous>, transform_indices = @transform_3, window_bounds = array<i64: 3, 3, 4, 4>}, {pipeline_mode = #tpu.pipeline_mode<synchronous>, transform_indices = @transform_4, window_bounds = array<i64: 1, 4>}, {transform_indices = @transform_5, window_bounds = array<i64: 1, 16, 16, 4>}]} {
    %c0 = arith.constant 0 : index
    %c0_0 = arith.constant 0 : index
    %c0_1 = arith.constant 0 : index
    %c0_2 = arith.constant 0 : index
    %0 = vector.load %arg1[%c0, %c0_0, %c0_1, %c0_2] : memref<1x16x16x4xbf16, #tpu.memory_space<vmem>>, vector<1x16x16x4xbf16>
    %1 = vector.shape_cast %0 : vector<1x16x16x4xbf16> to vector<16x16x4xbf16>
    %2 = vector.shape_cast %1 : vector<16x16x4xbf16> to vector<256x4xbf16>
    %c0_3 = arith.constant 0 : index
    %c0_4 = arith.constant 0 : index
    %3 = vector.load %arg2[%c0_3, %c0_4] : memref<4x4xbf16, #tpu.memory_space<vmem>>, vector<4x4xbf16>
    %cst = arith.constant dense<0.000000e+00> : vector<256x4xf32>
    %4 = tpu.matmul %2, %3, %cst {dimension_numbers = #tpu.dot_dimension_numbers<[1], [0], [0], [1], [0, 0, 1, 1], [], []>} : vector<256x4xbf16>, vector<4x4xbf16>, vector<256x4xf32> -> vector<256x4xf32>
    %c0_5 = arith.constant 0 : index
    %c0_6 = arith.constant 0 : index
    %5 = vector.load %arg3[%c0_5, %c0_6] : memref<1x4xf32, #tpu.memory_space<vmem>>, vector<1x4xf32>
    %6 = vector.broadcast %5 : vector<1x4xf32> to vector<256x4xf32>
    %7 = arith.addf %4, %6 : vector<256x4xf32>
    %cst_7 = arith.constant 0.000000e+00 : f32
    %8 = vector.broadcast %cst_7 : f32 to vector<256x4xf32>
    %9 = arith.maximumf %7, %8 : vector<256x4xf32>
    %10 = arith.truncf %9 : vector<256x4xf32> to vector<256x4xbf16>
    %cst_8 = arith.constant 0.000000e+00 : bf16
    %11 = vector.broadcast %cst_8 : bf16 to vector<1x18x4xbf16>
    %cst_9 = arith.constant 0.000000e+00 : bf16
    %12 = vector.broadcast %cst_9 : bf16 to vector<18x1x4xbf16>
    %c0_10 = arith.constant 0 : index
    %c0_11 = arith.constant 0 : index
    %c0_12 = arith.constant 0 : index
    %13 = vector.load %arg7[%c0_10, %c0_11, %c0_12] : memref<18x18x4xbf16, #tpu.memory_space<vmem>>, vector<1x18x4xbf16>
    tpu.vector_store %arg7[%c0_10, %c0_11, %c0_12], %11 {strides = array<i32>} : memref<18x18x4xbf16, #tpu.memory_space<vmem>>, vector<1x18x4xbf16>,
    %c17 = arith.constant 17 : index
    %c0_13 = arith.constant 0 : index
    %c0_14 = arith.constant 0 : index
    %14 = vector.load %arg7[%c17, %c0_13, %c0_14] : memref<18x18x4xbf16, #tpu.memory_space<vmem>>, vector<1x18x4xbf16>
    tpu.vector_store %arg7[%c17, %c0_13, %c0_14], %11 {strides = array<i32>} : memref<18x18x4xbf16, #tpu.memory_space<vmem>>, vector<1x18x4xbf16>,
    %c0_15 = arith.constant 0 : index
    %c0_16 = arith.constant 0 : index
    %c0_17 = arith.constant 0 : index
    %15 = vector.load %arg7[%c0_15, %c0_16, %c0_17] : memref<18x18x4xbf16, #tpu.memory_space<vmem>>, vector<18x1x4xbf16>
    tpu.vector_store %arg7[%c0_15, %c0_16, %c0_17], %12 {strides = array<i32>} : memref<18x18x4xbf16, #tpu.memory_space<vmem>>, vector<18x1x4xbf16>,
    %c0_18 = arith.constant 0 : index
    %c17_19 = arith.constant 17 : index
    %c0_20 = arith.constant 0 : index
    %16 = vector.load %arg7[%c0_18, %c17_19, %c0_20] : memref<18x18x4xbf16, #tpu.memory_space<vmem>>, vector<18x1x4xbf16>
    tpu.vector_store %arg7[%c0_18, %c17_19, %c0_20], %12 {strides = array<i32>} : memref<18x18x4xbf16, #tpu.memory_space<vmem>>, vector<18x1x4xbf16>,
    %17 = vector.shape_cast %10 : vector<256x4xbf16> to vector<16x16x4xbf16>
    %c1 = arith.constant 1 : index
    %c1_21 = arith.constant 1 : index
    %c0_22 = arith.constant 0 : index
    %18 = vector.load %arg7[%c1, %c1_21, %c0_22] : memref<18x18x4xbf16, #tpu.memory_space<vmem>>, vector<16x16x4xbf16>
    tpu.vector_store %arg7[%c1, %c1_21, %c0_22], %17 {strides = array<i32>} : memref<18x18x4xbf16, #tpu.memory_space<vmem>>, vector<16x16x4xbf16>,
    %c0_23 = arith.constant 0 : index
    %c0_24 = arith.constant 0 : index
    %c0_25 = arith.constant 0 : index
    %19 = vector.load %arg7[%c0_23, %c0_24, %c0_25] : memref<18x18x4xbf16, #tpu.memory_space<vmem>>, vector<18x18x4xbf16>
    %20 = vector.extract_strided_slice %19 {offsets = [0, 0, 0], sizes = [16, 16, 4], strides = [1, 1, 1]} : vector<18x18x4xbf16> to vector<16x16x4xbf16>
    %21 = vector.shape_cast %20 : vector<16x16x4xbf16> to vector<256x4xbf16>
    %c0_26 = arith.constant 0 : index
    %c0_27 = arith.constant 0 : index
    %c0_28 = arith.constant 0 : index
    %c0_29 = arith.constant 0 : index
    %22 = vector.load %arg4[%c0_26, %c0_27, %c0_28, %c0_29] : memref<3x3x4x4xbf16, #tpu.memory_space<vmem>>, vector<1x1x4x4xbf16>
    %23 = vector.shape_cast %22 : vector<1x1x4x4xbf16> to vector<4x4xbf16>
    %cst_30 = arith.constant dense<0.000000e+00> : vector<256x4xf32>
    %24 = tpu.matmul %21, %23, %cst_30 {dimension_numbers = #tpu.dot_dimension_numbers<[1], [0], [0], [1], [0, 0, 1, 1], [], []>} : vector<256x4xbf16>, vector<4x4xbf16>, vector<256x4xf32> -> vector<256x4xf32>
    %25 = vector.extract_strided_slice %19 {offsets = [0, 1, 0], sizes = [16, 16, 4], strides = [1, 1, 1]} : vector<18x18x4xbf16> to vector<16x16x4xbf16>
    %26 = vector.shape_cast %25 : vector<16x16x4xbf16> to vector<256x4xbf16>
    %c0_31 = arith.constant 0 : index
    %c1_32 = arith.constant 1 : index
    %c0_33 = arith.constant 0 : index
    %c0_34 = arith.constant 0 : index
    %27 = vector.load %arg4[%c0_31, %c1_32, %c0_33, %c0_34] : memref<3x3x4x4xbf16, #tpu.memory_space<vmem>>, vector<1x1x4x4xbf16>
    %28 = vector.shape_cast %27 : vector<1x1x4x4xbf16> to vector<4x4xbf16>
    %cst_35 = arith.constant dense<0.000000e+00> : vector<256x4xf32>
    %29 = tpu.matmul %26, %28, %cst_35 {dimension_numbers = #tpu.dot_dimension_numbers<[1], [0], [0], [1], [0, 0, 1, 1], [], []>} : vector<256x4xbf16>, vector<4x4xbf16>, vector<256x4xf32> -> vector<256x4xf32>
    %30 = arith.addf %24, %29 : vector<256x4xf32>
    %31 = vector.extract_strided_slice %19 {offsets = [0, 2, 0], sizes = [16, 16, 4], strides = [1, 1, 1]} : vector<18x18x4xbf16> to vector<16x16x4xbf16>
    %32 = vector.shape_cast %31 : vector<16x16x4xbf16> to vector<256x4xbf16>
    %c0_36 = arith.constant 0 : index
    %c2 = arith.constant 2 : index
    %c0_37 = arith.constant 0 : index
    %c0_38 = arith.constant 0 : index
    %33 = vector.load %arg4[%c0_36, %c2, %c0_37, %c0_38] : memref<3x3x4x4xbf16, #tpu.memory_space<vmem>>, vector<1x1x4x4xbf16>
    %34 = vector.shape_cast %33 : vector<1x1x4x4xbf16> to vector<4x4xbf16>
    %cst_39 = arith.constant dense<0.000000e+00> : vector<256x4xf32>
    %35 = tpu.matmul %32, %34, %cst_39 {dimension_numbers = #tpu.dot_dimension_numbers<[1], [0], [0], [1], [0, 0, 1, 1], [], []>} : vector<256x4xbf16>, vector<4x4xbf16>, vector<256x4xf32> -> vector<256x4xf32>
    %36 = arith.addf %30, %35 : vector<256x4xf32>
    %37 = vector.extract_strided_slice %19 {offsets = [1, 0, 0], sizes = [16, 16, 4], strides = [1, 1, 1]} : vector<18x18x4xbf16> to vector<16x16x4xbf16>
    %38 = vector.shape_cast %37 : vector<16x16x4xbf16> to vector<256x4xbf16>
    %c1_40 = arith.constant 1 : index
    %c0_41 = arith.constant 0 : index
    %c0_42 = arith.constant 0 : index
    %c0_43 = arith.constant 0 : index
    %39 = vector.load %arg4[%c1_40, %c0_41, %c0_42, %c0_43] : memref<3x3x4x4xbf16, #tpu.memory_space<vmem>>, vector<1x1x4x4xbf16>
    %40 = vector.shape_cast %39 : vector<1x1x4x4xbf16> to vector<4x4xbf16>
    %cst_44 = arith.constant dense<0.000000e+00> : vector<256x4xf32>
    %41 = tpu.matmul %38, %40, %cst_44 {dimension_numbers = #tpu.dot_dimension_numbers<[1], [0], [0], [1], [0, 0, 1, 1], [], []>} : vector<256x4xbf16>, vector<4x4xbf16>, vector<256x4xf32> -> vector<256x4xf32>
    %42 = arith.addf %36, %41 : vector<256x4xf32>
    %43 = vector.extract_strided_slice %19 {offsets = [1, 1, 0], sizes = [16, 16, 4], strides = [1, 1, 1]} : vector<18x18x4xbf16> to vector<16x16x4xbf16>
    %44 = vector.shape_cast %43 : vector<16x16x4xbf16> to vector<256x4xbf16>
    %c1_45 = arith.constant 1 : index
    %c1_46 = arith.constant 1 : index
    %c0_47 = arith.constant 0 : index
    %c0_48 = arith.constant 0 : index
    %45 = vector.load %arg4[%c1_45, %c1_46, %c0_47, %c0_48] : memref<3x3x4x4xbf16, #tpu.memory_space<vmem>>, vector<1x1x4x4xbf16>
    %46 = vector.shape_cast %45 : vector<1x1x4x4xbf16> to vector<4x4xbf16>
    %cst_49 = arith.constant dense<0.000000e+00> : vector<256x4xf32>
    %47 = tpu.matmul %44, %46, %cst_49 {dimension_numbers = #tpu.dot_dimension_numbers<[1], [0], [0], [1], [0, 0, 1, 1], [], []>} : vector<256x4xbf16>, vector<4x4xbf16>, vector<256x4xf32> -> vector<256x4xf32>
    %48 = arith.addf %42, %47 : vector<256x4xf32>
    %49 = vector.extract_strided_slice %19 {offsets = [1, 2, 0], sizes = [16, 16, 4], strides = [1, 1, 1]} : vector<18x18x4xbf16> to vector<16x16x4xbf16>
    %50 = vector.shape_cast %49 : vector<16x16x4xbf16> to vector<256x4xbf16>
    %c1_50 = arith.constant 1 : index
    %c2_51 = arith.constant 2 : index
    %c0_52 = arith.constant 0 : index
    %c0_53 = arith.constant 0 : index
    %51 = vector.load %arg4[%c1_50, %c2_51, %c0_52, %c0_53] : memref<3x3x4x4xbf16, #tpu.memory_space<vmem>>, vector<1x1x4x4xbf16>
    %52 = vector.shape_cast %51 : vector<1x1x4x4xbf16> to vector<4x4xbf16>
    %cst_54 = arith.constant dense<0.000000e+00> : vector<256x4xf32>
    %53 = tpu.matmul %50, %52, %cst_54 {dimension_numbers = #tpu.dot_dimension_numbers<[1], [0], [0], [1], [0, 0, 1, 1], [], []>} : vector<256x4xbf16>, vector<4x4xbf16>, vector<256x4xf32> -> vector<256x4xf32>
    %54 = arith.addf %48, %53 : vector<256x4xf32>
    %55 = vector.extract_strided_slice %19 {offsets = [2, 0, 0], sizes = [16, 16, 4], strides = [1, 1, 1]} : vector<18x18x4xbf16> to vector<16x16x4xbf16>
    %56 = vector.shape_cast %55 : vector<16x16x4xbf16> to vector<256x4xbf16>
    %c2_55 = arith.constant 2 : index
    %c0_56 = arith.constant 0 : index
    %c0_57 = arith.constant 0 : index
    %c0_58 = arith.constant 0 : index
    %57 = vector.load %arg4[%c2_55, %c0_56, %c0_57, %c0_58] : memref<3x3x4x4xbf16, #tpu.memory_space<vmem>>, vector<1x1x4x4xbf16>
    %58 = vector.shape_cast %57 : vector<1x1x4x4xbf16> to vector<4x4xbf16>
    %cst_59 = arith.constant dense<0.000000e+00> : vector<256x4xf32>
    %59 = tpu.matmul %56, %58, %cst_59 {dimension_numbers = #tpu.dot_dimension_numbers<[1], [0], [0], [1], [0, 0, 1, 1], [], []>} : vector<256x4xbf16>, vector<4x4xbf16>, vector<256x4xf32> -> vector<256x4xf32>
    %60 = arith.addf %54, %59 : vector<256x4xf32>
    %61 = vector.extract_strided_slice %19 {offsets = [2, 1, 0], sizes = [16, 16, 4], strides = [1, 1, 1]} : vector<18x18x4xbf16> to vector<16x16x4xbf16>
    %62 = vector.shape_cast %61 : vector<16x16x4xbf16> to vector<256x4xbf16>
    %c2_60 = arith.constant 2 : index
    %c1_61 = arith.constant 1 : index
    %c0_62 = arith.constant 0 : index
    %c0_63 = arith.constant 0 : index
    %63 = vector.load %arg4[%c2_60, %c1_61, %c0_62, %c0_63] : memref<3x3x4x4xbf16, #tpu.memory_space<vmem>>, vector<1x1x4x4xbf16>
    %64 = vector.shape_cast %63 : vector<1x1x4x4xbf16> to vector<4x4xbf16>
    %cst_64 = arith.constant dense<0.000000e+00> : vector<256x4xf32>
    %65 = tpu.matmul %62, %64, %cst_64 {dimension_numbers = #tpu.dot_dimension_numbers<[1], [0], [0], [1], [0, 0, 1, 1], [], []>} : vector<256x4xbf16>, vector<4x4xbf16>, vector<256x4xf32> -> vector<256x4xf32>
    %66 = arith.addf %60, %65 : vector<256x4xf32>
    %67 = vector.extract_strided_slice %19 {offsets = [2, 2, 0], sizes = [16, 16, 4], strides = [1, 1, 1]} : vector<18x18x4xbf16> to vector<16x16x4xbf16>
    %68 = vector.shape_cast %67 : vector<16x16x4xbf16> to vector<256x4xbf16>
    %c2_65 = arith.constant 2 : index
    %c2_66 = arith.constant 2 : index
    %c0_67 = arith.constant 0 : index
    %c0_68 = arith.constant 0 : index
    %69 = vector.load %arg4[%c2_65, %c2_66, %c0_67, %c0_68] : memref<3x3x4x4xbf16, #tpu.memory_space<vmem>>, vector<1x1x4x4xbf16>
    %70 = vector.shape_cast %69 : vector<1x1x4x4xbf16> to vector<4x4xbf16>
    %cst_69 = arith.constant dense<0.000000e+00> : vector<256x4xf32>
    %71 = tpu.matmul %68, %70, %cst_69 {dimension_numbers = #tpu.dot_dimension_numbers<[1], [0], [0], [1], [0, 0, 1, 1], [], []>} : vector<256x4xbf16>, vector<4x4xbf16>, vector<256x4xf32> -> vector<256x4xf32>
    %72 = arith.addf %66, %71 : vector<256x4xf32>
    %c0_70 = arith.constant 0 : index
    %c0_71 = arith.constant 0 : index
    %73 = vector.load %arg5[%c0_70, %c0_71] : memref<1x4xf32, #tpu.memory_space<vmem>>, vector<1x4xf32>
    %74 = vector.broadcast %73 : vector<1x4xf32> to vector<256x4xf32>
    %75 = arith.addf %72, %74 : vector<256x4xf32>
    %cst_72 = arith.constant 0.000000e+00 : f32
    %76 = vector.broadcast %cst_72 : f32 to vector<256x4xf32>
    %77 = arith.maximumf %75, %76 : vector<256x4xf32>
    %78 = vector.shape_cast %77 : vector<256x4xf32> to vector<1x16x16x4xf32>
    %79 = arith.truncf %78 : vector<1x16x16x4xf32> to vector<1x16x16x4xbf16>
    %c0_73 = arith.constant 0 : index
    %c0_74 = arith.constant 0 : index
    %c0_75 = arith.constant 0 : index
    %c0_76 = arith.constant 0 : index
    %80 = vector.load %arg6[%c0_73, %c0_74, %c0_75, %c0_76] : memref<1x16x16x4xbf16, #tpu.memory_space<vmem>>, vector<1x16x16x4xbf16>
    tpu.vector_store %arg6[%c0_73, %c0_74, %c0_75, %c0_76], %79 {strides = array<i32>} : memref<1x16x16x4xbf16, #tpu.memory_space<vmem>>, vector<1x16x16x4xbf16>,
    return
  }
  func.func @transform_0(%arg0: i32) -> (i32, i32, i32, i32) {
    %c0_i32 = arith.constant 0 : i32
    %c0_i32_0 = arith.constant 0 : i32
    %c0_i32_1 = arith.constant 0 : i32
    %c0_i32_2 = arith.constant 0 : i32
    return %arg0, %c0_i32, %c0_i32_0, %c0_i32_1 : i32, i32, i32, i32
  }
  func.func @transform_1(%arg0: i32) -> (i32, i32) {
    %c0_i32 = arith.constant 0 : i32
    %c0_i32_0 = arith.constant 0 : i32
    %c0_i32_1 = arith.constant 0 : i32
    return %c0_i32, %c0_i32_0 : i32, i32
  }
  func.func @transform_2(%arg0: i32) -> (i32, i32) {
    %c0_i32 = arith.constant 0 : i32
    %c0_i32_0 = arith.constant 0 : i32
    %c0_i32_1 = arith.constant 0 : i32
    return %c0_i32, %c0_i32_0 : i32, i32
  }
  func.func @transform_3(%arg0: i32) -> (i32, i32, i32, i32) {
    %c0_i32 = arith.constant 0 : i32
    %c0_i32_0 = arith.constant 0 : i32
    %c0_i32_1 = arith.constant 0 : i32
    %c0_i32_2 = arith.constant 0 : i32
    %c0_i32_3 = arith.constant 0 : i32
    return %c0_i32, %c0_i32_0, %c0_i32_1, %c0_i32_2 : i32, i32, i32, i32
  }
  func.func @transform_4(%arg0: i32) -> (i32, i32) {
    %c0_i32 = arith.constant 0 : i32
    %c0_i32_0 = arith.constant 0 : i32
    %c0_i32_1 = arith.constant 0 : i32
    return %c0_i32, %c0_i32_0 : i32, i32
  }
  func.func @transform_5(%arg0: i32) -> (i32, i32, i32, i32) {
    %c0_i32 = arith.constant 0 : i32
    %c0_i32_0 = arith.constant 0 : i32
    %c0_i32_1 = arith.constant 0 : i32
    %c0_i32_2 = arith.constant 0 : i32
    return %arg0, %c0_i32, %c0_i32_0, %c0_i32_1 : i32, i32, i32, i32
  }
}

</mosaic_0001>

<llo_original>
// kernel: tpu_custom_call.1
$region0: #{tpu_custom_call.1}
  #allocation0 [shape = 'u32[]', space=smem, size = 0x4, offset = 0x4, fixed_abs, tag = 'smem constant byte address 0x4 - core index']
  #allocation1 [shape = 'u32[72,128]{1,0:T(1,128)}', space=vmem, size = 0x9000, scoped, tag = 'internal scratch']
  #allocation2 [shape = 'bf16[18,18,4]{2,1,0:T(8,128)(2,1)}', space=vmem, size = 0x1b000, scoped, tag = 'scratch operand']
  %s0 = inlined_call_operand.vmem [shape: bf16[2,16,16,4], index: 0, kind: input, shape index: {}]
  %s1 = inlined_call_operand.vmem [shape: bf16[4,4], index: 1, kind: input, shape index: {}]
  %s2 = inlined_call_operand.vmem [shape: f32[1,4], index: 2, kind: input, shape index: {}]
  %s3 = inlined_call_operand.vmem [shape: bf16[3,3,4,4], index: 3, kind: input, shape index: {}]
  %s4 = inlined_call_operand.vmem [shape: f32[1,4], index: 4, kind: input, shape index: {}]
  %s5 = inlined_call_operand.vmem [shape: bf16[2,16,16,4], index: 5, kind: output, shape index: {}]
  %s6 = sld [smem:[#allocation0]]
  $region53: #{tpu_custom_call.1} parent=0
    _
  %s8 = ssub.s32 1, %s6
  %s9 = scalar_select 0, %s8, %s6
  loop: start=0, step=1, limit=4
  $region2: #{tpu_custom_call.1} parent=0 // loop_pre_header
    _
  $region3: #{tpu_custom_call.1} parent=0 // loop_header
    %s11 = sphi 0, %s15
    %p12 = scmp.ge.s32.totalorder %s11, 4
    %s21 = sphi 0, %s23
    %s24 = sphi 0, %s21
    %s25 = sphi 0, %s24
    %s41 = sphi 0, %s25
    %s45 = sphi 0, %s45
    %s47 = sphi 0, %s45
    %s48 = sphi 0, %s47
    %s62 = sphi 0, %s48
    %s66 = sphi 0, %s66
    %s68 = sphi 0, %s66
    %s69 = sphi 0, %s68
    %s83 = sphi 0, %s69
    %s87 = sphi 0, %s87
    %s89 = sphi 0, %s87
    %s90 = sphi 0, %s89
    %s104 = sphi 0, %s90
    %s108 = sphi 0, %s108
    %s110 = sphi 0, %s108
    %s111 = sphi 0, %s110
    %s125 = sphi 0, %s111
    %s131 = sphi 0, %s133
    %s134 = sphi 0, %s131
    %s135 = sphi 0, %s134
    %s151 = sphi 0, %s135
  $region4: #{tpu_custom_call.1} parent=0 // loop_header_branch
    %14 = sbr.rel (%p12) target = $region8
  $region5: #{tpu_custom_call.1} parent=0 // loop_body
    %s16 = ssub.s32 %s11, 1
    %s17 = ssub.s32 %s11, 2
    %s18 = sadd.s32 %s11, 1
    %s19 = ssub.s32 %s11, %s18
    %p20 = scmp.eq.s32.totalorder %s19, 0
    %s22 = sadd.s32 %s21, 1
    %s23 = scalar_select %p20, %s21, %s22
    %p26 = pneg %p20
    %p27 = scmp.eq.s32.totalorder %s11, 1
    %p28 = por %p26, %p27
    %p29 = scmp.ne.s32.totalorder %s21, %s24
    %p30 = scmp.eq.s32.totalorder %s11, 0
    %p31 = por %p29, %p30
    %p32 = scmp.ne.s32.totalorder %s21, %s24
    %p33 = scmp.eq.s32.totalorder %s16, 1
    %p34 = por %p32, %p33
    %p35 = scmp.ne.s32.totalorder %s24, %s25
    %p36 = scmp.eq.s32.totalorder %s16, 0
    %p37 = por %p35, %p36
    %p38 = scmp.ne.s32.totalorder %s24, %s25
    %p39 = scmp.eq.s32.totalorder %s17, 1
    %p40 = por %p38, %p39
    %p42 = scmp.ne.s32.totalorder %s25, %s41
    %p43 = scmp.eq.s32.totalorder %s17, 0
    %p44 = por %p42, %p43
    %s46 = sadd.s32 %s45, 1
    %p49 = scmp.eq.s32.totalorder %s11, 1
    %p50 = scmp.ne.s32.totalorder %s45, %s47
    %p51 = scmp.eq.s32.totalorder %s11, 0
    %p52 = por %p50, %p51
    %p53 = scmp.ne.s32.totalorder %s45, %s47
    %p54 = scmp.eq.s32.totalorder %s16, 1
    %p55 = por %p53, %p54
    %p56 = scmp.ne.s32.totalorder %s47, %s48
    %p57 = scmp.eq.s32.totalorder %s16, 0
    %p58 = por %p56, %p57
    %p59 = scmp.ne.s32.totalorder %s47, %s48
    %p60 = scmp.eq.s32.totalorder %s17, 1
    %p61 = por %p59, %p60
    %p63 = scmp.ne.s32.totalorder %s48, %s62
    %p64 = scmp.eq.s32.totalorder %s17, 0
    %p65 = por %p63, %p64
    %s67 = sadd.s32 %s66, 1
    %p70 = scmp.eq.s32.totalorder %s11, 1
    %p71 = scmp.ne.s32.totalorder %s66, %s68
    %p72 = scmp.eq.s32.totalorder %s11, 0
    %p73 = por %p71, %p72
    %p74 = scmp.ne.s32.totalorder %s66, %s68
    %p75 = scmp.eq.s32.totalorder %s16, 1
    %p76 = por %p74, %p75
    %p77 = scmp.ne.s32.totalorder %s68, %s69
    %p78 = scmp.eq.s32.totalorder %s16, 0
    %p79 = por %p77, %p78
    %p80 = scmp.ne.s32.totalorder %s68, %s69
    %p81 = scmp.eq.s32.totalorder %s17, 1
    %p82 = por %p80, %p81
    %p84 = scmp.ne.s32.totalorder %s69, %s83
    %p85 = scmp.eq.s32.totalorder %s17, 0
    %p86 = por %p84, %p85
    %s88 = sadd.s32 %s87, 1
    %p91 = scmp.eq.s32.totalorder %s11, 1
    %p92 = scmp.ne.s32.totalorder %s87, %s89
    %p93 = scmp.eq.s32.totalorder %s11, 0
    %p94 = por %p92, %p93
    %p95 = scmp.ne.s32.totalorder %s87, %s89
    %p96 = scmp.eq.s32.totalorder %s16, 1
    %p97 = por %p95, %p96
    %p98 = scmp.ne.s32.totalorder %s89, %s90
    %p99 = scmp.eq.s32.totalorder %s16, 0
    %p100 = por %p98, %p99
    %p101 = scmp.ne.s32.totalorder %s89, %s90
    %p102 = scmp.eq.s32.totalorder %s17, 1
    %p103 = por %p101, %p102
    %p105 = scmp.ne.s32.totalorder %s90, %s104
    %p106 = scmp.eq.s32.totalorder %s17, 0
    %p107 = por %p105, %p106
    %s109 = sadd.s32 %s108, 1
    %p112 = scmp.eq.s32.totalorder %s11, 1
    %p113 = scmp.ne.s32.totalorder %s108, %s110
    %p114 = scmp.eq.s32.totalorder %s11, 0
    %p115 = por %p113, %p114
    %p116 = scmp.ne.s32.totalorder %s108, %s110
    %p117 = scmp.eq.s32.totalorder %s16, 1
    %p118 = por %p116, %p117
    %p119 = scmp.ne.s32.totalorder %s110, %s111
    %p120 = scmp.eq.s32.totalorder %s16, 0
    %p121 = por %p119, %p120
    %p122 = scmp.ne.s32.totalorder %s110, %s111
    %p123 = scmp.eq.s32.totalorder %s17, 1
    %p124 = por %p122, %p123
    %p126 = scmp.ne.s32.totalorder %s111, %s125
    %p127 = scmp.eq.s32.totalorder %s17, 0
    %p128 = por %p126, %p127
    %s129 = ssub.s32 %s11, %s18
    %p130 = scmp.eq.s32.totalorder %s129, 0
    %s132 = sadd.s32 %s131, 1
    %s133 = scalar_select %p130, %s131, %s132
    %p136 = pneg %p130
    %p137 = scmp.eq.s32.totalorder %s11, 1
    %p138 = por %p136, %p137
    %p139 = scmp.ne.s32.totalorder %s131, %s134
    %p140 = scmp.eq.s32.totalorder %s11, 0
    %p141 = por %p139, %p140
    %p142 = scmp.ne.s32.totalorder %s131, %s134
    %p143 = scmp.eq.s32.totalorder %s16, 1
    %p144 = por %p142, %p143
    %p145 = scmp.ne.s32.totalorder %s134, %s135
    %p146 = scmp.eq.s32.totalorder %s16, 0
    %p147 = por %p145, %p146
    %p148 = scmp.ne.s32.totalorder %s134, %s135
    %p149 = scmp.eq.s32.totalorder %s17, 1
    %p150 = por %p148, %p149
    %p152 = scmp.ne.s32.totalorder %s135, %s151
    %p153 = scmp.eq.s32.totalorder %s17, 0
    %p154 = por %p152, %p153
    %p155 = scmp.le.s32.totalorder 1, %s11
    %p156 = scmp.lt.s32.totalorder %s11, 3
    %p157 = pnand %p155, %p156
    %p158 = pneg %p157
    // Predicated region
    $region9: #{tpu_custom_call.1} parent=5 // pred_check
      _
    $region10: #{tpu_custom_call.1} parent=5 // pred_check_branch
      %160 = sbr.rel (%p157) target = $region12
    $region11: #{tpu_custom_call.1} parent=5 // pred_region
      %s161 = ssub.s32 %s11, 1
      // Predicated region
      $region13: #{tpu_custom_call.1} parent=11 // pred_check
        %p162 = pneg %p58
      $region14: #{tpu_custom_call.1} parent=11 // pred_check_branch
        %164 = sbr.rel (%p162) target = $region16
      $region15: #{tpu_custom_call.1} parent=11 // pred_region
        _
      $region16: #{tpu_custom_call.1} parent=11 // pred_fallthru
        _
      // Predicated region
      $region17: #{tpu_custom_call.1} parent=11 // pred_check
        %p165 = pneg %p79
      $region18: #{tpu_custom_call.1} parent=11 // pred_check_branch
        %167 = sbr.rel (%p165) target = $region20
      $region19: #{tpu_custom_call.1} parent=11 // pred_region
        _
      $region20: #{tpu_custom_call.1} parent=11 // pred_fallthru
        _
      // Predicated region
      $region21: #{tpu_custom_call.1} parent=11 // pred_check
        %p168 = pneg %p100
      $region22: #{tpu_custom_call.1} parent=11 // pred_check_branch
        %170 = sbr.rel (%p168) target = $region24
      $region23: #{tpu_custom_call.1} parent=11 // pred_region
        _
      $region24: #{tpu_custom_call.1} parent=11 // pred_fallthru
        _
      // Predicated region
      $region25: #{tpu_custom_call.1} parent=11 // pred_check
        %p171 = pneg %p121
      $region26: #{tpu_custom_call.1} parent=11 // pred_check_branch
        %173 = sbr.rel (%p171) target = $region28
      $region27: #{tpu_custom_call.1} parent=11 // pred_region
        _
      $region28: #{tpu_custom_call.1} parent=11 // pred_fallthru
        _
    $region12: #{tpu_custom_call.1} parent=5 // pred_fallthru
      _
    %p174 = scmp.lt.s32.totalorder %s11, 2
    // Predicated region
    $region29: #{tpu_custom_call.1} parent=5 // pred_check
      %p175 = pneg %p174
    $region30: #{tpu_custom_call.1} parent=5 // pred_check_branch
      %177 = sbr.rel (%p175) target = $region32
    $region31: #{tpu_custom_call.1} parent=5 // pred_region
      // Predicated region
      $region33: #{tpu_custom_call.1} parent=31 // pred_check
        %p178 = pneg %p31
      $region34: #{tpu_custom_call.1} parent=31 // pred_check_branch
        %180 = sbr.rel (%p178) target = $region36
      $region35: #{tpu_custom_call.1} parent=31 // pred_region
        %p181 = scmp.lt.s32.totalorder %s11, 1
        %s182 = scalar_select %p181, %s11, 1
        %s183 = smul.addr %s182, 32
        %s184 = smul.addr %s183, 4
        %s185 = scalar_lea.vmem %s0, %s184
      $region36: #{tpu_custom_call.1} parent=31 // pred_fallthru
        _
    $region32: #{tpu_custom_call.1} parent=5 // pred_fallthru
      _
    %p186 = scmp.le.s32.totalorder 1, %s11
    %p187 = scmp.lt.s32.totalorder %s11, 3
    %p188 = pnand %p186, %p187
    %p189 = pneg %p188
    // Predicated region
    $region37: #{tpu_custom_call.1} parent=5 // pred_check
      _
    $region38: #{tpu_custom_call.1} parent=5 // pred_check_branch
      %191 = sbr.rel (%p188) target = $region40
    $region39: #{tpu_custom_call.1} parent=5 // pred_region
      %s192 = ssub.s32 %s11, 1
      %p193 = scmp.lt.s32.totalorder %s16, 1
      %s194 = scalar_select %p193, %s16, 1
      %s195 = smul.addr %s194, 32
      %s196 = smul.addr %s195, 4
      %s197 = scalar_lea.vmem %s0, %s196
      %p198 = pneg %p37
      %p199 = pneg %p34
      %p200 = pneg %p58
      %p201 = pneg %p55
      %p202 = pneg %p79
      %p203 = pneg %p76
      %p204 = pneg %p100
      %p205 = pneg %p97
      %p206 = pneg %p121
      %p207 = pneg %p118
      %p208 = pneg %p147
      %p209 = pneg %p144
      %p210 = scmp.lt.s32.totalorder %s16, 1
      %s211 = scalar_select %p210, %s16, 1
      %s212 = smul.addr %s211, 32
      %s213 = smul.addr %s212, 4
      %s214 = scalar_lea.vmem %s5, %s213
      %p215 = scmp.lt.s32.totalorder %s16, 1
      %s216 = scalar_select %p215, %s16, 1
      %s217 = smul.addr %s216, 32
      %s218 = smul.addr %s217, 4
      %s219 = scalar_lea.vmem %s0, %s218
      %p220 = scmp.lt.s32.totalorder %s16, 1
      %s221 = scalar_select %p220, %s16, 1
      %s222 = smul.addr %s221, 32
      %s223 = smul.addr %s222, 4
      %s224 = scalar_lea.vmem %s5, %s223
      %v226 = vld [vmem:[%s219] sm:$0xf]
      %v227 = vld [vmem:[%s219 + $0x4] sm:$0xf]
      %v228 = vld [vmem:[%s219 + $0x8] sm:$0xf]
      %v229 = vld [vmem:[%s219 + $0xc] sm:$0xf]
      %v230 = vld [vmem:[%s219 + $0x10] sm:$0xf]
      %v231 = vld [vmem:[%s219 + $0x14] sm:$0xf]
      %v232 = vld [vmem:[%s219 + $0x18] sm:$0xf]
      %v233 = vld [vmem:[%s219 + $0x1c] sm:$0xf]
      %v234 = vld [vmem:[%s219 + $0x20] sm:$0xf]
      %v235 = vld [vmem:[%s219 + $0x24] sm:$0xf]
      %v236 = vld [vmem:[%s219 + $0x28] sm:$0xf]
      %v237 = vld [vmem:[%s219 + $0x2c] sm:$0xf]
      %v238 = vld [vmem:[%s219 + $0x30] sm:$0xf]
      %v239 = vld [vmem:[%s219 + $0x34] sm:$0xf]
      %v240 = vld [vmem:[%s219 + $0x38] sm:$0xf]
      %v241 = vld [vmem:[%s219 + $0x3c] sm:$0xf]
      %v242 = vld [vmem:[%s219 + $0x40] sm:$0xf]
      %v243 = vld [vmem:[%s219 + $0x44] sm:$0xf]
      %v244 = vld [vmem:[%s219 + $0x48] sm:$0xf]
      %v245 = vld [vmem:[%s219 + $0x4c] sm:$0xf]
      %v246 = vld [vmem:[%s219 + $0x50] sm:$0xf]
      %v247 = vld [vmem:[%s219 + $0x54] sm:$0xf]
      %v248 = vld [vmem:[%s219 + $0x58] sm:$0xf]
      %v249 = vld [vmem:[%s219 + $0x5c] sm:$0xf]
      %v250 = vld [vmem:[%s219 + $0x60] sm:$0xf]
      %v251 = vld [vmem:[%s219 + $0x64] sm:$0xf]
      %v252 = vld [vmem:[%s219 + $0x68] sm:$0xf]
      %v253 = vld [vmem:[%s219 + $0x6c] sm:$0xf]
      %v254 = vld [vmem:[%s219 + $0x70] sm:$0xf]
      %v255 = vld [vmem:[%s219 + $0x74] sm:$0xf]
      %v256 = vld [vmem:[%s219 + $0x78] sm:$0xf]
      %v257 = vld [vmem:[%s219 + $0x7c] sm:$0xf]
      %v258 = vld [vmem:[%s1] sm:$0x3]
      %v259 = vld [vmem:[%s2] sm:$0x1]
      %v261 = vperm.slane %v259, 0
      %v295 = vunpack.c.l.b16 %v226
      %v296 = vunpack.c.l.b16 %v227
      %v297 = vunpack.c.l.b16 %v228
      %v298 = vunpack.c.l.b16 %v229
      %v299 = vunpack.c.l.b16 %v230
      %v300 = vunpack.c.l.b16 %v231
      %v301 = vunpack.c.l.b16 %v232
      %v302 = vunpack.c.l.b16 %v233
      %v303 = vunpack.c.l.b16 %v234
      %v304 = vunpack.c.l.b16 %v235
      %v305 = vunpack.c.l.b16 %v236
      %v306 = vunpack.c.l.b16 %v237
      %v307 = vunpack.c.l.b16 %v238
      %v308 = vunpack.c.l.b16 %v239
      %v309 = vunpack.c.l.b16 %v240
      %v310 = vunpack.c.l.b16 %v241
      %v311 = vunpack.c.l.b16 %v242
      %v312 = vunpack.c.l.b16 %v243
      %v313 = vunpack.c.l.b16 %v244
      %v314 = vunpack.c.l.b16 %v245
      %v315 = vunpack.c.l.b16 %v246
      %v316 = vunpack.c.l.b16 %v247
      %v317 = vunpack.c.l.b16 %v248
      %v318 = vunpack.c.l.b16 %v249
      %v319 = vunpack.c.l.b16 %v250
      %v320 = vunpack.c.l.b16 %v251
      %v321 = vunpack.c.l.b16 %v252
      %v322 = vunpack.c.l.b16 %v253
      %v323 = vunpack.c.l.b16 %v254
      %v324 = vunpack.c.l.b16 %v255
      %v325 = vunpack.c.l.b16 %v256
      %v326 = vunpack.c.l.b16 %v257
      %v327 = vpack.c.b16 %v296, %v295
      %v328 = vpack.c.b16 %v298, %v297
      %v329 = vpack.c.b16 %v300, %v299
      %v330 = vpack.c.b16 %v302, %v301
      %v331 = vpack.c.b16 %v304, %v303
      %v332 = vpack.c.b16 %v306, %v305
      %v333 = vpack.c.b16 %v308, %v307
      %v334 = vpack.c.b16 %v310, %v309
      %v335 = vpack.c.b16 %v312, %v311
      %v336 = vpack.c.b16 %v314, %v313
      %v337 = vpack.c.b16 %v316, %v315
      %v338 = vpack.c.b16 %v318, %v317
      %v339 = vpack.c.b16 %v320, %v319
      %v340 = vpack.c.b16 %v322, %v321
      %v341 = vpack.c.b16 %v324, %v323
      %v342 = vpack.c.b16 %v326, %v325
      %vm343 = vcmask 31744
      %v345 = vsel %vm343, %v327, 0
      %v348 = vsel %vm343, %v328, 0
      %v351 = vsel %vm343, %v329, 0
      %v354 = vsel %vm343, %v330, 0
      %v357 = vsel %vm343, %v331, 0
      %v360 = vsel %vm343, %v332, 0
      %v363 = vsel %vm343, %v333, 0
      %v366 = vsel %vm343, %v334, 0
      %v369 = vsel %vm343, %v335, 0
      %v372 = vsel %vm343, %v336, 0
      %v375 = vsel %vm343, %v337, 0
      %v378 = vsel %vm343, %v338, 0
      %v381 = vsel %vm343, %v339, 0
      %v384 = vsel %vm343, %v340, 0
      %v387 = vsel %vm343, %v341, 0
      %v390 = vsel %vm343, %v342, 0
      %vm392 = vcmask 1041408
      %v394 = vsel %vm392, %v258, 0
      %396 = vmatpush.bf16.msra.mxu0 0
      %397 = vmatpush.bf16.msra.mxu0 0
      %398 = vmatpush.bf16.msra.mxu0 0
      %399 = vmatpush.bf16.msra.mxu0 0
      %400 = vmatpush.bf16.msra.mxu0 0
      %401 = vmatpush.bf16.msra.mxu0 0
      %402 = vmatpush.bf16.msra.mxu0 0
      %403 = vmatpush.bf16.msra.mxu0 %v394
      %404 = vmatmul.bf16.gmra.mxu0 %v345
      %v405 = vpop.f32.mrf.mxu0
      %v406 = vadd.f32 %v261, %v405
      %v407 = vpop.f32.mrf.mxu0
      %v408 = vadd.f32 %v261, %v407
      %409 = vmatmul.bf16.gmra.mxu0 %v348
      %v410 = vpop.f32.mrf.mxu0
      %v411 = vadd.f32 %v261, %v410
      %v412 = vpop.f32.mrf.mxu0
      %v413 = vadd.f32 %v261, %v412
      %414 = vmatmul.bf16.gmra.mxu0 %v351
      %v415 = vpop.f32.mrf.mxu0
      %v416 = vadd.f32 %v261, %v415
      %v417 = vpop.f32.mrf.mxu0
      %v418 = vadd.f32 %v261, %v417
      %419 = vmatmul.bf16.gmra.mxu0 %v354
      %v420 = vpop.f32.mrf.mxu0
      %v421 = vadd.f32 %v261, %v420
      %v422 = vpop.f32.mrf.mxu0
      %v423 = vadd.f32 %v261, %v422
      %424 = vmatmul.bf16.gmra.mxu0 %v357
      %v425 = vpop.f32.mrf.mxu0
      %v426 = vadd.f32 %v261, %v425
      %v427 = vpop.f32.mrf.mxu0
      %v428 = vadd.f32 %v261, %v427
      %429 = vmatmul.bf16.gmra.mxu0 %v360
      %v430 = vpop.f32.mrf.mxu0
      %v431 = vadd.f32 %v261, %v430
      %v432 = vpop.f32.mrf.mxu0
      %v433 = vadd.f32 %v261, %v432
      %434 = vmatmul.bf16.gmra.mxu0 %v363
      %v435 = vpop.f32.mrf.mxu0
      %v436 = vadd.f32 %v261, %v435
      %v437 = vpop.f32.mrf.mxu0
      %v438 = vadd.f32 %v261, %v437
      %439 = vmatmul.bf16.gmra.mxu0 %v366
      %v440 = vpop.f32.mrf.mxu0
      %v441 = vadd.f32 %v261, %v440
      %v442 = vpop.f32.mrf.mxu0
      %v443 = vadd.f32 %v261, %v442
      %444 = vmatmul.bf16.gmra.mxu0 %v369
      %v445 = vpop.f32.mrf.mxu0
      %v446 = vadd.f32 %v261, %v445
      %v447 = vpop.f32.mrf.mxu0
      %v448 = vadd.f32 %v261, %v447
      %449 = vmatmul.bf16.gmra.mxu0 %v372
      %v450 = vpop.f32.mrf.mxu0
      %v451 = vadd.f32 %v261, %v450
      %v452 = vpop.f32.mrf.mxu0
      %v453 = vadd.f32 %v261, %v452
      %454 = vmatmul.bf16.gmra.mxu0 %v375
      %v455 = vpop.f32.mrf.mxu0
      %v456 = vadd.f32 %v261, %v455
      %v457 = vpop.f32.mrf.mxu0
      %v458 = vadd.f32 %v261, %v457
      %459 = vmatmul.bf16.gmra.mxu0 %v378
      %v460 = vpop.f32.mrf.mxu0
      %v461 = vadd.f32 %v261, %v460
      %v462 = vpop.f32.mrf.mxu0
      %v463 = vadd.f32 %v261, %v462
      %464 = vmatmul.bf16.gmra.mxu0 %v381
      %v465 = vpop.f32.mrf.mxu0
      %v466 = vadd.f32 %v261, %v465
      %v467 = vpop.f32.mrf.mxu0
      %v468 = vadd.f32 %v261, %v467
      %469 = vmatmul.bf16.gmra.mxu0 %v384
      %v470 = vpop.f32.mrf.mxu0
      %v471 = vadd.f32 %v261, %v470
      %v472 = vpop.f32.mrf.mxu0
      %v473 = vadd.f32 %v261, %v472
      %474 = vmatmul.bf16.gmra.mxu0 %v387
      %v475 = vpop.f32.mrf.mxu0
      %v476 = vadd.f32 %v261, %v475
      %v477 = vpop.f32.mrf.mxu0
      %v478 = vadd.f32 %v261, %v477
      %479 = vmatmul.bf16.gmra.mxu0 %v390
      %v480 = vpop.f32.mrf.mxu0
      %v481 = vadd.f32 %v261, %v480
      %v482 = vpop.f32.mrf.mxu0
      %v483 = vadd.f32 %v261, %v482
      %484 = vdwg.mxu0
      %v485 = vmax.f32 %v406, 0.0
      %v486 = vmax.f32 %v408, 0.0
      %v487 = vmax.f32 %v411, 0.0
      %v488 = vmax.f32 %v413, 0.0
      %v489 = vmax.f32 %v416, 0.0
      %v490 = vmax.f32 %v418, 0.0
      %v491 = vmax.f32 %v421, 0.0
      %v492 = vmax.f32 %v423, 0.0
      %v493 = vmax.f32 %v426, 0.0
      %v494 = vmax.f32 %v428, 0.0
      %v495 = vmax.f32 %v431, 0.0
      %v496 = vmax.f32 %v433, 0.0
      %v497 = vmax.f32 %v436, 0.0
      %v498 = vmax.f32 %v438, 0.0
      %v499 = vmax.f32 %v441, 0.0
      %v500 = vmax.f32 %v443, 0.0
      %v501 = vmax.f32 %v446, 0.0
      %v502 = vmax.f32 %v448, 0.0
      %v503 = vmax.f32 %v451, 0.0
      %v504 = vmax.f32 %v453, 0.0
      %v505 = vmax.f32 %v456, 0.0
      %v506 = vmax.f32 %v458, 0.0
      %v507 = vmax.f32 %v461, 0.0
      %v508 = vmax.f32 %v463, 0.0
      %v509 = vmax.f32 %v466, 0.0
      %v510 = vmax.f32 %v468, 0.0
      %v511 = vmax.f32 %v471, 0.0
      %v512 = vmax.f32 %v473, 0.0
      %v513 = vmax.f32 %v476, 0.0
      %v514 = vmax.f32 %v478, 0.0
      %v515 = vmax.f32 %v481, 0.0
      %v516 = vmax.f32 %v483, 0.0
      %v517 = vpack.c.bf16 %v485, %v485
      %v518 = vpack.c.bf16 %v486, %v486
      %v519 = vpack.c.bf16 %v487, %v487
      %v520 = vpack.c.bf16 %v488, %v488
      %v521 = vpack.c.bf16 %v489, %v489
      %v522 = vpack.c.bf16 %v490, %v490
      %v523 = vpack.c.bf16 %v491, %v491
      %v524 = vpack.c.bf16 %v492, %v492
      %v525 = vpack.c.bf16 %v493, %v493
      %v526 = vpack.c.bf16 %v494, %v494
      %v527 = vpack.c.bf16 %v495, %v495
      %v528 = vpack.c.bf16 %v496, %v496
      %v529 = vpack.c.bf16 %v497, %v497
      %v530 = vpack.c.bf16 %v498, %v498
      %v531 = vpack.c.bf16 %v499, %v499
      %v532 = vpack.c.bf16 %v500, %v500
      %v533 = vpack.c.bf16 %v501, %v501
      %v534 = vpack.c.bf16 %v502, %v502
      %v535 = vpack.c.bf16 %v503, %v503
      %v536 = vpack.c.bf16 %v504, %v504
      %v537 = vpack.c.bf16 %v505, %v505
      %v538 = vpack.c.bf16 %v506, %v506
      %v539 = vpack.c.bf16 %v507, %v507
      %v540 = vpack.c.bf16 %v508, %v508
      %v541 = vpack.c.bf16 %v509, %v509
      %v542 = vpack.c.bf16 %v510, %v510
      %v543 = vpack.c.bf16 %v511, %v511
      %v544 = vpack.c.bf16 %v512, %v512
      %v545 = vpack.c.bf16 %v513, %v513
      %v546 = vpack.c.bf16 %v514, %v514
      %v547 = vpack.c.bf16 %v515, %v515
      %v548 = vpack.c.bf16 %v516, %v516
      %vm549 = vcmask 27648
      %550 = vst.msk [vmem:[#allocation2] sm:$0xf] %vm549, 0
      %551 = vst.msk [vmem:[#allocation2 + $0x4] sm:$0xf] %vm549, 0
      %vm552 = vcmask 24576
      %553 = vst.msk [vmem:[#allocation2 + $0x8] sm:$0x1] %vm552, 0
      %s554 = scalar_lea.vmem [#allocation2], 204
      %555 = vst.msk [vmem:[%s554] sm:$0xf] %vm549, 0
      %556 = vst.msk [vmem:[%s554 + $0x4] sm:$0xf] %vm549, 0
      %557 = vst.msk [vmem:[%s554 + $0x8] sm:$0x1] %vm552, 0
      %vm558 = vcmask 24576
      %vm559 = vsmask.f32 256
      %vm560 = vmand %vm558, %vm559
      %v561 = vld [vmem:[#allocation2] sm:$0x1]
      %v562 = vsel %vm560, 0, %v561
      %563 = vst [vmem:[#allocation2] sm:$0x1] %v562
      %v564 = vld [vmem:[#allocation2 + $0xc] sm:$0x1]
      %v565 = vsel %vm560, 0, %v564
      %566 = vst [vmem:[#allocation2 + $0xc] sm:$0x1] %v565
      %v567 = vld [vmem:[#allocation2 + $0x18] sm:$0x1]
      %v568 = vsel %vm560, 0, %v567
      %569 = vst [vmem:[#allocation2 + $0x18] sm:$0x1] %v568
      %v570 = vld [vmem:[#allocation2 + $0x24] sm:$0x1]
      %v571 = vsel %vm560, 0, %v570
      %572 = vst [vmem:[#allocation2 + $0x24] sm:$0x1] %v571
      %v573 = vld [vmem:[#allocation2 + $0x30] sm:$0x1]
      %v574 = vsel %vm560, 0, %v573
      %575 = vst [vmem:[#allocation2 + $0x30] sm:$0x1] %v574
      %v576 = vld [vmem:[#allocation2 + $0x3c] sm:$0x1]
      %v577 = vsel %vm560, 0, %v576
      %578 = vst [vmem:[#allocation2 + $0x3c] sm:$0x1] %v577
      %v579 = vld [vmem:[#allocation2 + $0x48] sm:$0x1]
      %v580 = vsel %vm560, 0, %v579
      %581 = vst [vmem:[#allocation2 + $0x48] sm:$0x1] %v580
      %v582 = vld [vmem:[#allocation2 + $0x54] sm:$0x1]
      %v583 = vsel %vm560, 0, %v582
      %584 = vst [vmem:[#allocation2 + $0x54] sm:$0x1] %v583
      %v585 = vld [vmem:[#allocation2 + $0x60] sm:$0x1]
      %v586 = vsel %vm560, 0, %v585
      %587 = vst [vmem:[#allocation2 + $0x60] sm:$0x1] %v586
      %v588 = vld [vmem:[#allocation2 + $0x6c] sm:$0x1]
      %v589 = vsel %vm560, 0, %v588
      %590 = vst [vmem:[#allocation2 + $0x6c] sm:$0x1] %v589
      %v591 = vld [vmem:[#allocation2 + $0x78] sm:$0x1]
      %v592 = vsel %vm560, 0, %v591
      %593 = vst [vmem:[#allocation2 + $0x78] sm:$0x1] %v592
      %v594 = vld [vmem:[#allocation2 + $0x84] sm:$0x1]
      %v595 = vsel %vm560, 0, %v594
      %596 = vst [vmem:[#allocation2 + $0x84] sm:$0x1] %v595
      %v597 = vld [vmem:[#allocation2 + $0x90] sm:$0x1]
      %v598 = vsel %vm560, 0, %v597
      %599 = vst [vmem:[#allocation2 + $0x90] sm:$0x1] %v598
      %v600 = vld [vmem:[#allocation2 + $0x9c] sm:$0x1]
      %v601 = vsel %vm560, 0, %v600
      %602 = vst [vmem:[#allocation2 + $0x9c] sm:$0x1] %v601
      %v603 = vld [vmem:[#allocation2 + $0xa8] sm:$0x1]
      %v604 = vsel %vm560, 0, %v603
      %605 = vst [vmem:[#allocation2 + $0xa8] sm:$0x1] %v604
      %v606 = vld [vmem:[#allocation2 + $0xb4] sm:$0x1]
      %v607 = vsel %vm560, 0, %v606
      %608 = vst [vmem:[#allocation2 + $0xb4] sm:$0x1] %v607
      %v609 = vld [vmem:[#allocation2 + $0xc0] sm:$0x1]
      %v610 = vsel %vm560, 0, %v609
      %611 = vst [vmem:[#allocation2 + $0xc0] sm:$0x1] %v610
      %v612 = vld [vmem:[#allocation2 + $0xcc] sm:$0x1]
      %v613 = vsel %vm560, 0, %v612
      %614 = vst [vmem:[#allocation2 + $0xcc] sm:$0x1] %v613
      %vm615 = vsmask.f32 7938
      %vm616 = vmand %vm558, %vm615
      %v617 = vld [vmem:[#allocation2 + $0x8] sm:$0x1]
      %v618 = vsel %vm616, 0, %v617
      %619 = vst [vmem:[#allocation2 + $0x8] sm:$0x1] %v618
      %v620 = vld [vmem:[#allocation2 + $0x14] sm:$0x1]
      %v621 = vsel %vm616, 0, %v620
      %622 = vst [vmem:[#allocation2 + $0x14] sm:$0x1] %v621
      %v623 = vld [vmem:[#allocation2 + $0x20] sm:$0x1]
      %v624 = vsel %vm616, 0, %v623
      %625 = vst [vmem:[#allocation2 + $0x20] sm:$0x1] %v624
      %v626 = vld [vmem:[#allocation2 + $0x2c] sm:$0x1]
      %v627 = vsel %vm616, 0, %v626
      %628 = vst [vmem:[#allocation2 + $0x2c] sm:$0x1] %v627
      %v629 = vld [vmem:[#allocation2 + $0x38] sm:$0x1]
      %v630 = vsel %vm616, 0, %v629
      %631 = vst [vmem:[#allocation2 + $0x38] sm:$0x1] %v630
      %v632 = vld [vmem:[#allocation2 + $0x44] sm:$0x1]
      %v633 = vsel %vm616, 0, %v632
      %634 = vst [vmem:[#allocation2 + $0x44] sm:$0x1] %v633
      %v635 = vld [vmem:[#allocation2 + $0x50] sm:$0x1]
      %v636 = vsel %vm616, 0, %v635
      %637 = vst [vmem:[#allocation2 + $0x50] sm:$0x1] %v636
      %v638 = vld [vmem:[#allocation2 + $0x5c] sm:$0x1]
      %v639 = vsel %vm616, 0, %v638
      %640 = vst [vmem:[#allocation2 + $0x5c] sm:$0x1] %v639
      %v641 = vld [vmem:[#allocation2 + $0x68] sm:$0x1]
      %v642 = vsel %vm616, 0, %v641
      %643 = vst [vmem:[#allocation2 + $0x68] sm:$0x1] %v642
      %v644 = vld [vmem:[#allocation2 + $0x74] sm:$0x1]
      %v645 = vsel %vm616, 0, %v644
      %646 = vst [vmem:[#allocation2 + $0x74] sm:$0x1] %v645
      %v647 = vld [vmem:[#allocation2 + $0x80] sm:$0x1]
      %v648 = vsel %vm616, 0, %v647
      %649 = vst [vmem:[#allocation2 + $0x80] sm:$0x1] %v648
      %v650 = vld [vmem:[#allocation2 + $0x8c] sm:$0x1]
      %v651 = vsel %vm616, 0, %v650
      %652 = vst [vmem:[#allocation2 + $0x8c] sm:$0x1] %v651
      %v653 = vld [vmem:[#allocation2 + $0x98] sm:$0x1]
      %v654 = vsel %vm616, 0, %v653
      %655 = vst [vmem:[#allocation2 + $0x98] sm:$0x1] %v654
      %v656 = vld [vmem:[#allocation2 + $0xa4] sm:$0x1]
      %v657 = vsel %vm616, 0, %v656
      %658 = vst [vmem:[#allocation2 + $0xa4] sm:$0x1] %v657
      %v659 = vld [vmem:[#allocation2 + $0xb0] sm:$0x1]
      %v660 = vsel %vm616, 0, %v659
      %661 = vst [vmem:[#allocation2 + $0xb0] sm:$0x1] %v660
      %v662 = vld [vmem:[#allocation2 + $0xbc] sm:$0x1]
      %v663 = vsel %vm616, 0, %v662
      %664 = vst [vmem:[#allocation2 + $0xbc] sm:$0x1] %v663
      %v665 = vld [vmem:[#allocation2 + $0xc8] sm:$0x1]
      %v666 = vsel %vm616, 0, %v665
      %667 = vst [vmem:[#allocation2 + $0xc8] sm:$0x1] %v666
      %v668 = vld [vmem:[#allocation2 + $0xd4] sm:$0x1]
      %v669 = vsel %vm616, 0, %v668
      %670 = vst [vmem:[#allocation2 + $0xd4] sm:$0x1] %v669
      %vm671 = vsmask.f32 4368
      %vm672 = vmor %vm559, %vm671
      %v674 = vshrl.u32 %v517, 16
      %v676 = vrot.slane %v674, 7
      %v677 = vshll.u32 %v517, 16
      %v679 = vor.u32 %v676, %v677
      %v680 = vrot.slane %v676, 4
      %v682 = vshrl.u32 %v518, 16
      %v684 = vrot.slane %v682, 7
      %v685 = vshll.u32 %v518, 16
      %v687 = vor.u32 %v684, %v685
      %v688 = vsel %vm672, %v680, %v687
      %v689 = vrot.slane %v684, 4
      %v691 = vshrl.u32 %v519, 16
      %v693 = vrot.slane %v691, 7
      %v694 = vshll.u32 %v519, 16
      %v696 = vor.u32 %v693, %v694
      %v697 = vrot.slane %v693, 4
      %v699 = vshrl.u32 %v520, 16
      %v701 = vrot.slane %v699, 7
      %v702 = vshll.u32 %v520, 16
      %v704 = vor.u32 %v701, %v702
      %v705 = vsel %vm672, %v697, %v704
      %v706 = vrot.slane %v701, 4
      %v708 = vshrl.u32 %v521, 16
      %v710 = vrot.slane %v708, 7
      %v711 = vshll.u32 %v521, 16
      %v713 = vor.u32 %v710, %v711
      %v714 = vrot.slane %v710, 4
      %v716 = vshrl.u32 %v522, 16
      %v718 = vrot.slane %v716, 7
      %v719 = vshll.u32 %v522, 16
      %v721 = vor.u32 %v718, %v719
      %v722 = vsel %vm672, %v714, %v721
      %v723 = vrot.slane %v718, 4
      %v725 = vshrl.u32 %v523, 16
      %v727 = vrot.slane %v725, 7
      %v728 = vshll.u32 %v523, 16
      %v730 = vor.u32 %v727, %v728
      %v731 = vrot.slane %v727, 4
      %v733 = vshrl.u32 %v524, 16
      %v735 = vrot.slane %v733, 7
      %v736 = vshll.u32 %v524, 16
      %v738 = vor.u32 %v735, %v736
      %v739 = vsel %vm672, %v731, %v738
      %v740 = vrot.slane %v735, 4
      %v742 = vshrl.u32 %v525, 16
      %v744 = vrot.slane %v742, 7
      %v745 = vshll.u32 %v525, 16
      %v747 = vor.u32 %v744, %v745
      %v748 = vrot.slane %v744, 4
      %v750 = vshrl.u32 %v526, 16
      %v752 = vrot.slane %v750, 7
      %v753 = vshll.u32 %v526, 16
      %v755 = vor.u32 %v752, %v753
      %v756 = vsel %vm672, %v748, %v755
      %v757 = vrot.slane %v752, 4
      %v759 = vshrl.u32 %v527, 16
      %v761 = vrot.slane %v759, 7
      %v762 = vshll.u32 %v527, 16
      %v764 = vor.u32 %v761, %v762
      %v765 = vrot.slane %v761, 4
      %v767 = vshrl.u32 %v528, 16
      %v769 = vrot.slane %v767, 7
      %v770 = vshll.u32 %v528, 16
      %v772 = vor.u32 %v769, %v770
      %v773 = vsel %vm672, %v765, %v772
      %v774 = vrot.slane %v769, 4
      %v776 = vshrl.u32 %v529, 16
      %v778 = vrot.slane %v776, 7
      %v779 = vshll.u32 %v529, 16
      %v781 = vor.u32 %v778, %v779
      %v782 = vrot.slane %v778, 4
      %v784 = vshrl.u32 %v530, 16
      %v786 = vrot.slane %v784, 7
      %v787 = vshll.u32 %v530, 16
      %v789 = vor.u32 %v786, %v787
      %v790 = vsel %vm672, %v782, %v789
      %v791 = vrot.slane %v786, 4
      %v793 = vshrl.u32 %v531, 16
      %v795 = vrot.slane %v793, 7
      %v796 = vshll.u32 %v531, 16
      %v798 = vor.u32 %v795, %v796
      %v799 = vrot.slane %v795, 4
      %v801 = vshrl.u32 %v532, 16
      %v803 = vrot.slane %v801, 7
      %v804 = vshll.u32 %v532, 16
      %v806 = vor.u32 %v803, %v804
      %v807 = vsel %vm672, %v799, %v806
      %v808 = vrot.slane %v803, 4
      %v810 = vshrl.u32 %v533, 16
      %v812 = vrot.slane %v810, 7
      %v813 = vshll.u32 %v533, 16
      %v815 = vor.u32 %v812, %v813
      %v816 = vrot.slane %v812, 4
      %v818 = vshrl.u32 %v534, 16
      %v820 = vrot.slane %v818, 7
      %v821 = vshll.u32 %v534, 16
      %v823 = vor.u32 %v820, %v821
      %v824 = vsel %vm672, %v816, %v823
      %v825 = vrot.slane %v820, 4
      %v827 = vshrl.u32 %v535, 16
      %v829 = vrot.slane %v827, 7
      %v830 = vshll.u32 %v535, 16
      %v832 = vor.u32 %v829, %v830
      %v833 = vrot.slane %v829, 4
      %v835 = vshrl.u32 %v536, 16
      %v837 = vrot.slane %v835, 7
      %v838 = vshll.u32 %v536, 16
      %v840 = vor.u32 %v837, %v838
      %v841 = vsel %vm672, %v833, %v840
      %v842 = vrot.slane %v837, 4
      %v844 = vshrl.u32 %v537, 16
      %v846 = vrot.slane %v844, 7
      %v847 = vshll.u32 %v537, 16
      %v849 = vor.u32 %v846, %v847
      %v850 = vrot.slane %v846, 4
      %v852 = vshrl.u32 %v538, 16
      %v854 = vrot.slane %v852, 7
      %v855 = vshll.u32 %v538, 16
      %v857 = vor.u32 %v854, %v855
      %v858 = vsel %vm672, %v850, %v857
      %v859 = vrot.slane %v854, 4
      %v861 = vshrl.u32 %v539, 16
      %v863 = vrot.slane %v861, 7
      %v864 = vshll.u32 %v539, 16
      %v866 = vor.u32 %v863, %v864
      %v867 = vrot.slane %v863, 4
      %v869 = vshrl.u32 %v540, 16
      %v871 = vrot.slane %v869, 7
      %v872 = vshll.u32 %v540, 16
      %v874 = vor.u32 %v871, %v872
      %v875 = vsel %vm672, %v867, %v874
      %v876 = vrot.slane %v871, 4
      %v878 = vshrl.u32 %v541, 16
      %v880 = vrot.slane %v878, 7
      %v881 = vshll.u32 %v541, 16
      %v883 = vor.u32 %v880, %v881
      %v884 = vrot.slane %v880, 4
      %v886 = vshrl.u32 %v542, 16
      %v888 = vrot.slane %v886, 7
      %v889 = vshll.u32 %v542, 16
      %v891 = vor.u32 %v888, %v889
      %v892 = vsel %vm672, %v884, %v891
      %v893 = vrot.slane %v888, 4
      %v895 = vshrl.u32 %v543, 16
      %v897 = vrot.slane %v895, 7
      %v898 = vshll.u32 %v543, 16
      %v900 = vor.u32 %v897, %v898
      %v901 = vrot.slane %v897, 4
      %v903 = vshrl.u32 %v544, 16
      %v905 = vrot.slane %v903, 7
      %v906 = vshll.u32 %v544, 16
      %v908 = vor.u32 %v905, %v906
      %v909 = vsel %vm672, %v901, %v908
      %v910 = vrot.slane %v905, 4
      %v912 = vshrl.u32 %v545, 16
      %v914 = vrot.slane %v912, 7
      %v915 = vshll.u32 %v545, 16
      %v917 = vor.u32 %v914, %v915
      %v918 = vrot.slane %v914, 4
      %v920 = vshrl.u32 %v546, 16
      %v922 = vrot.slane %v920, 7
      %v923 = vshll.u32 %v546, 16
      %v925 = vor.u32 %v922, %v923
      %v926 = vsel %vm672, %v918, %v925
      %v927 = vrot.slane %v922, 4
      %v929 = vshrl.u32 %v547, 16
      %v931 = vrot.slane %v929, 7
      %v932 = vshll.u32 %v547, 16
      %v934 = vor.u32 %v931, %v932
      %v935 = vrot.slane %v931, 4
      %v937 = vshrl.u32 %v548, 16
      %v939 = vrot.slane %v937, 7
      %v940 = vshll.u32 %v548, 16
      %v942 = vor.u32 %v939, %v940
      %v943 = vsel %vm672, %v935, %v942
      %v944 = vrot.slane %v939, 4
      %s993 = scalar_lea.vmem [#allocation2], 12
      %vm994 = vcmask 27648
      %vm995 = vmand %vm994, %vm615
      %v996 = vld [vmem:[%s993] sm:$0xf]
      %v997 = vsel %vm995, %v679, %v996
      %998 = vst [vmem:[%s993] sm:$0xf] %v997
      %999 = vst.msk [vmem:[%s993 + $0x4] sm:$0xf] %vm549, %v688
      %v1000 = vld [vmem:[%s993 + $0x8] sm:$0x1]
      %v1001 = vsel %vm560, %v689, %v1000
      %1002 = vst [vmem:[%s993 + $0x8] sm:$0x1] %v1001
      %v1003 = vld [vmem:[%s993 + $0xc] sm:$0xf]
      %v1004 = vsel %vm995, %v696, %v1003
      %1005 = vst [vmem:[%s993 + $0xc] sm:$0xf] %v1004
      %1006 = vst.msk [vmem:[%s993 + $0x10] sm:$0xf] %vm549, %v705
      %v1007 = vld [vmem:[%s993 + $0x14] sm:$0x1]
      %v1008 = vsel %vm560, %v706, %v1007
      %1009 = vst [vmem:[%s993 + $0x14] sm:$0x1] %v1008
      %v1010 = vld [vmem:[%s993 + $0x18] sm:$0xf]
      %v1011 = vsel %vm995, %v713, %v1010
      %1012 = vst [vmem:[%s993 + $0x18] sm:$0xf] %v1011
      %1013 = vst.msk [vmem:[%s993 + $0x1c] sm:$0xf] %vm549, %v722
      %v1014 = vld [vmem:[%s993 + $0x20] sm:$0x1]
      %v1015 = vsel %vm560, %v723, %v1014
      %1016 = vst [vmem:[%s993 + $0x20] sm:$0x1] %v1015
      %v1017 = vld [vmem:[%s993 + $0x24] sm:$0xf]
      %v1018 = vsel %vm995, %v730, %v1017
      %1019 = vst [vmem:[%s993 + $0x24] sm:$0xf] %v1018
      %1020 = vst.msk [vmem:[%s993 + $0x28] sm:$0xf] %vm549, %v739
      %v1021 = vld [vmem:[%s993 + $0x2c] sm:$0x1]
      %v1022 = vsel %vm560, %v740, %v1021
      %1023 = vst [vmem:[%s993 + $0x2c] sm:$0x1] %v1022
      %v1024 = vld [vmem:[%s993 + $0x30] sm:$0xf]
      %v1025 = vsel %vm995, %v747, %v1024
      %1026 = vst [vmem:[%s993 + $0x30] sm:$0xf] %v1025
      %1027 = vst.msk [vmem:[%s993 + $0x34] sm:$0xf] %vm549, %v756
      %v1028 = vld [vmem:[%s993 + $0x38] sm:$0x1]
      %v1029 = vsel %vm560, %v757, %v1028
      %1030 = vst [vmem:[%s993 + $0x38] sm:$0x1] %v1029
      %v1031 = vld [vmem:[%s993 + $0x3c] sm:$0xf]
      %v1032 = vsel %vm995, %v764, %v1031
      %1033 = vst [vmem:[%s993 + $0x3c] sm:$0xf] %v1032
      %1034 = vst.msk [vmem:[%s993 + $0x40] sm:$0xf] %vm549, %v773
      %v1035 = vld [vmem:[%s993 + $0x44] sm:$0x1]
      %v1036 = vsel %vm560, %v774, %v1035
      %1037 = vst [vmem:[%s993 + $0x44] sm:$0x1] %v1036
      %v1038 = vld [vmem:[%s993 + $0x48] sm:$0xf]
      %v1039 = vsel %vm995, %v781, %v1038
      %1040 = vst [vmem:[%s993 + $0x48] sm:$0xf] %v1039
      %1041 = vst.msk [vmem:[%s993 + $0x4c] sm:$0xf] %vm549, %v790
      %v1042 = vld [vmem:[%s993 + $0x50] sm:$0x1]
      %v1043 = vsel %vm560, %v791, %v1042
      %1044 = vst [vmem:[%s993 + $0x50] sm:$0x1] %v1043
      %v1045 = vld [vmem:[%s993 + $0x54] sm:$0xf]
      %v1046 = vsel %vm995, %v798, %v1045
      %1047 = vst [vmem:[%s993 + $0x54] sm:$0xf] %v1046
      %1048 = vst.msk [vmem:[%s993 + $0x58] sm:$0xf] %vm549, %v807
      %v1049 = vld [vmem:[%s993 + $0x5c] sm:$0x1]
      %v1050 = vsel %vm560, %v808, %v1049
      %1051 = vst [vmem:[%s993 + $0x5c] sm:$0x1] %v1050
      %v1052 = vld [vmem:[%s993 + $0x60] sm:$0xf]
      %v1053 = vsel %vm995, %v815, %v1052
      %1054 = vst [vmem:[%s993 + $0x60] sm:$0xf] %v1053
      %1055 = vst.msk [vmem:[%s993 + $0x64] sm:$0xf] %vm549, %v824
      %v1056 = vld [vmem:[%s993 + $0x68] sm:$0x1]
      %v1057 = vsel %vm560, %v825, %v1056
      %1058 = vst [vmem:[%s993 + $0x68] sm:$0x1] %v1057
      %v1059 = vld [vmem:[%s993 + $0x6c] sm:$0xf]
      %v1060 = vsel %vm995, %v832, %v1059
      %1061 = vst [vmem:[%s993 + $0x6c] sm:$0xf] %v1060
      %1062 = vst.msk [vmem:[%s993 + $0x70] sm:$0xf] %vm549, %v841
      %v1063 = vld [vmem:[%s993 + $0x74] sm:$0x1]
      %v1064 = vsel %vm560, %v842, %v1063
      %1065 = vst [vmem:[%s993 + $0x74] sm:$0x1] %v1064
      %v1066 = vld [vmem:[%s993 + $0x78] sm:$0xf]
      %v1067 = vsel %vm995, %v849, %v1066
      %1068 = vst [vmem:[%s993 + $0x78] sm:$0xf] %v1067
      %1069 = vst.msk [vmem:[%s993 + $0x7c] sm:$0xf] %vm549, %v858
      %v1070 = vld [vmem:[%s993 + $0x80] sm:$0x1]
      %v1071 = vsel %vm560, %v859, %v1070
      %1072 = vst [vmem:[%s993 + $0x80] sm:$0x1] %v1071
      %v1073 = vld [vmem:[%s993 + $0x84] sm:$0xf]
      %v1074 = vsel %vm995, %v866, %v1073
      %1075 = vst [vmem:[%s993 + $0x84] sm:$0xf] %v1074
      %1076 = vst.msk [vmem:[%s993 + $0x88] sm:$0xf] %vm549, %v875
      %v1077 = vld [vmem:[%s993 + $0x8c] sm:$0x1]
      %v1078 = vsel %vm560, %v876, %v1077
      %1079 = vst [vmem:[%s993 + $0x8c] sm:$0x1] %v1078
      %v1080 = vld [vmem:[%s993 + $0x90] sm:$0xf]
      %v1081 = vsel %vm995, %v883, %v1080
      %1082 = vst [vmem:[%s993 + $0x90] sm:$0xf] %v1081
      %1083 = vst.msk [vmem:[%s993 + $0x94] sm:$0xf] %vm549, %v892
      %v1084 = vld [vmem:[%s993 + $0x98] sm:$0x1]
      %v1085 = vsel %vm560, %v893, %v1084
      %1086 = vst [vmem:[%s993 + $0x98] sm:$0x1] %v1085
      %v1087 = vld [vmem:[%s993 + $0x9c] sm:$0xf]
      %v1088 = vsel %vm995, %v900, %v1087
      %1089 = vst [vmem:[%s993 + $0x9c] sm:$0xf] %v1088
      %1090 = vst.msk [vmem:[%s993 + $0xa0] sm:$0xf] %vm549, %v909
      %v1091 = vld [vmem:[%s993 + $0xa4] sm:$0x1]
      %v1092 = vsel %vm560, %v910, %v1091
      %1093 = vst [vmem:[%s993 + $0xa4] sm:$0x1] %v1092
      %v1094 = vld [vmem:[%s993 + $0xa8] sm:$0xf]
      %v1095 = vsel %vm995, %v917, %v1094
      %1096 = vst [vmem:[%s993 + $0xa8] sm:$0xf] %v1095
      %1097 = vst.msk [vmem:[%s993 + $0xac] sm:$0xf] %vm549, %v926
      %v1098 = vld [vmem:[%s993 + $0xb0] sm:$0x1]
      %v1099 = vsel %vm560, %v927, %v1098
      %1100 = vst [vmem:[%s993 + $0xb0] sm:$0x1] %v1099
      %v1101 = vld [vmem:[%s993 + $0xb4] sm:$0xf]
      %v1102 = vsel %vm995, %v934, %v1101
      %1103 = vst [vmem:[%s993 + $0xb4] sm:$0xf] %v1102
      %1104 = vst.msk [vmem:[%s993 + $0xb8] sm:$0xf] %vm549, %v943
      %v1105 = vld [vmem:[%s993 + $0xbc] sm:$0x1]
      %v1106 = vsel %vm560, %v944, %v1105
      %1107 = vst [vmem:[%s993 + $0xbc] sm:$0x1] %v1106
      %v1108 = vld [vmem:[#allocation2] sm:$0xf]
      %v1109 = vld [vmem:[#allocation2 + $0x4] sm:$0xf]
      %v1110 = vld [vmem:[#allocation2 + $0x8] sm:$0x1]
      %v1111 = vld [vmem:[#allocation2 + $0xc] sm:$0xf]
      %v1112 = vld [vmem:[#allocation2 + $0x10] sm:$0xf]
      %v1113 = vld [vmem:[#allocation2 + $0x14] sm:$0x1]
      %v1114 = vld [vmem:[#allocation2 + $0x18] sm:$0xf]
      %v1115 = vld [vmem:[#allocation2 + $0x1c] sm:$0xf]
      %v1116 = vld [vmem:[#allocation2 + $0x20] sm:$0x1]
      %v1117 = vld [vmem:[#allocation2 + $0x24] sm:$0xf]
      %v1118 = vld [vmem:[#allocation2 + $0x28] sm:$0xf]
      %v1119 = vld [vmem:[#allocation2 + $0x2c] sm:$0x1]
      %v1120 = vld [vmem:[#allocation2 + $0x30] sm:$0xf]
      %v1121 = vld [vmem:[#allocation2 + $0x34] sm:$0xf]
      %v1122 = vld [vmem:[#allocation2 + $0x38] sm:$0x1]
      %v1123 = vld [vmem:[#allocation2 + $0x3c] sm:$0xf]
      %v1124 = vld [vmem:[#allocation2 + $0x40] sm:$0xf]
      %v1125 = vld [vmem:[#allocation2 + $0x44] sm:$0x1]
      %v1126 = vld [vmem:[#allocation2 + $0x48] sm:$0xf]
      %v1127 = vld [vmem:[#allocation2 + $0x4c] sm:$0xf]
      %v1128 = vld [vmem:[#allocation2 + $0x50] sm:$0x1]
      %v1129 = vld [vmem:[#allocation2 + $0x54] sm:$0xf]
      %v1130 = vld [vmem:[#allocation2 + $0x58] sm:$0xf]
      %v1131 = vld [vmem:[#allocation2 + $0x5c] sm:$0x1]
      %v1132 = vld [vmem:[#allocation2 + $0x60] sm:$0xf]
      %v1133 = vld [vmem:[#allocation2 + $0x64] sm:$0xf]
      %v1134 = vld [vmem:[#allocation2 + $0x68] sm:$0x1]
      %v1135 = vld [vmem:[#allocation2 + $0x6c] sm:$0xf]
      %v1136 = vld [vmem:[#allocation2 + $0x70] sm:$0xf]
      %v1137 = vld [vmem:[#allocation2 + $0x74] sm:$0x1]
      %v1138 = vld [vmem:[#allocation2 + $0x78] sm:$0xf]
      %v1139 = vld [vmem:[#allocation2 + $0x7c] sm:$0xf]
      %v1140 = vld [vmem:[#allocation2 + $0x80] sm:$0x1]
      %v1141 = vld [vmem:[#allocation2 + $0x84] sm:$0xf]
      %v1142 = vld [vmem:[#allocation2 + $0x88] sm:$0xf]
      %v1143 = vld [vmem:[#allocation2 + $0x8c] sm:$0x1]
      %v1144 = vld [vmem:[#allocation2 + $0x90] sm:$0xf]
      %v1145 = vld [vmem:[#allocation2 + $0x94] sm:$0xf]
      %v1146 = vld [vmem:[#allocation2 + $0x98] sm:$0x1]
      %v1147 = vld [vmem:[#allocation2 + $0x9c] sm:$0xf]
      %v1148 = vld [vmem:[#allocation2 + $0xa0] sm:$0xf]
      %v1149 = vld [vmem:[#allocation2 + $0xa4] sm:$0x1]
      %v1150 = vld [vmem:[#allocation2 + $0xa8] sm:$0xf]
      %v1151 = vld [vmem:[#allocation2 + $0xac] sm:$0xf]
      %v1152 = vld [vmem:[#allocation2 + $0xb0] sm:$0x1]
      %v1153 = vld [vmem:[#allocation2 + $0xb4] sm:$0xf]
      %v1154 = vld [vmem:[#allocation2 + $0xb8] sm:$0xf]
      %v1155 = vld [vmem:[#allocation2 + $0xbc] sm:$0x1]
      %v1156 = vld [vmem:[#allocation2 + $0xc0] sm:$0xf]
      %v1157 = vld [vmem:[#allocation2 + $0xc4] sm:$0xf]
      %v1158 = vld [vmem:[#allocation2 + $0xc8] sm:$0x1]
      %v1159 = vld [vmem:[#allocation2 + $0xcc] sm:$0xf]
      %v1160 = vld [vmem:[#allocation2 + $0xd0] sm:$0xf]
      %v1161 = vld [vmem:[#allocation2 + $0xd4] sm:$0x1]
      %v1162 = vld [vmem:[%s3] sm:$0x3]
      %vm1163 = vsmask.f32 3328
      %vm1164 = vsmask.f32 7440
      %vm1165 = vmor %vm1163, %vm1164
      %v1167 = vshrl.u32 %v1108, 16
      %v1169 = vrot.slane %v1167, 4
      %v1170 = vshll.u32 %v1108, 16
      %v1172 = vrot.slane %v1170, 5
      %v1173 = vor.u32 %v1169, %v1172
      %v1174 = vrot.slane %v1173, 4
      %v1176 = vshll.u32 %v1109, 16
      %v1178 = vrot.slane %v1176, 5
      %v1179 = vsel %vm1165, %v1174, %v1178
      %v1180 = vshrl.u32 %v1109, 16
      %v1182 = vrot.slane %v1180, 4
      %v1183 = vor.u32 %v1182, %v1178
      %v1184 = vrot.slane %v1183, 4
      %v1186 = vshll.u32 %v1110, 16
      %v1188 = vrot.slane %v1186, 5
      %v1189 = vsel %vm1165, %v1184, %v1188
      %v1191 = vshrl.u32 %v1111, 16
      %v1193 = vrot.slane %v1191, 4
      %v1194 = vshll.u32 %v1111, 16
      %v1196 = vrot.slane %v1194, 5
      %v1197 = vor.u32 %v1193, %v1196
      %v1198 = vrot.slane %v1197, 4
      %v1200 = vshll.u32 %v1112, 16
      %v1202 = vrot.slane %v1200, 5
      %v1203 = vsel %vm1165, %v1198, %v1202
      %v1204 = vshrl.u32 %v1112, 16
      %v1206 = vrot.slane %v1204, 4
      %v1207 = vor.u32 %v1206, %v1202
      %v1208 = vrot.slane %v1207, 4
      %v1210 = vshll.u32 %v1113, 16
      %v1212 = vrot.slane %v1210, 5
      %v1213 = vsel %vm1165, %v1208, %v1212
      %v1215 = vshrl.u32 %v1114, 16
      %v1217 = vrot.slane %v1215, 4
      %v1218 = vshll.u32 %v1114, 16
      %v1220 = vrot.slane %v1218, 5
      %v1221 = vor.u32 %v1217, %v1220
      %v1222 = vrot.slane %v1221, 4
      %v1224 = vshll.u32 %v1115, 16
      %v1226 = vrot.slane %v1224, 5
      %v1227 = vsel %vm1165, %v1222, %v1226
      %v1228 = vshrl.u32 %v1115, 16
      %v1230 = vrot.slane %v1228, 4
      %v1231 = vor.u32 %v1230, %v1226
      %v1232 = vrot.slane %v1231, 4
      %v1234 = vshll.u32 %v1116, 16
      %v1236 = vrot.slane %v1234, 5
      %v1237 = vsel %vm1165, %v1232, %v1236
      %v1239 = vshrl.u32 %v1117, 16
      %v1241 = vrot.slane %v1239, 4
      %v1242 = vshll.u32 %v1117, 16
      %v1244 = vrot.slane %v1242, 5
      %v1245 = vor.u32 %v1241, %v1244
      %v1246 = vrot.slane %v1245, 4
      %v1248 = vshll.u32 %v1118, 16
      %v1250 = vrot.slane %v1248, 5
      %v1251 = vsel %vm1165, %v1246, %v1250
      %v1252 = vshrl.u32 %v1118, 16
      %v1254 = vrot.slane %v1252, 4
      %v1255 = vor.u32 %v1254, %v1250
      %v1256 = vrot.slane %v1255, 4
      %v1258 = vshll.u32 %v1119, 16
      %v1260 = vrot.slane %v1258, 5
      %v1261 = vsel %vm1165, %v1256, %v1260
      %v1263 = vshrl.u32 %v1120, 16
      %v1265 = vrot.slane %v1263, 4
      %v1266 = vshll.u32 %v1120, 16
      %v1268 = vrot.slane %v1266, 5
      %v1269 = vor.u32 %v1265, %v1268
      %v1270 = vrot.slane %v1269, 4
      %v1272 = vshll.u32 %v1121, 16
      %v1274 = vrot.slane %v1272, 5
      %v1275 = vsel %vm1165, %v1270, %v1274
      %v1276 = vshrl.u32 %v1121, 16
      %v1278 = vrot.slane %v1276, 4
      %v1279 = vor.u32 %v1278, %v1274
      %v1280 = vrot.slane %v1279, 4
      %v1282 = vshll.u32 %v1122, 16
      %v1284 = vrot.slane %v1282, 5
      %v1285 = vsel %vm1165, %v1280, %v1284
      %v1287 = vshrl.u32 %v1123, 16
      %v1289 = vrot.slane %v1287, 4
      %v1290 = vshll.u32 %v1123, 16
      %v1292 = vrot.slane %v1290, 5
      %v1293 = vor.u32 %v1289, %v1292
      %v1294 = vrot.slane %v1293, 4
      %v1296 = vshll.u32 %v1124, 16
      %v1298 = vrot.slane %v1296, 5
      %v1299 = vsel %vm1165, %v1294, %v1298
      %v1300 = vshrl.u32 %v1124, 16
      %v1302 = vrot.slane %v1300, 4
      %v1303 = vor.u32 %v1302, %v1298
      %v1304 = vrot.slane %v1303, 4
      %v1306 = vshll.u32 %v1125, 16
      %v1308 = vrot.slane %v1306, 5
      %v1309 = vsel %vm1165, %v1304, %v1308
      %v1311 = vshrl.u32 %v1126, 16
      %v1313 = vrot.slane %v1311, 4
      %v1314 = vshll.u32 %v1126, 16
      %v1316 = vrot.slane %v1314, 5
      %v1317 = vor.u32 %v1313, %v1316
      %v1318 = vrot.slane %v1317, 4
      %v1320 = vshll.u32 %v1127, 16
      %v1322 = vrot.slane %v1320, 5
      %v1323 = vsel %vm1165, %v1318, %v1322
      %v1324 = vshrl.u32 %v1127, 16
      %v1326 = vrot.slane %v1324, 4
      %v1327 = vor.u32 %v1326, %v1322
      %v1328 = vrot.slane %v1327, 4
      %v1330 = vshll.u32 %v1128, 16
      %v1332 = vrot.slane %v1330, 5
      %v1333 = vsel %vm1165, %v1328, %v1332
      %v1335 = vshrl.u32 %v1129, 16
      %v1337 = vrot.slane %v1335, 4
      %v1338 = vshll.u32 %v1129, 16
      %v1340 = vrot.slane %v1338, 5
      %v1341 = vor.u32 %v1337, %v1340
      %v1342 = vrot.slane %v1341, 4
      %v1344 = vshll.u32 %v1130, 16
      %v1346 = vrot.slane %v1344, 5
      %v1347 = vsel %vm1165, %v1342, %v1346
      %v1348 = vshrl.u32 %v1130, 16
      %v1350 = vrot.slane %v1348, 4
      %v1351 = vor.u32 %v1350, %v1346
      %v1352 = vrot.slane %v1351, 4
      %v1354 = vshll.u32 %v1131, 16
      %v1356 = vrot.slane %v1354, 5
      %v1357 = vsel %vm1165, %v1352, %v1356
      %v1359 = vshrl.u32 %v1132, 16
      %v1361 = vrot.slane %v1359, 4
      %v1362 = vshll.u32 %v1132, 16
      %v1364 = vrot.slane %v1362, 5
      %v1365 = vor.u32 %v1361, %v1364
      %v1366 = vrot.slane %v1365, 4
      %v1368 = vshll.u32 %v1133, 16
      %v1370 = vrot.slane %v1368, 5
      %v1371 = vsel %vm1165, %v1366, %v1370
      %v1372 = vshrl.u32 %v1133, 16
      %v1374 = vrot.slane %v1372, 4
      %v1375 = vor.u32 %v1374, %v1370
      %v1376 = vrot.slane %v1375, 4
      %v1378 = vshll.u32 %v1134, 16
      %v1380 = vrot.slane %v1378, 5
      %v1381 = vsel %vm1165, %v1376, %v1380
      %v1383 = vshrl.u32 %v1135, 16
      %v1385 = vrot.slane %v1383, 4
      %v1386 = vshll.u32 %v1135, 16
      %v1388 = vrot.slane %v1386, 5
      %v1389 = vor.u32 %v1385, %v1388
      %v1390 = vrot.slane %v1389, 4
      %v1392 = vshll.u32 %v1136, 16
      %v1394 = vrot.slane %v1392, 5
      %v1395 = vsel %vm1165, %v1390, %v1394
      %v1396 = vshrl.u32 %v1136, 16
      %v1398 = vrot.slane %v1396, 4
      %v1399 = vor.u32 %v1398, %v1394
      %v1400 = vrot.slane %v1399, 4
      %v1402 = vshll.u32 %v1137, 16
      %v1404 = vrot.slane %v1402, 5
      %v1405 = vsel %vm1165, %v1400, %v1404
      %v1407 = vshrl.u32 %v1138, 16
      %v1409 = vrot.slane %v1407, 4
      %v1410 = vshll.u32 %v1138, 16
      %v1412 = vrot.slane %v1410, 5
      %v1413 = vor.u32 %v1409, %v1412
      %v1414 = vrot.slane %v1413, 4
      %v1416 = vshll.u32 %v1139, 16
      %v1418 = vrot.slane %v1416, 5
      %v1419 = vsel %vm1165, %v1414, %v1418
      %v1420 = vshrl.u32 %v1139, 16
      %v1422 = vrot.slane %v1420, 4
      %v1423 = vor.u32 %v1422, %v1418
      %v1424 = vrot.slane %v1423, 4
      %v1426 = vshll.u32 %v1140, 16
      %v1428 = vrot.slane %v1426, 5
      %v1429 = vsel %vm1165, %v1424, %v1428
      %v1431 = vshrl.u32 %v1141, 16
      %v1433 = vrot.slane %v1431, 4
      %v1434 = vshll.u32 %v1141, 16
      %v1436 = vrot.slane %v1434, 5
      %v1437 = vor.u32 %v1433, %v1436
      %v1438 = vrot.slane %v1437, 4
      %v1440 = vshll.u32 %v1142, 16
      %v1442 = vrot.slane %v1440, 5
      %v1443 = vsel %vm1165, %v1438, %v1442
      %v1444 = vshrl.u32 %v1142, 16
      %v1446 = vrot.slane %v1444, 4
      %v1447 = vor.u32 %v1446, %v1442
      %v1448 = vrot.slane %v1447, 4
      %v1450 = vshll.u32 %v1143, 16
      %v1452 = vrot.slane %v1450, 5
      %v1453 = vsel %vm1165, %v1448, %v1452
      %v1455 = vshrl.u32 %v1144, 16
      %v1457 = vrot.slane %v1455, 4
      %v1458 = vshll.u32 %v1144, 16
      %v1460 = vrot.slane %v1458, 5
      %v1461 = vor.u32 %v1457, %v1460
      %v1462 = vrot.slane %v1461, 4
      %v1464 = vshll.u32 %v1145, 16
      %v1466 = vrot.slane %v1464, 5
      %v1467 = vsel %vm1165, %v1462, %v1466
      %v1468 = vshrl.u32 %v1145, 16
      %v1470 = vrot.slane %v1468, 4
      %v1471 = vor.u32 %v1470, %v1466
      %v1472 = vrot.slane %v1471, 4
      %v1474 = vshll.u32 %v1146, 16
      %v1476 = vrot.slane %v1474, 5
      %v1477 = vsel %vm1165, %v1472, %v1476
      %v1479 = vshrl.u32 %v1147, 16
      %v1481 = vrot.slane %v1479, 4
      %v1482 = vshll.u32 %v1147, 16
      %v1484 = vrot.slane %v1482, 5
      %v1485 = vor.u32 %v1481, %v1484
      %v1486 = vrot.slane %v1485, 4
      %v1488 = vshll.u32 %v1148, 16
      %v1490 = vrot.slane %v1488, 5
      %v1491 = vsel %vm1165, %v1486, %v1490
      %v1492 = vshrl.u32 %v1148, 16
      %v1494 = vrot.slane %v1492, 4
      %v1495 = vor.u32 %v1494, %v1490
      %v1496 = vrot.slane %v1495, 4
      %v1498 = vshll.u32 %v1149, 16
      %v1500 = vrot.slane %v1498, 5
      %v1501 = vsel %vm1165, %v1496, %v1500
      %v1503 = vshrl.u32 %v1150, 16
      %v1505 = vrot.slane %v1503, 4
      %v1506 = vshll.u32 %v1150, 16
      %v1508 = vrot.slane %v1506, 5
      %v1509 = vor.u32 %v1505, %v1508
      %v1510 = vrot.slane %v1509, 4
      %v1512 = vshll.u32 %v1151, 16
      %v1514 = vrot.slane %v1512, 5
      %v1515 = vsel %vm1165, %v1510, %v1514
      %v1516 = vshrl.u32 %v1151, 16
      %v1518 = vrot.slane %v1516, 4
      %v1519 = vor.u32 %v1518, %v1514
      %v1520 = vrot.slane %v1519, 4
      %v1522 = vshll.u32 %v1152, 16
      %v1524 = vrot.slane %v1522, 5
      %v1525 = vsel %vm1165, %v1520, %v1524
      %v1527 = vshrl.u32 %v1153, 16
      %v1529 = vrot.slane %v1527, 4
      %v1530 = vshll.u32 %v1153, 16
      %v1532 = vrot.slane %v1530, 5
      %v1533 = vor.u32 %v1529, %v1532
      %v1534 = vrot.slane %v1533, 4
      %v1536 = vshll.u32 %v1154, 16
      %v1538 = vrot.slane %v1536, 5
      %v1539 = vsel %vm1165, %v1534, %v1538
      %v1540 = vshrl.u32 %v1154, 16
      %v1542 = vrot.slane %v1540, 4
      %v1543 = vor.u32 %v1542, %v1538
      %v1544 = vrot.slane %v1543, 4
      %v1546 = vshll.u32 %v1155, 16
      %v1548 = vrot.slane %v1546, 5
      %v1549 = vsel %vm1165, %v1544, %v1548
      %s1550 = scalar_lea.vmem %s3, 2
      %v1551 = vld [vmem:[%s1550] sm:$0x3]
      %v1552 = vunpack.c.l.b16 %v1179
      %v1553 = vunpack.c.l.b16 %v1189
      %v1554 = vunpack.c.l.b16 %v1203
      %v1555 = vunpack.c.l.b16 %v1213
      %v1556 = vunpack.c.l.b16 %v1227
      %v1557 = vunpack.c.l.b16 %v1237
      %v1558 = vunpack.c.l.b16 %v1251
      %v1559 = vunpack.c.l.b16 %v1261
      %v1560 = vunpack.c.l.b16 %v1275
      %v1561 = vunpack.c.l.b16 %v1285
      %v1562 = vunpack.c.l.b16 %v1299
      %v1563 = vunpack.c.l.b16 %v1309
      %v1564 = vunpack.c.l.b16 %v1323
      %v1565 = vunpack.c.l.b16 %v1333
      %v1566 = vunpack.c.l.b16 %v1347
      %v1567 = vunpack.c.l.b16 %v1357
      %v1568 = vunpack.c.l.b16 %v1371
      %v1569 = vunpack.c.l.b16 %v1381
      %v1570 = vunpack.c.l.b16 %v1395
      %v1571 = vunpack.c.l.b16 %v1405
      %v1572 = vunpack.c.l.b16 %v1419
      %v1573 = vunpack.c.l.b16 %v1429
      %v1574 = vunpack.c.l.b16 %v1443
      %v1575 = vunpack.c.l.b16 %v1453
      %v1576 = vunpack.c.l.b16 %v1467
      %v1577 = vunpack.c.l.b16 %v1477
      %v1578 = vunpack.c.l.b16 %v1491
      %v1579 = vunpack.c.l.b16 %v1501
      %v1580 = vunpack.c.l.b16 %v1515
      %v1581 = vunpack.c.l.b16 %v1525
      %v1582 = vunpack.c.l.b16 %v1539
      %v1583 = vunpack.c.l.b16 %v1549
      %v1584 = vpack.c.b16 %v1553, %v1552
      %v1585 = vpack.c.b16 %v1555, %v1554
      %v1586 = vpack.c.b16 %v1557, %v1556
      %v1587 = vpack.c.b16 %v1559, %v1558
      %v1588 = vpack.c.b16 %v1561, %v1560
      %v1589 = vpack.c.b16 %v1563, %v1562
      %v1590 = vpack.c.b16 %v1565, %v1564
      %v1591 = vpack.c.b16 %v1567, %v1566
      %v1592 = vpack.c.b16 %v1569, %v1568
      %v1593 = vpack.c.b16 %v1571, %v1570
      %v1594 = vpack.c.b16 %v1573, %v1572
      %v1595 = vpack.c.b16 %v1575, %v1574
      %v1596 = vpack.c.b16 %v1577, %v1576
      %v1597 = vpack.c.b16 %v1579, %v1578
      %v1598 = vpack.c.b16 %v1581, %v1580
      %v1599 = vpack.c.b16 %v1583, %v1582
      %v1601 = vsel %vm343, %v1584, 0
      %v1604 = vsel %vm343, %v1585, 0
      %v1607 = vsel %vm343, %v1586, 0
      %v1610 = vsel %vm343, %v1587, 0
      %v1613 = vsel %vm343, %v1588, 0
      %v1616 = vsel %vm343, %v1589, 0
      %v1619 = vsel %vm343, %v1590, 0
      %v1622 = vsel %vm343, %v1591, 0
      %v1625 = vsel %vm343, %v1592, 0
      %v1628 = vsel %vm343, %v1593, 0
      %v1631 = vsel %vm343, %v1594, 0
      %v1634 = vsel %vm343, %v1595, 0
      %v1637 = vsel %vm343, %v1596, 0
      %v1640 = vsel %vm343, %v1597, 0
      %v1643 = vsel %vm343, %v1598, 0
      %v1646 = vsel %vm343, %v1599, 0
      %v1649 = vsel %vm392, %v1551, 0
      %1651 = vmatpush.bf16.msra.mxu0 0
      %1652 = vmatpush.bf16.msra.mxu0 0
      %1653 = vmatpush.bf16.msra.mxu0 0
      %1654 = vmatpush.bf16.msra.mxu0 0
      %1655 = vmatpush.bf16.msra.mxu0 0
      %1656 = vmatpush.bf16.msra.mxu0 0
      %1657 = vmatpush.bf16.msra.mxu0 0
      %1658 = vmatpush.bf16.msra.mxu0 %v1649
      %1659 = vmatmul.bf16.gmra.mxu0 %v1601
      %v1660 = vpop.f32.mrf.mxu0
      %v1661 = vadd.f32 0.0, %v1660
      %v1662 = vpop.f32.mrf.mxu0
      %v1663 = vadd.f32 0.0, %v1662
      %1664 = vmatmul.bf16.gmra.mxu0 %v1604
      %v1665 = vpop.f32.mrf.mxu0
      %v1666 = vadd.f32 0.0, %v1665
      %v1667 = vpop.f32.mrf.mxu0
      %v1668 = vadd.f32 0.0, %v1667
      %1669 = vmatmul.bf16.gmra.mxu0 %v1607
      %v1670 = vpop.f32.mrf.mxu0
      %v1671 = vadd.f32 0.0, %v1670
      %v1672 = vpop.f32.mrf.mxu0
      %v1673 = vadd.f32 0.0, %v1672
      %1674 = vmatmul.bf16.gmra.mxu0 %v1610
      %v1675 = vpop.f32.mrf.mxu0
      %v1676 = vadd.f32 0.0, %v1675
      %v1677 = vpop.f32.mrf.mxu0
      %v1678 = vadd.f32 0.0, %v1677
      %1679 = vmatmul.bf16.gmra.mxu0 %v1613
      %v1680 = vpop.f32.mrf.mxu0
      %v1681 = vadd.f32 0.0, %v1680
      %v1682 = vpop.f32.mrf.mxu0
      %v1683 = vadd.f32 0.0, %v1682
      %1684 = vmatmul.bf16.gmra.mxu0 %v1616
      %v1685 = vpop.f32.mrf.mxu0
      %v1686 = vadd.f32 0.0, %v1685
      %v1687 = vpop.f32.mrf.mxu0
      %v1688 = vadd.f32 0.0, %v1687
      %1689 = vmatmul.bf16.gmra.mxu0 %v1619
      %v1690 = vpop.f32.mrf.mxu0
      %v1691 = vadd.f32 0.0, %v1690
      %v1692 = vpop.f32.mrf.mxu0
      %v1693 = vadd.f32 0.0, %v1692
      %1694 = vmatmul.bf16.gmra.mxu0 %v1622
      %v1695 = vpop.f32.mrf.mxu0
      %v1696 = vadd.f32 0.0, %v1695
      %v1697 = vpop.f32.mrf.mxu0
      %v1698 = vadd.f32 0.0, %v1697
      %1699 = vmatmul.bf16.gmra.mxu0 %v1625
      %v1700 = vpop.f32.mrf.mxu0
      %v1701 = vadd.f32 0.0, %v1700
      %v1702 = vpop.f32.mrf.mxu0
      %v1703 = vadd.f32 0.0, %v1702
      %1704 = vmatmul.bf16.gmra.mxu0 %v1628
      %v1705 = vpop.f32.mrf.mxu0
      %v1706 = vadd.f32 0.0, %v1705
      %v1707 = vpop.f32.mrf.mxu0
      %v1708 = vadd.f32 0.0, %v1707
      %1709 = vmatmul.bf16.gmra.mxu0 %v1631
      %v1710 = vpop.f32.mrf.mxu0
      %v1711 = vadd.f32 0.0, %v1710
      %v1712 = vpop.f32.mrf.mxu0
      %v1713 = vadd.f32 0.0, %v1712
      %1714 = vmatmul.bf16.gmra.mxu0 %v1634
      %v1715 = vpop.f32.mrf.mxu0
      %v1716 = vadd.f32 0.0, %v1715
      %v1717 = vpop.f32.mrf.mxu0
      %v1718 = vadd.f32 0.0, %v1717
      %1719 = vmatmul.bf16.gmra.mxu0 %v1637
      %v1720 = vpop.f32.mrf.mxu0
      %v1721 = vadd.f32 0.0, %v1720
      %v1722 = vpop.f32.mrf.mxu0
      %v1723 = vadd.f32 0.0, %v1722
      %1724 = vmatmul.bf16.gmra.mxu0 %v1640
      %v1725 = vpop.f32.mrf.mxu0
      %v1726 = vadd.f32 0.0, %v1725
      %v1727 = vpop.f32.mrf.mxu0
      %v1728 = vadd.f32 0.0, %v1727
      %1729 = vmatmul.bf16.gmra.mxu0 %v1643
      %v1730 = vpop.f32.mrf.mxu0
      %v1731 = vadd.f32 0.0, %v1730
      %v1732 = vpop.f32.mrf.mxu0
      %v1733 = vadd.f32 0.0, %v1732
      %1734 = vmatmul.bf16.gmra.mxu0 %v1646
      %v1735 = vpop.f32.mrf.mxu0
      %v1736 = vadd.f32 0.0, %v1735
      %v1737 = vpop.f32.mrf.mxu0
      %v1738 = vadd.f32 0.0, %v1737
      %1739 = vdwg.mxu0
      %v1772 = vunpack.c.l.b16 %v1108
      %v1773 = vunpack.c.l.b16 %v1109
      %v1774 = vunpack.c.l.b16 %v1111
      %v1775 = vunpack.c.l.b16 %v1112
      %v1776 = vunpack.c.l.b16 %v1114
      %v1777 = vunpack.c.l.b16 %v1115
      %v1778 = vunpack.c.l.b16 %v1117
      %v1779 = vunpack.c.l.b16 %v1118
      %v1780 = vunpack.c.l.b16 %v1120
      %v1781 = vunpack.c.l.b16 %v1121
      %v1782 = vunpack.c.l.b16 %v1123
      %v1783 = vunpack.c.l.b16 %v1124
      %v1784 = vunpack.c.l.b16 %v1126
      %v1785 = vunpack.c.l.b16 %v1127
      %v1786 = vunpack.c.l.b16 %v1129
      %v1787 = vunpack.c.l.b16 %v1130
      %v1788 = vunpack.c.l.b16 %v1132
      %v1789 = vunpack.c.l.b16 %v1133
      %v1790 = vunpack.c.l.b16 %v1135
      %v1791 = vunpack.c.l.b16 %v1136
      %v1792 = vunpack.c.l.b16 %v1138
      %v1793 = vunpack.c.l.b16 %v1139
      %v1794 = vunpack.c.l.b16 %v1141
      %v1795 = vunpack.c.l.b16 %v1142
      %v1796 = vunpack.c.l.b16 %v1144
      %v1797 = vunpack.c.l.b16 %v1145
      %v1798 = vunpack.c.l.b16 %v1147
      %v1799 = vunpack.c.l.b16 %v1148
      %v1800 = vunpack.c.l.b16 %v1150
      %v1801 = vunpack.c.l.b16 %v1151
      %v1802 = vunpack.c.l.b16 %v1153
      %v1803 = vunpack.c.l.b16 %v1154
      %v1804 = vpack.c.b16 %v1773, %v1772
      %v1805 = vpack.c.b16 %v1775, %v1774
      %v1806 = vpack.c.b16 %v1777, %v1776
      %v1807 = vpack.c.b16 %v1779, %v1778
      %v1808 = vpack.c.b16 %v1781, %v1780
      %v1809 = vpack.c.b16 %v1783, %v1782
      %v1810 = vpack.c.b16 %v1785, %v1784
      %v1811 = vpack.c.b16 %v1787, %v1786
      %v1812 = vpack.c.b16 %v1789, %v1788
      %v1813 = vpack.c.b16 %v1791, %v1790
      %v1814 = vpack.c.b16 %v1793, %v1792
      %v1815 = vpack.c.b16 %v1795, %v1794
      %v1816 = vpack.c.b16 %v1797, %v1796
      %v1817 = vpack.c.b16 %v1799, %v1798
      %v1818 = vpack.c.b16 %v1801, %v1800
      %v1819 = vpack.c.b16 %v1803, %v1802
      %v1821 = vsel %vm343, %v1804, 0
      %v1824 = vsel %vm343, %v1805, 0
      %v1827 = vsel %vm343, %v1806, 0
      %v1830 = vsel %vm343, %v1807, 0
      %v1833 = vsel %vm343, %v1808, 0
      %v1836 = vsel %vm343, %v1809, 0
      %v1839 = vsel %vm343, %v1810, 0
      %v1842 = vsel %vm343, %v1811, 0
      %v1845 = vsel %vm343, %v1812, 0
      %v1848 = vsel %vm343, %v1813, 0
      %v1851 = vsel %vm343, %v1814, 0
      %v1854 = vsel %vm343, %v1815, 0
      %v1857 = vsel %vm343, %v1816, 0
      %v1860 = vsel %vm343, %v1817, 0
      %v1863 = vsel %vm343, %v1818, 0
      %v1866 = vsel %vm343, %v1819, 0
      %v1869 = vsel %vm392, %v1162, 0
      %1871 = vmatpush.bf16.msra.mxu0 0
      %1872 = vmatpush.bf16.msra.mxu0 0
      %1873 = vmatpush.bf16.msra.mxu0 0
      %1874 = vmatpush.bf16.msra.mxu0 0
      %1875 = vmatpush.bf16.msra.mxu0 0
      %1876 = vmatpush.bf16.msra.mxu0 0
      %1877 = vmatpush.bf16.msra.mxu0 0
      %1878 = vmatpush.bf16.msra.mxu0 %v1869
      %1879 = vmatmul.bf16.gmra.mxu0 %v1821
      %v1880 = vpop.f32.mrf.mxu0
      %v1881 = vadd.f32 %v1661, %v1880
      %v1882 = vpop.f32.mrf.mxu0
      %v1883 = vadd.f32 %v1663, %v1882
      %1884 = vmatmul.bf16.gmra.mxu0 %v1824
      %v1885 = vpop.f32.mrf.mxu0
      %v1886 = vadd.f32 %v1666, %v1885
      %v1887 = vpop.f32.mrf.mxu0
      %v1888 = vadd.f32 %v1668, %v1887
      %1889 = vmatmul.bf16.gmra.mxu0 %v1827
      %v1890 = vpop.f32.mrf.mxu0
      %v1891 = vadd.f32 %v1671, %v1890
      %v1892 = vpop.f32.mrf.mxu0
      %v1893 = vadd.f32 %v1673, %v1892
      %1894 = vmatmul.bf16.gmra.mxu0 %v1830
      %v1895 = vpop.f32.mrf.mxu0
      %v1896 = vadd.f32 %v1676, %v1895
      %v1897 = vpop.f32.mrf.mxu0
      %v1898 = vadd.f32 %v1678, %v1897
      %1899 = vmatmul.bf16.gmra.mxu0 %v1833
      %v1900 = vpop.f32.mrf.mxu0
      %v1901 = vadd.f32 %v1681, %v1900
      %v1902 = vpop.f32.mrf.mxu0
      %v1903 = vadd.f32 %v1683, %v1902
      %1904 = vmatmul.bf16.gmra.mxu0 %v1836
      %v1905 = vpop.f32.mrf.mxu0
      %v1906 = vadd.f32 %v1686, %v1905
      %v1907 = vpop.f32.mrf.mxu0
      %v1908 = vadd.f32 %v1688, %v1907
      %1909 = vmatmul.bf16.gmra.mxu0 %v1839
      %v1910 = vpop.f32.mrf.mxu0
      %v1911 = vadd.f32 %v1691, %v1910
      %v1912 = vpop.f32.mrf.mxu0
      %v1913 = vadd.f32 %v1693, %v1912
      %1914 = vmatmul.bf16.gmra.mxu0 %v1842
      %v1915 = vpop.f32.mrf.mxu0
      %v1916 = vadd.f32 %v1696, %v1915
      %v1917 = vpop.f32.mrf.mxu0
      %v1918 = vadd.f32 %v1698, %v1917
      %1919 = vmatmul.bf16.gmra.mxu0 %v1845
      %v1920 = vpop.f32.mrf.mxu0
      %v1921 = vadd.f32 %v1701, %v1920
      %v1922 = vpop.f32.mrf.mxu0
      %v1923 = vadd.f32 %v1703, %v1922
      %1924 = vmatmul.bf16.gmra.mxu0 %v1848
      %v1925 = vpop.f32.mrf.mxu0
      %v1926 = vadd.f32 %v1706, %v1925
      %v1927 = vpop.f32.mrf.mxu0
      %v1928 = vadd.f32 %v1708, %v1927
      %1929 = vmatmul.bf16.gmra.mxu0 %v1851
      %v1930 = vpop.f32.mrf.mxu0
      %v1931 = vadd.f32 %v1711, %v1930
      %v1932 = vpop.f32.mrf.mxu0
      %v1933 = vadd.f32 %v1713, %v1932
      %1934 = vmatmul.bf16.gmra.mxu0 %v1854
      %v1935 = vpop.f32.mrf.mxu0
      %v1936 = vadd.f32 %v1716, %v1935
      %v1937 = vpop.f32.mrf.mxu0
      %v1938 = vadd.f32 %v1718, %v1937
      %1939 = vmatmul.bf16.gmra.mxu0 %v1857
      %v1940 = vpop.f32.mrf.mxu0
      %v1941 = vadd.f32 %v1721, %v1940
      %v1942 = vpop.f32.mrf.mxu0
      %v1943 = vadd.f32 %v1723, %v1942
      %1944 = vmatmul.bf16.gmra.mxu0 %v1860
      %v1945 = vpop.f32.mrf.mxu0
      %v1946 = vadd.f32 %v1726, %v1945
      %v1947 = vpop.f32.mrf.mxu0
      %v1948 = vadd.f32 %v1728, %v1947
      %1949 = vmatmul.bf16.gmra.mxu0 %v1863
      %v1950 = vpop.f32.mrf.mxu0
      %v1951 = vadd.f32 %v1731, %v1950
      %v1952 = vpop.f32.mrf.mxu0
      %v1953 = vadd.f32 %v1733, %v1952
      %1954 = vmatmul.bf16.gmra.mxu0 %v1866
      %v1955 = vpop.f32.mrf.mxu0
      %v1956 = vadd.f32 %v1736, %v1955
      %v1957 = vpop.f32.mrf.mxu0
      %v1958 = vadd.f32 %v1738, %v1957
      %1959 = vdwg.mxu0
      %vm1976 = vcmask 1042432
      %vm1977 = vcmask 1046532
      %vm1978 = vmor %vm1976, %vm1977
      %v1979 = vrot.slane %v1108, 5
      %v1980 = vrot.slane %v1979, 4
      %v1981 = vrot.slane %v1109, 5
      %v1982 = vsel %vm1978, %v1980, %v1981
      %v1983 = vrot.slane %v1981, 4
      %v1984 = vrot.slane %v1110, 5
      %v1985 = vsel %vm1978, %v1983, %v1984
      %v1986 = vrot.slane %v1111, 5
      %v1987 = vrot.slane %v1986, 4
      %v1988 = vrot.slane %v1112, 5
      %v1989 = vsel %vm1978, %v1987, %v1988
      %v1990 = vrot.slane %v1988, 4
      %v1991 = vrot.slane %v1113, 5
      %v1992 = vsel %vm1978, %v1990, %v1991
      %v1993 = vrot.slane %v1114, 5
      %v1994 = vrot.slane %v1993, 4
      %v1995 = vrot.slane %v1115, 5
      %v1996 = vsel %vm1978, %v1994, %v1995
      %v1997 = vrot.slane %v1995, 4
      %v1998 = vrot.slane %v1116, 5
      %v1999 = vsel %vm1978, %v1997, %v1998
      %v2000 = vrot.slane %v1117, 5
      %v2001 = vrot.slane %v2000, 4
      %v2002 = vrot.slane %v1118, 5
      %v2003 = vsel %vm1978, %v2001, %v2002
      %v2004 = vrot.slane %v2002, 4
      %v2005 = vrot.slane %v1119, 5
      %v2006 = vsel %vm1978, %v2004, %v2005
      %v2007 = vrot.slane %v1120, 5
      %v2008 = vrot.slane %v2007, 4
      %v2009 = vrot.slane %v1121, 5
      %v2010 = vsel %vm1978, %v2008, %v2009
      %v2011 = vrot.slane %v2009, 4
      %v2012 = vrot.slane %v1122, 5
      %v2013 = vsel %vm1978, %v2011, %v2012
      %v2014 = vrot.slane %v1123, 5
      %v2015 = vrot.slane %v2014, 4
      %v2016 = vrot.slane %v1124, 5
      %v2017 = vsel %vm1978, %v2015, %v2016
      %v2018 = vrot.slane %v2016, 4
      %v2019 = vrot.slane %v1125, 5
      %v2020 = vsel %vm1978, %v2018, %v2019
      %v2021 = vrot.slane %v1126, 5
      %v2022 = vrot.slane %v2021, 4
      %v2023 = vrot.slane %v1127, 5
      %v2024 = vsel %vm1978, %v2022, %v2023
      %v2025 = vrot.slane %v2023, 4
      %v2026 = vrot.slane %v1128, 5
      %v2027 = vsel %vm1978, %v2025, %v2026
      %v2028 = vrot.slane %v1129, 5
      %v2029 = vrot.slane %v2028, 4
      %v2030 = vrot.slane %v1130, 5
      %v2031 = vsel %vm1978, %v2029, %v2030
      %v2032 = vrot.slane %v2030, 4
      %v2033 = vrot.slane %v1131, 5
      %v2034 = vsel %vm1978, %v2032, %v2033
      %v2035 = vrot.slane %v1132, 5
      %v2036 = vrot.slane %v2035, 4
      %v2037 = vrot.slane %v1133, 5
      %v2038 = vsel %vm1978, %v2036, %v2037
      %v2039 = vrot.slane %v2037, 4
      %v2040 = vrot.slane %v1134, 5
      %v2041 = vsel %vm1978, %v2039, %v2040
      %v2042 = vrot.slane %v1135, 5
      %v2043 = vrot.slane %v2042, 4
      %v2044 = vrot.slane %v1136, 5
      %v2045 = vsel %vm1978, %v2043, %v2044
      %v2046 = vrot.slane %v2044, 4
      %v2047 = vrot.slane %v1137, 5
      %v2048 = vsel %vm1978, %v2046, %v2047
      %v2049 = vrot.slane %v1138, 5
      %v2050 = vrot.slane %v2049, 4
      %v2051 = vrot.slane %v1139, 5
      %v2052 = vsel %vm1978, %v2050, %v2051
      %v2053 = vrot.slane %v2051, 4
      %v2054 = vrot.slane %v1140, 5
      %v2055 = vsel %vm1978, %v2053, %v2054
      %v2056 = vrot.slane %v1141, 5
      %v2057 = vrot.slane %v2056, 4
      %v2058 = vrot.slane %v1142, 5
      %v2059 = vsel %vm1978, %v2057, %v2058
      %v2060 = vrot.slane %v2058, 4
      %v2061 = vrot.slane %v1143, 5
      %v2062 = vsel %vm1978, %v2060, %v2061
      %v2063 = vrot.slane %v1144, 5
      %v2064 = vrot.slane %v2063, 4
      %v2065 = vrot.slane %v1145, 5
      %v2066 = vsel %vm1978, %v2064, %v2065
      %v2067 = vrot.slane %v2065, 4
      %v2068 = vrot.slane %v1146, 5
      %v2069 = vsel %vm1978, %v2067, %v2068
      %v2070 = vrot.slane %v1147, 5
      %v2071 = vrot.slane %v2070, 4
      %v2072 = vrot.slane %v1148, 5
      %v2073 = vsel %vm1978, %v2071, %v2072
      %v2074 = vrot.slane %v2072, 4
      %v2075 = vrot.slane %v1149, 5
      %v2076 = vsel %vm1978, %v2074, %v2075
      %v2077 = vrot.slane %v1150, 5
      %v2078 = vrot.slane %v2077, 4
      %v2079 = vrot.slane %v1151, 5
      %v2080 = vsel %vm1978, %v2078, %v2079
      %v2081 = vrot.slane %v2079, 4
      %v2082 = vrot.slane %v1152, 5
      %v2083 = vsel %vm1978, %v2081, %v2082
      %v2084 = vrot.slane %v1153, 5
      %v2085 = vrot.slane %v2084, 4
      %v2086 = vrot.slane %v1154, 5
      %v2087 = vsel %vm1978, %v2085, %v2086
      %v2088 = vrot.slane %v2086, 4
      %v2089 = vrot.slane %v1155, 5
      %v2090 = vsel %vm1978, %v2088, %v2089
      %s2091 = scalar_lea.vmem %s3, 4
      %v2092 = vld [vmem:[%s2091] sm:$0x3]
      %v2093 = vunpack.c.l.b16 %v1982
      %v2094 = vunpack.c.l.b16 %v1985
      %v2095 = vunpack.c.l.b16 %v1989
      %v2096 = vunpack.c.l.b16 %v1992
      %v2097 = vunpack.c.l.b16 %v1996
      %v2098 = vunpack.c.l.b16 %v1999
      %v2099 = vunpack.c.l.b16 %v2003
      %v2100 = vunpack.c.l.b16 %v2006
      %v2101 = vunpack.c.l.b16 %v2010
      %v2102 = vunpack.c.l.b16 %v2013
      %v2103 = vunpack.c.l.b16 %v2017
      %v2104 = vunpack.c.l.b16 %v2020
      %v2105 = vunpack.c.l.b16 %v2024
      %v2106 = vunpack.c.l.b16 %v2027
      %v2107 = vunpack.c.l.b16 %v2031
      %v2108 = vunpack.c.l.b16 %v2034
      %v2109 = vunpack.c.l.b16 %v2038
      %v2110 = vunpack.c.l.b16 %v2041
      %v2111 = vunpack.c.l.b16 %v2045
      %v2112 = vunpack.c.l.b16 %v2048
      %v2113 = vunpack.c.l.b16 %v2052
      %v2114 = vunpack.c.l.b16 %v2055
      %v2115 = vunpack.c.l.b16 %v2059
      %v2116 = vunpack.c.l.b16 %v2062
      %v2117 = vunpack.c.l.b16 %v2066
      %v2118 = vunpack.c.l.b16 %v2069
      %v2119 = vunpack.c.l.b16 %v2073
      %v2120 = vunpack.c.l.b16 %v2076
      %v2121 = vunpack.c.l.b16 %v2080
      %v2122 = vunpack.c.l.b16 %v2083
      %v2123 = vunpack.c.l.b16 %v2087
      %v2124 = vunpack.c.l.b16 %v2090
      %v2125 = vpack.c.b16 %v2094, %v2093
      %v2126 = vpack.c.b16 %v2096, %v2095
      %v2127 = vpack.c.b16 %v2098, %v2097
      %v2128 = vpack.c.b16 %v2100, %v2099
      %v2129 = vpack.c.b16 %v2102, %v2101
      %v2130 = vpack.c.b16 %v2104, %v2103
      %v2131 = vpack.c.b16 %v2106, %v2105
      %v2132 = vpack.c.b16 %v2108, %v2107
      %v2133 = vpack.c.b16 %v2110, %v2109
      %v2134 = vpack.c.b16 %v2112, %v2111
      %v2135 = vpack.c.b16 %v2114, %v2113
      %v2136 = vpack.c.b16 %v2116, %v2115
      %v2137 = vpack.c.b16 %v2118, %v2117
      %v2138 = vpack.c.b16 %v2120, %v2119
      %v2139 = vpack.c.b16 %v2122, %v2121
      %v2140 = vpack.c.b16 %v2124, %v2123
      %v2142 = vsel %vm343, %v2125, 0
      %v2145 = vsel %vm343, %v2126, 0
      %v2148 = vsel %vm343, %v2127, 0
      %v2151 = vsel %vm343, %v2128, 0
      %v2154 = vsel %vm343, %v2129, 0
      %v2157 = vsel %vm343, %v2130, 0
      %v2160 = vsel %vm343, %v2131, 0
      %v2163 = vsel %vm343, %v2132, 0
      %v2166 = vsel %vm343, %v2133, 0
      %v2169 = vsel %vm343, %v2134, 0
      %v2172 = vsel %vm343, %v2135, 0
      %v2175 = vsel %vm343, %v2136, 0
      %v2178 = vsel %vm343, %v2137, 0
      %v2181 = vsel %vm343, %v2138, 0
      %v2184 = vsel %vm343, %v2139, 0
      %v2187 = vsel %vm343, %v2140, 0
      %v2190 = vsel %vm392, %v2092, 0
      %2192 = vmatpush.bf16.msra.mxu0 0
      %2193 = vmatpush.bf16.msra.mxu0 0
      %2194 = vmatpush.bf16.msra.mxu0 0
      %2195 = vmatpush.bf16.msra.mxu0 0
      %2196 = vmatpush.bf16.msra.mxu0 0
      %2197 = vmatpush.bf16.msra.mxu0 0
      %2198 = vmatpush.bf16.msra.mxu0 0
      %2199 = vmatpush.bf16.msra.mxu0 %v2190
      %2200 = vmatmul.bf16.gmra.mxu0 %v2142
      %v2201 = vpop.f32.mrf.mxu0
      %v2202 = vadd.f32 0.0, %v2201
      %v2203 = vpop.f32.mrf.mxu0
      %v2204 = vadd.f32 0.0, %v2203
      %2205 = vmatmul.bf16.gmra.mxu0 %v2145
      %v2206 = vpop.f32.mrf.mxu0
      %v2207 = vadd.f32 0.0, %v2206
      %v2208 = vpop.f32.mrf.mxu0
      %v2209 = vadd.f32 0.0, %v2208
      %2210 = vmatmul.bf16.gmra.mxu0 %v2148
      %v2211 = vpop.f32.mrf.mxu0
      %v2212 = vadd.f32 0.0, %v2211
      %v2213 = vpop.f32.mrf.mxu0
      %v2214 = vadd.f32 0.0, %v2213
      %2215 = vmatmul.bf16.gmra.mxu0 %v2151
      %v2216 = vpop.f32.mrf.mxu0
      %v2217 = vadd.f32 0.0, %v2216
      %v2218 = vpop.f32.mrf.mxu0
      %v2219 = vadd.f32 0.0, %v2218
      %2220 = vmatmul.bf16.gmra.mxu0 %v2154
      %v2221 = vpop.f32.mrf.mxu0
      %v2222 = vadd.f32 0.0, %v2221
      %v2223 = vpop.f32.mrf.mxu0
      %v2224 = vadd.f32 0.0, %v2223
      %2225 = vmatmul.bf16.gmra.mxu0 %v2157
      %v2226 = vpop.f32.mrf.mxu0
      %v2227 = vadd.f32 0.0, %v2226
      %v2228 = vpop.f32.mrf.mxu0
      %v2229 = vadd.f32 0.0, %v2228
      %2230 = vmatmul.bf16.gmra.mxu0 %v2160
      %v2231 = vpop.f32.mrf.mxu0
      %v2232 = vadd.f32 0.0, %v2231
      %v2233 = vpop.f32.mrf.mxu0
      %v2234 = vadd.f32 0.0, %v2233
      %2235 = vmatmul.bf16.gmra.mxu0 %v2163
      %v2236 = vpop.f32.mrf.mxu0
      %v2237 = vadd.f32 0.0, %v2236
      %v2238 = vpop.f32.mrf.mxu0
      %v2239 = vadd.f32 0.0, %v2238
      %2240 = vmatmul.bf16.gmra.mxu0 %v2166
      %v2241 = vpop.f32.mrf.mxu0
      %v2242 = vadd.f32 0.0, %v2241
      %v2243 = vpop.f32.mrf.mxu0
      %v2244 = vadd.f32 0.0, %v2243
      %2245 = vmatmul.bf16.gmra.mxu0 %v2169
      %v2246 = vpop.f32.mrf.mxu0
      %v2247 = vadd.f32 0.0, %v2246
      %v2248 = vpop.f32.mrf.mxu0
      %v2249 = vadd.f32 0.0, %v2248
      %2250 = vmatmul.bf16.gmra.mxu0 %v2172
      %v2251 = vpop.f32.mrf.mxu0
      %v2252 = vadd.f32 0.0, %v2251
      %v2253 = vpop.f32.mrf.mxu0
      %v2254 = vadd.f32 0.0, %v2253
      %2255 = vmatmul.bf16.gmra.mxu0 %v2175
      %v2256 = vpop.f32.mrf.mxu0
      %v2257 = vadd.f32 0.0, %v2256
      %v2258 = vpop.f32.mrf.mxu0
      %v2259 = vadd.f32 0.0, %v2258
      %2260 = vmatmul.bf16.gmra.mxu0 %v2178
      %v2261 = vpop.f32.mrf.mxu0
      %v2262 = vadd.f32 0.0, %v2261
      %v2263 = vpop.f32.mrf.mxu0
      %v2264 = vadd.f32 0.0, %v2263
      %2265 = vmatmul.bf16.gmra.mxu0 %v2181
      %v2266 = vpop.f32.mrf.mxu0
      %v2267 = vadd.f32 0.0, %v2266
      %v2268 = vpop.f32.mrf.mxu0
      %v2269 = vadd.f32 0.0, %v2268
      %2270 = vmatmul.bf16.gmra.mxu0 %v2184
      %v2271 = vpop.f32.mrf.mxu0
      %v2272 = vadd.f32 0.0, %v2271
      %v2273 = vpop.f32.mrf.mxu0
      %v2274 = vadd.f32 0.0, %v2273
      %2275 = vmatmul.bf16.gmra.mxu0 %v2187
      %v2276 = vpop.f32.mrf.mxu0
      %v2277 = vadd.f32 0.0, %v2276
      %v2278 = vpop.f32.mrf.mxu0
      %v2279 = vadd.f32 0.0, %v2278
      %2280 = vdwg.mxu0
      %v2281 = vadd.f32 %v1881, %v2202
      %v2282 = vadd.f32 %v1883, %v2204
      %v2283 = vadd.f32 %v1886, %v2207
      %v2284 = vadd.f32 %v1888, %v2209
      %v2285 = vadd.f32 %v1891, %v2212
      %v2286 = vadd.f32 %v1893, %v2214
      %v2287 = vadd.f32 %v1896, %v2217
      %v2288 = vadd.f32 %v1898, %v2219
      %v2289 = vadd.f32 %v1901, %v2222
      %v2290 = vadd.f32 %v1903, %v2224
      %v2291 = vadd.f32 %v1906, %v2227
      %v2292 = vadd.f32 %v1908, %v2229
      %v2293 = vadd.f32 %v1911, %v2232
      %v2294 = vadd.f32 %v1913, %v2234
      %v2295 = vadd.f32 %v1916, %v2237
      %v2296 = vadd.f32 %v1918, %v2239
      %v2297 = vadd.f32 %v1921, %v2242
      %v2298 = vadd.f32 %v1923, %v2244
      %v2299 = vadd.f32 %v1926, %v2247
      %v2300 = vadd.f32 %v1928, %v2249
      %v2301 = vadd.f32 %v1931, %v2252
      %v2302 = vadd.f32 %v1933, %v2254
      %v2303 = vadd.f32 %v1936, %v2257
      %v2304 = vadd.f32 %v1938, %v2259
      %v2305 = vadd.f32 %v1941, %v2262
      %v2306 = vadd.f32 %v1943, %v2264
      %v2307 = vadd.f32 %v1946, %v2267
      %v2308 = vadd.f32 %v1948, %v2269
      %v2309 = vadd.f32 %v1951, %v2272
      %v2310 = vadd.f32 %v1953, %v2274
      %v2311 = vadd.f32 %v1956, %v2277
      %v2312 = vadd.f32 %v1958, %v2279
      %s2313 = scalar_lea.vmem %s3, 6
      %v2314 = vld [vmem:[%s2313] sm:$0x3]
      %v2317 = vunpack.c.l.b16 %v1156
      %v2318 = vunpack.c.l.b16 %v1157
      %v2319 = vpack.c.b16 %v2318, %v2317
      %v2321 = vsel %vm343, %v2319, 0
      %v2324 = vsel %vm392, %v2314, 0
      %2326 = vmatpush.bf16.msra.mxu0 0
      %2327 = vmatpush.bf16.msra.mxu0 0
      %2328 = vmatpush.bf16.msra.mxu0 0
      %2329 = vmatpush.bf16.msra.mxu0 0
      %2330 = vmatpush.bf16.msra.mxu0 0
      %2331 = vmatpush.bf16.msra.mxu0 0
      %2332 = vmatpush.bf16.msra.mxu0 0
      %2333 = vmatpush.bf16.msra.mxu0 %v2324
      %2334 = vmatmul.bf16.gmra.mxu0 %v1824
      %v2335 = vpop.f32.mrf.mxu0
      %v2336 = vadd.f32 0.0, %v2335
      %v2337 = vpop.f32.mrf.mxu0
      %v2338 = vadd.f32 0.0, %v2337
      %2339 = vmatmul.bf16.gmra.mxu0 %v1827
      %v2340 = vpop.f32.mrf.mxu0
      %v2341 = vadd.f32 0.0, %v2340
      %v2342 = vpop.f32.mrf.mxu0
      %v2343 = vadd.f32 0.0, %v2342
      %2344 = vmatmul.bf16.gmra.mxu0 %v1830
      %v2345 = vpop.f32.mrf.mxu0
      %v2346 = vadd.f32 0.0, %v2345
      %v2347 = vpop.f32.mrf.mxu0
      %v2348 = vadd.f32 0.0, %v2347
      %2349 = vmatmul.bf16.gmra.mxu0 %v1833
      %v2350 = vpop.f32.mrf.mxu0
      %v2351 = vadd.f32 0.0, %v2350
      %v2352 = vpop.f32.mrf.mxu0
      %v2353 = vadd.f32 0.0, %v2352
      %2354 = vmatmul.bf16.gmra.mxu0 %v1836
      %v2355 = vpop.f32.mrf.mxu0
      %v2356 = vadd.f32 0.0, %v2355
      %v2357 = vpop.f32.mrf.mxu0
      %v2358 = vadd.f32 0.0, %v2357
      %2359 = vmatmul.bf16.gmra.mxu0 %v1839
      %v2360 = vpop.f32.mrf.mxu0
      %v2361 = vadd.f32 0.0, %v2360
      %v2362 = vpop.f32.mrf.mxu0
      %v2363 = vadd.f32 0.0, %v2362
      %2364 = vmatmul.bf16.gmra.mxu0 %v1842
      %v2365 = vpop.f32.mrf.mxu0
      %v2366 = vadd.f32 0.0, %v2365
      %v2367 = vpop.f32.mrf.mxu0
      %v2368 = vadd.f32 0.0, %v2367
      %2369 = vmatmul.bf16.gmra.mxu0 %v1845
      %v2370 = vpop.f32.mrf.mxu0
      %v2371 = vadd.f32 0.0, %v2370
      %v2372 = vpop.f32.mrf.mxu0
      %v2373 = vadd.f32 0.0, %v2372
      %2374 = vmatmul.bf16.gmra.mxu0 %v1848
      %v2375 = vpop.f32.mrf.mxu0
      %v2376 = vadd.f32 0.0, %v2375
      %v2377 = vpop.f32.mrf.mxu0
      %v2378 = vadd.f32 0.0, %v2377
      %2379 = vmatmul.bf16.gmra.mxu0 %v1851
      %v2380 = vpop.f32.mrf.mxu0
      %v2381 = vadd.f32 0.0, %v2380
      %v2382 = vpop.f32.mrf.mxu0
      %v2383 = vadd.f32 0.0, %v2382
      %2384 = vmatmul.bf16.gmra.mxu0 %v1854
      %v2385 = vpop.f32.mrf.mxu0
      %v2386 = vadd.f32 0.0, %v2385
      %v2387 = vpop.f32.mrf.mxu0
      %v2388 = vadd.f32 0.0, %v2387
      %2389 = vmatmul.bf16.gmra.mxu0 %v1857
      %v2390 = vpop.f32.mrf.mxu0
      %v2391 = vadd.f32 0.0, %v2390
      %v2392 = vpop.f32.mrf.mxu0
      %v2393 = vadd.f32 0.0, %v2392
      %2394 = vmatmul.bf16.gmra.mxu0 %v1860
      %v2395 = vpop.f32.mrf.mxu0
      %v2396 = vadd.f32 0.0, %v2395
      %v2397 = vpop.f32.mrf.mxu0
      %v2398 = vadd.f32 0.0, %v2397
      %2399 = vmatmul.bf16.gmra.mxu0 %v1863
      %v2400 = vpop.f32.mrf.mxu0
      %v2401 = vadd.f32 0.0, %v2400
      %v2402 = vpop.f32.mrf.mxu0
      %v2403 = vadd.f32 0.0, %v2402
      %2404 = vmatmul.bf16.gmra.mxu0 %v1866
      %v2405 = vpop.f32.mrf.mxu0
      %v2406 = vadd.f32 0.0, %v2405
      %v2407 = vpop.f32.mrf.mxu0
      %v2408 = vadd.f32 0.0, %v2407
      %2409 = vmatmul.bf16.gmra.mxu0 %v2321
      %v2410 = vpop.f32.mrf.mxu0
      %v2411 = vadd.f32 0.0, %v2410
      %v2412 = vpop.f32.mrf.mxu0
      %v2413 = vadd.f32 0.0, %v2412
      %2414 = vdwg.mxu0
      %v2415 = vadd.f32 %v2281, %v2336
      %v2416 = vadd.f32 %v2282, %v2338
      %v2417 = vadd.f32 %v2283, %v2341
      %v2418 = vadd.f32 %v2284, %v2343
      %v2419 = vadd.f32 %v2285, %v2346
      %v2420 = vadd.f32 %v2286, %v2348
      %v2421 = vadd.f32 %v2287, %v2351
      %v2422 = vadd.f32 %v2288, %v2353
      %v2423 = vadd.f32 %v2289, %v2356
      %v2424 = vadd.f32 %v2290, %v2358
      %v2425 = vadd.f32 %v2291, %v2361
      %v2426 = vadd.f32 %v2292, %v2363
      %v2427 = vadd.f32 %v2293, %v2366
      %v2428 = vadd.f32 %v2294, %v2368
      %v2429 = vadd.f32 %v2295, %v2371
      %v2430 = vadd.f32 %v2296, %v2373
      %v2431 = vadd.f32 %v2297, %v2376
      %v2432 = vadd.f32 %v2298, %v2378
      %v2433 = vadd.f32 %v2299, %v2381
      %v2434 = vadd.f32 %v2300, %v2383
      %v2435 = vadd.f32 %v2301, %v2386
      %v2436 = vadd.f32 %v2302, %v2388
      %v2437 = vadd.f32 %v2303, %v2391
      %v2438 = vadd.f32 %v2304, %v2393
      %v2439 = vadd.f32 %v2305, %v2396
      %v2440 = vadd.f32 %v2306, %v2398
      %v2441 = vadd.f32 %v2307, %v2401
      %v2442 = vadd.f32 %v2308, %v2403
      %v2443 = vadd.f32 %v2309, %v2406
      %v2444 = vadd.f32 %v2310, %v2408
      %v2445 = vadd.f32 %v2311, %v2411
      %v2446 = vadd.f32 %v2312, %v2413
      %v2448 = vshrl.u32 %v1156, 16
      %v2450 = vrot.slane %v2448, 4
      %v2451 = vshll.u32 %v1156, 16
      %v2453 = vrot.slane %v2451, 5
      %v2454 = vor.u32 %v2450, %v2453
      %v2455 = vrot.slane %v2454, 4
      %v2457 = vshll.u32 %v1157, 16
      %v2459 = vrot.slane %v2457, 5
      %v2460 = vsel %vm1165, %v2455, %v2459
      %v2461 = vshrl.u32 %v1157, 16
      %v2463 = vrot.slane %v2461, 4
      %v2464 = vor.u32 %v2463, %v2459
      %v2465 = vrot.slane %v2464, 4
      %v2467 = vshll.u32 %v1158, 16
      %v2469 = vrot.slane %v2467, 5
      %v2470 = vsel %vm1165, %v2465, %v2469
      %s2471 = scalar_lea.vmem %s3, 8
      %v2472 = vld [vmem:[%s2471] sm:$0x3]
      %v2473 = vunpack.c.l.b16 %v2460
      %v2474 = vunpack.c.l.b16 %v2470
      %v2475 = vpack.c.b16 %v2474, %v2473
      %v2477 = vsel %vm343, %v2475, 0
      %v2480 = vsel %vm392, %v2472, 0
      %2482 = vmatpush.bf16.msra.mxu0 0
      %2483 = vmatpush.bf16.msra.mxu0 0
      %2484 = vmatpush.bf16.msra.mxu0 0
      %2485 = vmatpush.bf16.msra.mxu0 0
      %2486 = vmatpush.bf16.msra.mxu0 0
      %2487 = vmatpush.bf16.msra.mxu0 0
      %2488 = vmatpush.bf16.msra.mxu0 0
      %2489 = vmatpush.bf16.msra.mxu0 %v2480
      %2490 = vmatmul.bf16.gmra.mxu0 %v1604
      %v2491 = vpop.f32.mrf.mxu0
      %v2492 = vadd.f32 0.0, %v2491
      %v2493 = vpop.f32.mrf.mxu0
      %v2494 = vadd.f32 0.0, %v2493
      %2495 = vmatmul.bf16.gmra.mxu0 %v1607
      %v2496 = vpop.f32.mrf.mxu0
      %v2497 = vadd.f32 0.0, %v2496
      %v2498 = vpop.f32.mrf.mxu0
      %v2499 = vadd.f32 0.0, %v2498
      %2500 = vmatmul.bf16.gmra.mxu0 %v1610
      %v2501 = vpop.f32.mrf.mxu0
      %v2502 = vadd.f32 0.0, %v2501
      %v2503 = vpop.f32.mrf.mxu0
      %v2504 = vadd.f32 0.0, %v2503
      %2505 = vmatmul.bf16.gmra.mxu0 %v1613
      %v2506 = vpop.f32.mrf.mxu0
      %v2507 = vadd.f32 0.0, %v2506
      %v2508 = vpop.f32.mrf.mxu0
      %v2509 = vadd.f32 0.0, %v2508
      %2510 = vmatmul.bf16.gmra.mxu0 %v1616
      %v2511 = vpop.f32.mrf.mxu0
      %v2512 = vadd.f32 0.0, %v2511
      %v2513 = vpop.f32.mrf.mxu0
      %v2514 = vadd.f32 0.0, %v2513
      %2515 = vmatmul.bf16.gmra.mxu0 %v1619
      %v2516 = vpop.f32.mrf.mxu0
      %v2517 = vadd.f32 0.0, %v2516
      %v2518 = vpop.f32.mrf.mxu0
      %v2519 = vadd.f32 0.0, %v2518
      %2520 = vmatmul.bf16.gmra.mxu0 %v1622
      %v2521 = vpop.f32.mrf.mxu0
      %v2522 = vadd.f32 0.0, %v2521
      %v2523 = vpop.f32.mrf.mxu0
      %v2524 = vadd.f32 0.0, %v2523
      %2525 = vmatmul.bf16.gmra.mxu0 %v1625
      %v2526 = vpop.f32.mrf.mxu0
      %v2527 = vadd.f32 0.0, %v2526
      %v2528 = vpop.f32.mrf.mxu0
      %v2529 = vadd.f32 0.0, %v2528
      %2530 = vmatmul.bf16.gmra.mxu0 %v1628
      %v2531 = vpop.f32.mrf.mxu0
      %v2532 = vadd.f32 0.0, %v2531
      %v2533 = vpop.f32.mrf.mxu0
      %v2534 = vadd.f32 0.0, %v2533
      %2535 = vmatmul.bf16.gmra.mxu0 %v1631
      %v2536 = vpop.f32.mrf.mxu0
      %v2537 = vadd.f32 0.0, %v2536
      %v2538 = vpop.f32.mrf.mxu0
      %v2539 = vadd.f32 0.0, %v2538
      %2540 = vmatmul.bf16.gmra.mxu0 %v1634
      %v2541 = vpop.f32.mrf.mxu0
      %v2542 = vadd.f32 0.0, %v2541
      %v2543 = vpop.f32.mrf.mxu0
      %v2544 = vadd.f32 0.0, %v2543
      %2545 = vmatmul.bf16.gmra.mxu0 %v1637
      %v2546 = vpop.f32.mrf.mxu0
      %v2547 = vadd.f32 0.0, %v2546
      %v2548 = vpop.f32.mrf.mxu0
      %v2549 = vadd.f32 0.0, %v2548
      %2550 = vmatmul.bf16.gmra.mxu0 %v1640
      %v2551 = vpop.f32.mrf.mxu0
      %v2552 = vadd.f32 0.0, %v2551
      %v2553 = vpop.f32.mrf.mxu0
      %v2554 = vadd.f32 0.0, %v2553
      %2555 = vmatmul.bf16.gmra.mxu0 %v1643
      %v2556 = vpop.f32.mrf.mxu0
      %v2557 = vadd.f32 0.0, %v2556
      %v2558 = vpop.f32.mrf.mxu0
      %v2559 = vadd.f32 0.0, %v2558
      %2560 = vmatmul.bf16.gmra.mxu0 %v1646
      %v2561 = vpop.f32.mrf.mxu0
      %v2562 = vadd.f32 0.0, %v2561
      %v2563 = vpop.f32.mrf.mxu0
      %v2564 = vadd.f32 0.0, %v2563
      %2565 = vmatmul.bf16.gmra.mxu0 %v2477
      %v2566 = vpop.f32.mrf.mxu0
      %v2567 = vadd.f32 0.0, %v2566
      %v2568 = vpop.f32.mrf.mxu0
      %v2569 = vadd.f32 0.0, %v2568
      %2570 = vdwg.mxu0
      %v2571 = vadd.f32 %v2415, %v2492
      %v2572 = vadd.f32 %v2416, %v2494
      %v2573 = vadd.f32 %v2417, %v2497
      %v2574 = vadd.f32 %v2418, %v2499
      %v2575 = vadd.f32 %v2419, %v2502
      %v2576 = vadd.f32 %v2420, %v2504
      %v2577 = vadd.f32 %v2421, %v2507
      %v2578 = vadd.f32 %v2422, %v2509
      %v2579 = vadd.f32 %v2423, %v2512
      %v2580 = vadd.f32 %v2424, %v2514
      %v2581 = vadd.f32 %v2425, %v2517
      %v2582 = vadd.f32 %v2426, %v2519
      %v2583 = vadd.f32 %v2427, %v2522
      %v2584 = vadd.f32 %v2428, %v2524
      %v2585 = vadd.f32 %v2429, %v2527
      %v2586 = vadd.f32 %v2430, %v2529
      %v2587 = vadd.f32 %v2431, %v2532
      %v2588 = vadd.f32 %v2432, %v2534
      %v2589 = vadd.f32 %v2433, %v2537
      %v2590 = vadd.f32 %v2434, %v2539
      %v2591 = vadd.f32 %v2435, %v2542
      %v2592 = vadd.f32 %v2436, %v2544
      %v2593 = vadd.f32 %v2437, %v2547
      %v2594 = vadd.f32 %v2438, %v2549
      %v2595 = vadd.f32 %v2439, %v2552
      %v2596 = vadd.f32 %v2440, %v2554
      %v2597 = vadd.f32 %v2441, %v2557
      %v2598 = vadd.f32 %v2442, %v2559
      %v2599 = vadd.f32 %v2443, %v2562
      %v2600 = vadd.f32 %v2444, %v2564
      %v2601 = vadd.f32 %v2445, %v2567
      %v2602 = vadd.f32 %v2446, %v2569
      %v2604 = vrot.slane %v1156, 5
      %v2605 = vrot.slane %v2604, 4
      %v2606 = vrot.slane %v1157, 5
      %v2607 = vsel %vm1978, %v2605, %v2606
      %v2608 = vrot.slane %v2606, 4
      %v2609 = vrot.slane %v1158, 5
      %v2610 = vsel %vm1978, %v2608, %v2609
      %s2611 = scalar_lea.vmem %s3, 10
      %v2612 = vld [vmem:[%s2611] sm:$0x3]
      %v2613 = vunpack.c.l.b16 %v2607
      %v2614 = vunpack.c.l.b16 %v2610
      %v2615 = vpack.c.b16 %v2614, %v2613
      %v2617 = vsel %vm343, %v2615, 0
      %v2620 = vsel %vm392, %v2612, 0
      %2622 = vmatpush.bf16.msra.mxu0 0
      %2623 = vmatpush.bf16.msra.mxu0 0
      %2624 = vmatpush.bf16.msra.mxu0 0
      %2625 = vmatpush.bf16.msra.mxu0 0
      %2626 = vmatpush.bf16.msra.mxu0 0
      %2627 = vmatpush.bf16.msra.mxu0 0
      %2628 = vmatpush.bf16.msra.mxu0 0
      %2629 = vmatpush.bf16.msra.mxu0 %v2620
      %2630 = vmatmul.bf16.gmra.mxu0 %v2145
      %v2631 = vpop.f32.mrf.mxu0
      %v2632 = vadd.f32 0.0, %v2631
      %v2633 = vpop.f32.mrf.mxu0
      %v2634 = vadd.f32 0.0, %v2633
      %2635 = vmatmul.bf16.gmra.mxu0 %v2148
      %v2636 = vpop.f32.mrf.mxu0
      %v2637 = vadd.f32 0.0, %v2636
      %v2638 = vpop.f32.mrf.mxu0
      %v2639 = vadd.f32 0.0, %v2638
      %2640 = vmatmul.bf16.gmra.mxu0 %v2151
      %v2641 = vpop.f32.mrf.mxu0
      %v2642 = vadd.f32 0.0, %v2641
      %v2643 = vpop.f32.mrf.mxu0
      %v2644 = vadd.f32 0.0, %v2643
      %2645 = vmatmul.bf16.gmra.mxu0 %v2154
      %v2646 = vpop.f32.mrf.mxu0
      %v2647 = vadd.f32 0.0, %v2646
      %v2648 = vpop.f32.mrf.mxu0
      %v2649 = vadd.f32 0.0, %v2648
      %2650 = vmatmul.bf16.gmra.mxu0 %v2157
      %v2651 = vpop.f32.mrf.mxu0
      %v2652 = vadd.f32 0.0, %v2651
      %v2653 = vpop.f32.mrf.mxu0
      %v2654 = vadd.f32 0.0, %v2653
      %2655 = vmatmul.bf16.gmra.mxu0 %v2160
      %v2656 = vpop.f32.mrf.mxu0
      %v2657 = vadd.f32 0.0, %v2656
      %v2658 = vpop.f32.mrf.mxu0
      %v2659 = vadd.f32 0.0, %v2658
      %2660 = vmatmul.bf16.gmra.mxu0 %v2163
      %v2661 = vpop.f32.mrf.mxu0
      %v2662 = vadd.f32 0.0, %v2661
      %v2663 = vpop.f32.mrf.mxu0
      %v2664 = vadd.f32 0.0, %v2663
      %2665 = vmatmul.bf16.gmra.mxu0 %v2166
      %v2666 = vpop.f32.mrf.mxu0
      %v2667 = vadd.f32 0.0, %v2666
      %v2668 = vpop.f32.mrf.mxu0
      %v2669 = vadd.f32 0.0, %v2668
      %2670 = vmatmul.bf16.gmra.mxu0 %v2169
      %v2671 = vpop.f32.mrf.mxu0
      %v2672 = vadd.f32 0.0, %v2671
      %v2673 = vpop.f32.mrf.mxu0
      %v2674 = vadd.f32 0.0, %v2673
      %2675 = vmatmul.bf16.gmra.mxu0 %v2172
      %v2676 = vpop.f32.mrf.mxu0
      %v2677 = vadd.f32 0.0, %v2676
      %v2678 = vpop.f32.mrf.mxu0
      %v2679 = vadd.f32 0.0, %v2678
      %2680 = vmatmul.bf16.gmra.mxu0 %v2175
      %v2681 = vpop.f32.mrf.mxu0
      %v2682 = vadd.f32 0.0, %v2681
      %v2683 = vpop.f32.mrf.mxu0
      %v2684 = vadd.f32 0.0, %v2683
      %2685 = vmatmul.bf16.gmra.mxu0 %v2178
      %v2686 = vpop.f32.mrf.mxu0
      %v2687 = vadd.f32 0.0, %v2686
      %v2688 = vpop.f32.mrf.mxu0
      %v2689 = vadd.f32 0.0, %v2688
      %2690 = vmatmul.bf16.gmra.mxu0 %v2181
      %v2691 = vpop.f32.mrf.mxu0
      %v2692 = vadd.f32 0.0, %v2691
      %v2693 = vpop.f32.mrf.mxu0
      %v2694 = vadd.f32 0.0, %v2693
      %2695 = vmatmul.bf16.gmra.mxu0 %v2184
      %v2696 = vpop.f32.mrf.mxu0
      %v2697 = vadd.f32 0.0, %v2696
      %v2698 = vpop.f32.mrf.mxu0
      %v2699 = vadd.f32 0.0, %v2698
      %2700 = vmatmul.bf16.gmra.mxu0 %v2187
      %v2701 = vpop.f32.mrf.mxu0
      %v2702 = vadd.f32 0.0, %v2701
      %v2703 = vpop.f32.mrf.mxu0
      %v2704 = vadd.f32 0.0, %v2703
      %2705 = vmatmul.bf16.gmra.mxu0 %v2617
      %v2706 = vpop.f32.mrf.mxu0
      %v2707 = vadd.f32 0.0, %v2706
      %v2708 = vpop.f32.mrf.mxu0
      %v2709 = vadd.f32 0.0, %v2708
      %2710 = vdwg.mxu0
      %v2711 = vadd.f32 %v2571, %v2632
      %v2712 = vadd.f32 %v2572, %v2634
      %v2713 = vadd.f32 %v2573, %v2637
      %v2714 = vadd.f32 %v2574, %v2639
      %v2715 = vadd.f32 %v2575, %v2642
      %v2716 = vadd.f32 %v2576, %v2644
      %v2717 = vadd.f32 %v2577, %v2647
      %v2718 = vadd.f32 %v2578, %v2649
      %v2719 = vadd.f32 %v2579, %v2652
      %v2720 = vadd.f32 %v2580, %v2654
      %v2721 = vadd.f32 %v2581, %v2657
      %v2722 = vadd.f32 %v2582, %v2659
      %v2723 = vadd.f32 %v2583, %v2662
      %v2724 = vadd.f32 %v2584, %v2664
      %v2725 = vadd.f32 %v2585, %v2667
      %v2726 = vadd.f32 %v2586, %v2669
      %v2727 = vadd.f32 %v2587, %v2672
      %v2728 = vadd.f32 %v2588, %v2674
      %v2729 = vadd.f32 %v2589, %v2677
      %v2730 = vadd.f32 %v2590, %v2679
      %v2731 = vadd.f32 %v2591, %v2682
      %v2732 = vadd.f32 %v2592, %v2684
      %v2733 = vadd.f32 %v2593, %v2687
      %v2734 = vadd.f32 %v2594, %v2689
      %v2735 = vadd.f32 %v2595, %v2692
      %v2736 = vadd.f32 %v2596, %v2694
      %v2737 = vadd.f32 %v2597, %v2697
      %v2738 = vadd.f32 %v2598, %v2699
      %v2739 = vadd.f32 %v2599, %v2702
      %v2740 = vadd.f32 %v2600, %v2704
      %v2741 = vadd.f32 %v2601, %v2707
      %v2742 = vadd.f32 %v2602, %v2709
      %s2743 = scalar_lea.vmem %s3, 12
      %v2744 = vld [vmem:[%s2743] sm:$0x3]
      %v2747 = vunpack.c.l.b16 %v1159
      %v2748 = vunpack.c.l.b16 %v1160
      %v2749 = vpack.c.b16 %v2748, %v2747
      %v2751 = vsel %vm343, %v2749, 0
      %v2754 = vsel %vm392, %v2744, 0
      %2756 = vmatpush.bf16.msra.mxu0 0
      %2757 = vmatpush.bf16.msra.mxu0 0
      %2758 = vmatpush.bf16.msra.mxu0 0
      %2759 = vmatpush.bf16.msra.mxu0 0
      %2760 = vmatpush.bf16.msra.mxu0 0
      %2761 = vmatpush.bf16.msra.mxu0 0
      %2762 = vmatpush.bf16.msra.mxu0 0
      %2763 = vmatpush.bf16.msra.mxu0 %v2754
      %2764 = vmatmul.bf16.gmra.mxu0 %v1827
      %v2765 = vpop.f32.mrf.mxu0
      %v2766 = vadd.f32 0.0, %v2765
      %v2767 = vpop.f32.mrf.mxu0
      %v2768 = vadd.f32 0.0, %v2767
      %2769 = vmatmul.bf16.gmra.mxu0 %v1830
      %v2770 = vpop.f32.mrf.mxu0
      %v2771 = vadd.f32 0.0, %v2770
      %v2772 = vpop.f32.mrf.mxu0
      %v2773 = vadd.f32 0.0, %v2772
      %2774 = vmatmul.bf16.gmra.mxu0 %v1833
      %v2775 = vpop.f32.mrf.mxu0
      %v2776 = vadd.f32 0.0, %v2775
      %v2777 = vpop.f32.mrf.mxu0
      %v2778 = vadd.f32 0.0, %v2777
      %2779 = vmatmul.bf16.gmra.mxu0 %v1836
      %v2780 = vpop.f32.mrf.mxu0
      %v2781 = vadd.f32 0.0, %v2780
      %v2782 = vpop.f32.mrf.mxu0
      %v2783 = vadd.f32 0.0, %v2782
      %2784 = vmatmul.bf16.gmra.mxu0 %v1839
      %v2785 = vpop.f32.mrf.mxu0
      %v2786 = vadd.f32 0.0, %v2785
      %v2787 = vpop.f32.mrf.mxu0
      %v2788 = vadd.f32 0.0, %v2787
      %2789 = vmatmul.bf16.gmra.mxu0 %v1842
      %v2790 = vpop.f32.mrf.mxu0
      %v2791 = vadd.f32 0.0, %v2790
      %v2792 = vpop.f32.mrf.mxu0
      %v2793 = vadd.f32 0.0, %v2792
      %2794 = vmatmul.bf16.gmra.mxu0 %v1845
      %v2795 = vpop.f32.mrf.mxu0
      %v2796 = vadd.f32 0.0, %v2795
      %v2797 = vpop.f32.mrf.mxu0
      %v2798 = vadd.f32 0.0, %v2797
      %2799 = vmatmul.bf16.gmra.mxu0 %v1848
      %v2800 = vpop.f32.mrf.mxu0
      %v2801 = vadd.f32 0.0, %v2800
      %v2802 = vpop.f32.mrf.mxu0
      %v2803 = vadd.f32 0.0, %v2802
      %2804 = vmatmul.bf16.gmra.mxu0 %v1851
      %v2805 = vpop.f32.mrf.mxu0
      %v2806 = vadd.f32 0.0, %v2805
      %v2807 = vpop.f32.mrf.mxu0
      %v2808 = vadd.f32 0.0, %v2807
      %2809 = vmatmul.bf16.gmra.mxu0 %v1854
      %v2810 = vpop.f32.mrf.mxu0
      %v2811 = vadd.f32 0.0, %v2810
      %v2812 = vpop.f32.mrf.mxu0
      %v2813 = vadd.f32 0.0, %v2812
      %2814 = vmatmul.bf16.gmra.mxu0 %v1857
      %v2815 = vpop.f32.mrf.mxu0
      %v2816 = vadd.f32 0.0, %v2815
      %v2817 = vpop.f32.mrf.mxu0
      %v2818 = vadd.f32 0.0, %v2817
      %2819 = vmatmul.bf16.gmra.mxu0 %v1860
      %v2820 = vpop.f32.mrf.mxu0
      %v2821 = vadd.f32 0.0, %v2820
      %v2822 = vpop.f32.mrf.mxu0
      %v2823 = vadd.f32 0.0, %v2822
      %2824 = vmatmul.bf16.gmra.mxu0 %v1863
      %v2825 = vpop.f32.mrf.mxu0
      %v2826 = vadd.f32 0.0, %v2825
      %v2827 = vpop.f32.mrf.mxu0
      %v2828 = vadd.f32 0.0, %v2827
      %2829 = vmatmul.bf16.gmra.mxu0 %v1866
      %v2830 = vpop.f32.mrf.mxu0
      %v2831 = vadd.f32 0.0, %v2830
      %v2832 = vpop.f32.mrf.mxu0
      %v2833 = vadd.f32 0.0, %v2832
      %2834 = vmatmul.bf16.gmra.mxu0 %v2321
      %v2835 = vpop.f32.mrf.mxu0
      %v2836 = vadd.f32 0.0, %v2835
      %v2837 = vpop.f32.mrf.mxu0
      %v2838 = vadd.f32 0.0, %v2837
      %2839 = vmatmul.bf16.gmra.mxu0 %v2751
      %v2840 = vpop.f32.mrf.mxu0
      %v2841 = vadd.f32 0.0, %v2840
      %v2842 = vpop.f32.mrf.mxu0
      %v2843 = vadd.f32 0.0, %v2842
      %2844 = vdwg.mxu0
      %v2845 = vadd.f32 %v2711, %v2766
      %v2846 = vadd.f32 %v2712, %v2768
      %v2847 = vadd.f32 %v2713, %v2771
      %v2848 = vadd.f32 %v2714, %v2773
      %v2849 = vadd.f32 %v2715, %v2776
      %v2850 = vadd.f32 %v2716, %v2778
      %v2851 = vadd.f32 %v2717, %v2781
      %v2852 = vadd.f32 %v2718, %v2783
      %v2853 = vadd.f32 %v2719, %v2786
      %v2854 = vadd.f32 %v2720, %v2788
      %v2855 = vadd.f32 %v2721, %v2791
      %v2856 = vadd.f32 %v2722, %v2793
      %v2857 = vadd.f32 %v2723, %v2796
      %v2858 = vadd.f32 %v2724, %v2798
      %v2859 = vadd.f32 %v2725, %v2801
      %v2860 = vadd.f32 %v2726, %v2803
      %v2861 = vadd.f32 %v2727, %v2806
      %v2862 = vadd.f32 %v2728, %v2808
      %v2863 = vadd.f32 %v2729, %v2811
      %v2864 = vadd.f32 %v2730, %v2813
      %v2865 = vadd.f32 %v2731, %v2816
      %v2866 = vadd.f32 %v2732, %v2818
      %v2867 = vadd.f32 %v2733, %v2821
      %v2868 = vadd.f32 %v2734, %v2823
      %v2869 = vadd.f32 %v2735, %v2826
      %v2870 = vadd.f32 %v2736, %v2828
      %v2871 = vadd.f32 %v2737, %v2831
      %v2872 = vadd.f32 %v2738, %v2833
      %v2873 = vadd.f32 %v2739, %v2836
      %v2874 = vadd.f32 %v2740, %v2838
      %v2875 = vadd.f32 %v2741, %v2841
      %v2876 = vadd.f32 %v2742, %v2843
      %v2878 = vshrl.u32 %v1159, 16
      %v2880 = vrot.slane %v2878, 4
      %v2881 = vshll.u32 %v1159, 16
      %v2883 = vrot.slane %v2881, 5
      %v2884 = vor.u32 %v2880, %v2883
      %v2885 = vrot.slane %v2884, 4
      %v2887 = vshll.u32 %v1160, 16
      %v2889 = vrot.slane %v2887, 5
      %v2890 = vsel %vm1165, %v2885, %v2889
      %v2891 = vshrl.u32 %v1160, 16
      %v2893 = vrot.slane %v2891, 4
      %v2894 = vor.u32 %v2893, %v2889
      %v2895 = vrot.slane %v2894, 4
      %v2897 = vshll.u32 %v1161, 16
      %v2899 = vrot.slane %v2897, 5
      %v2900 = vsel %vm1165, %v2895, %v2899
      %s2901 = scalar_lea.vmem %s3, 14
      %v2902 = vld [vmem:[%s2901] sm:$0x3]
      %v2903 = vunpack.c.l.b16 %v2890
      %v2904 = vunpack.c.l.b16 %v2900
      %v2905 = vpack.c.b16 %v2904, %v2903
      %v2907 = vsel %vm343, %v2905, 0
      %v2910 = vsel %vm392, %v2902, 0
      %2912 = vmatpush.bf16.msra.mxu0 0
      %2913 = vmatpush.bf16.msra.mxu0 0
      %2914 = vmatpush.bf16.msra.mxu0 0
      %2915 = vmatpush.bf16.msra.mxu0 0
      %2916 = vmatpush.bf16.msra.mxu0 0
      %2917 = vmatpush.bf16.msra.mxu0 0
      %2918 = vmatpush.bf16.msra.mxu0 0
      %2919 = vmatpush.bf16.msra.mxu0 %v2910
      %2920 = vmatmul.bf16.gmra.mxu0 %v1607
      %v2921 = vpop.f32.mrf.mxu0
      %v2922 = vadd.f32 0.0, %v2921
      %v2923 = vpop.f32.mrf.mxu0
      %v2924 = vadd.f32 0.0, %v2923
      %2925 = vmatmul.bf16.gmra.mxu0 %v1610
      %v2926 = vpop.f32.mrf.mxu0
      %v2927 = vadd.f32 0.0, %v2926
      %v2928 = vpop.f32.mrf.mxu0
      %v2929 = vadd.f32 0.0, %v2928
      %2930 = vmatmul.bf16.gmra.mxu0 %v1613
      %v2931 = vpop.f32.mrf.mxu0
      %v2932 = vadd.f32 0.0, %v2931
      %v2933 = vpop.f32.mrf.mxu0
      %v2934 = vadd.f32 0.0, %v2933
      %2935 = vmatmul.bf16.gmra.mxu0 %v1616
      %v2936 = vpop.f32.mrf.mxu0
      %v2937 = vadd.f32 0.0, %v2936
      %v2938 = vpop.f32.mrf.mxu0
      %v2939 = vadd.f32 0.0, %v2938
      %2940 = vmatmul.bf16.gmra.mxu0 %v1619
      %v2941 = vpop.f32.mrf.mxu0
      %v2942 = vadd.f32 0.0, %v2941
      %v2943 = vpop.f32.mrf.mxu0
      %v2944 = vadd.f32 0.0, %v2943
      %2945 = vmatmul.bf16.gmra.mxu0 %v1622
      %v2946 = vpop.f32.mrf.mxu0
      %v2947 = vadd.f32 0.0, %v2946
      %v2948 = vpop.f32.mrf.mxu0
      %v2949 = vadd.f32 0.0, %v2948
      %2950 = vmatmul.bf16.gmra.mxu0 %v1625
      %v2951 = vpop.f32.mrf.mxu0
      %v2952 = vadd.f32 0.0, %v2951
      %v2953 = vpop.f32.mrf.mxu0
      %v2954 = vadd.f32 0.0, %v2953
      %2955 = vmatmul.bf16.gmra.mxu0 %v1628
      %v2956 = vpop.f32.mrf.mxu0
      %v2957 = vadd.f32 0.0, %v2956
      %v2958 = vpop.f32.mrf.mxu0
      %v2959 = vadd.f32 0.0, %v2958
      %2960 = vmatmul.bf16.gmra.mxu0 %v1631
      %v2961 = vpop.f32.mrf.mxu0
      %v2962 = vadd.f32 0.0, %v2961
      %v2963 = vpop.f32.mrf.mxu0
      %v2964 = vadd.f32 0.0, %v2963
      %2965 = vmatmul.bf16.gmra.mxu0 %v1634
      %v2966 = vpop.f32.mrf.mxu0
      %v2967 = vadd.f32 0.0, %v2966
      %v2968 = vpop.f32.mrf.mxu0
      %v2969 = vadd.f32 0.0, %v2968
      %2970 = vmatmul.bf16.gmra.mxu0 %v1637
      %v2971 = vpop.f32.mrf.mxu0
      %v2972 = vadd.f32 0.0, %v2971
      %v2973 = vpop.f32.mrf.mxu0
      %v2974 = vadd.f32 0.0, %v2973
      %2975 = vmatmul.bf16.gmra.mxu0 %v1640
      %v2976 = vpop.f32.mrf.mxu0
      %v2977 = vadd.f32 0.0, %v2976
      %v2978 = vpop.f32.mrf.mxu0
      %v2979 = vadd.f32 0.0, %v2978
      %2980 = vmatmul.bf16.gmra.mxu0 %v1643
      %v2981 = vpop.f32.mrf.mxu0
      %v2982 = vadd.f32 0.0, %v2981
      %v2983 = vpop.f32.mrf.mxu0
      %v2984 = vadd.f32 0.0, %v2983
      %2985 = vmatmul.bf16.gmra.mxu0 %v1646
      %v2986 = vpop.f32.mrf.mxu0
      %v2987 = vadd.f32 0.0, %v2986
      %v2988 = vpop.f32.mrf.mxu0
      %v2989 = vadd.f32 0.0, %v2988
      %2990 = vmatmul.bf16.gmra.mxu0 %v2477
      %v2991 = vpop.f32.mrf.mxu0
      %v2992 = vadd.f32 0.0, %v2991
      %v2993 = vpop.f32.mrf.mxu0
      %v2994 = vadd.f32 0.0, %v2993
      %2995 = vmatmul.bf16.gmra.mxu0 %v2907
      %v2996 = vpop.f32.mrf.mxu0
      %v2997 = vadd.f32 0.0, %v2996
      %v2998 = vpop.f32.mrf.mxu0
      %v2999 = vadd.f32 0.0, %v2998
      %3000 = vdwg.mxu0
      %v3001 = vadd.f32 %v2845, %v2922
      %v3002 = vadd.f32 %v2846, %v2924
      %v3003 = vadd.f32 %v2847, %v2927
      %v3004 = vadd.f32 %v2848, %v2929
      %v3005 = vadd.f32 %v2849, %v2932
      %v3006 = vadd.f32 %v2850, %v2934
      %v3007 = vadd.f32 %v2851, %v2937
      %v3008 = vadd.f32 %v2852, %v2939
      %v3009 = vadd.f32 %v2853, %v2942
      %v3010 = vadd.f32 %v2854, %v2944
      %v3011 = vadd.f32 %v2855, %v2947
      %v3012 = vadd.f32 %v2856, %v2949
      %v3013 = vadd.f32 %v2857, %v2952
      %v3014 = vadd.f32 %v2858, %v2954
      %v3015 = vadd.f32 %v2859, %v2957
      %v3016 = vadd.f32 %v2860, %v2959
      %v3017 = vadd.f32 %v2861, %v2962
      %v3018 = vadd.f32 %v2862, %v2964
      %v3019 = vadd.f32 %v2863, %v2967
      %v3020 = vadd.f32 %v2864, %v2969
      %v3021 = vadd.f32 %v2865, %v2972
      %v3022 = vadd.f32 %v2866, %v2974
      %v3023 = vadd.f32 %v2867, %v2977
      %v3024 = vadd.f32 %v2868, %v2979
      %v3025 = vadd.f32 %v2869, %v2982
      %v3026 = vadd.f32 %v2870, %v2984
      %v3027 = vadd.f32 %v2871, %v2987
      %v3028 = vadd.f32 %v2872, %v2989
      %v3029 = vadd.f32 %v2873, %v2992
      %v3030 = vadd.f32 %v2874, %v2994
      %v3031 = vadd.f32 %v2875, %v2997
      %v3032 = vadd.f32 %v2876, %v2999
      %v3034 = vrot.slane %v1159, 5
      %v3035 = vrot.slane %v3034, 4
      %v3036 = vrot.slane %v1160, 5
      %v3037 = vsel %vm1978, %v3035, %v3036
      %v3038 = vrot.slane %v3036, 4
      %v3039 = vrot.slane %v1161, 5
      %v3040 = vsel %vm1978, %v3038, %v3039
      %s3041 = scalar_lea.vmem %s3, 16
      %v3042 = vld [vmem:[%s3041] sm:$0x3]
      %v3043 = vunpack.c.l.b16 %v3037
      %v3044 = vunpack.c.l.b16 %v3040
      %v3045 = vpack.c.b16 %v3044, %v3043
      %v3047 = vsel %vm343, %v3045, 0
      %v3050 = vsel %vm392, %v3042, 0
      %3052 = vmatpush.bf16.msra.mxu0 0
      %3053 = vmatpush.bf16.msra.mxu0 0
      %3054 = vmatpush.bf16.msra.mxu0 0
      %3055 = vmatpush.bf16.msra.mxu0 0
      %3056 = vmatpush.bf16.msra.mxu0 0
      %3057 = vmatpush.bf16.msra.mxu0 0
      %3058 = vmatpush.bf16.msra.mxu0 0
      %3059 = vmatpush.bf16.msra.mxu0 %v3050
      %3060 = vmatmul.bf16.gmra.mxu0 %v2148
      %v3061 = vpop.f32.mrf.mxu0
      %v3062 = vadd.f32 0.0, %v3061
      %v3063 = vpop.f32.mrf.mxu0
      %v3064 = vadd.f32 0.0, %v3063
      %3065 = vmatmul.bf16.gmra.mxu0 %v2151
      %v3066 = vpop.f32.mrf.mxu0
      %v3067 = vadd.f32 0.0, %v3066
      %v3068 = vpop.f32.mrf.mxu0
      %v3069 = vadd.f32 0.0, %v3068
      %3070 = vmatmul.bf16.gmra.mxu0 %v2154
      %v3071 = vpop.f32.mrf.mxu0
      %v3072 = vadd.f32 0.0, %v3071
      %v3073 = vpop.f32.mrf.mxu0
      %v3074 = vadd.f32 0.0, %v3073
      %3075 = vmatmul.bf16.gmra.mxu0 %v2157
      %v3076 = vpop.f32.mrf.mxu0
      %v3077 = vadd.f32 0.0, %v3076
      %v3078 = vpop.f32.mrf.mxu0
      %v3079 = vadd.f32 0.0, %v3078
      %3080 = vmatmul.bf16.gmra.mxu0 %v2160
      %v3081 = vpop.f32.mrf.mxu0
      %v3082 = vadd.f32 0.0, %v3081
      %v3083 = vpop.f32.mrf.mxu0
      %v3084 = vadd.f32 0.0, %v3083
      %3085 = vmatmul.bf16.gmra.mxu0 %v2163
      %v3086 = vpop.f32.mrf.mxu0
      %v3087 = vadd.f32 0.0, %v3086
      %v3088 = vpop.f32.mrf.mxu0
      %v3089 = vadd.f32 0.0, %v3088
      %3090 = vmatmul.bf16.gmra.mxu0 %v2166
      %v3091 = vpop.f32.mrf.mxu0
      %v3092 = vadd.f32 0.0, %v3091
      %v3093 = vpop.f32.mrf.mxu0
      %v3094 = vadd.f32 0.0, %v3093
      %3095 = vmatmul.bf16.gmra.mxu0 %v2169
      %v3096 = vpop.f32.mrf.mxu0
      %v3097 = vadd.f32 0.0, %v3096
      %v3098 = vpop.f32.mrf.mxu0
      %v3099 = vadd.f32 0.0, %v3098
      %3100 = vmatmul.bf16.gmra.mxu0 %v2172
      %v3101 = vpop.f32.mrf.mxu0
      %v3102 = vadd.f32 0.0, %v3101
      %v3103 = vpop.f32.mrf.mxu0
      %v3104 = vadd.f32 0.0, %v3103
      %3105 = vmatmul.bf16.gmra.mxu0 %v2175
      %v3106 = vpop.f32.mrf.mxu0
      %v3107 = vadd.f32 0.0, %v3106
      %v3108 = vpop.f32.mrf.mxu0
      %v3109 = vadd.f32 0.0, %v3108
      %3110 = vmatmul.bf16.gmra.mxu0 %v2178
      %v3111 = vpop.f32.mrf.mxu0
      %v3112 = vadd.f32 0.0, %v3111
      %v3113 = vpop.f32.mrf.mxu0
      %v3114 = vadd.f32 0.0, %v3113
      %3115 = vmatmul.bf16.gmra.mxu0 %v2181
      %v3116 = vpop.f32.mrf.mxu0
      %v3117 = vadd.f32 0.0, %v3116
      %v3118 = vpop.f32.mrf.mxu0
      %v3119 = vadd.f32 0.0, %v3118
      %3120 = vmatmul.bf16.gmra.mxu0 %v2184
      %v3121 = vpop.f32.mrf.mxu0
      %v3122 = vadd.f32 0.0, %v3121
      %v3123 = vpop.f32.mrf.mxu0
      %v3124 = vadd.f32 0.0, %v3123
      %3125 = vmatmul.bf16.gmra.mxu0 %v2187
      %v3126 = vpop.f32.mrf.mxu0
      %v3127 = vadd.f32 0.0, %v3126
      %v3128 = vpop.f32.mrf.mxu0
      %v3129 = vadd.f32 0.0, %v3128
      %3130 = vmatmul.bf16.gmra.mxu0 %v2617
      %v3131 = vpop.f32.mrf.mxu0
      %v3132 = vadd.f32 0.0, %v3131
      %v3133 = vpop.f32.mrf.mxu0
      %v3134 = vadd.f32 0.0, %v3133
      %3135 = vmatmul.bf16.gmra.mxu0 %v3047
      %v3136 = vpop.f32.mrf.mxu0
      %v3137 = vadd.f32 0.0, %v3136
      %v3138 = vpop.f32.mrf.mxu0
      %v3139 = vadd.f32 0.0, %v3138
      %3140 = vdwg.mxu0
      %v3141 = vadd.f32 %v3001, %v3062
      %v3142 = vadd.f32 %v3002, %v3064
      %v3143 = vadd.f32 %v3003, %v3067
      %v3144 = vadd.f32 %v3004, %v3069
      %v3145 = vadd.f32 %v3005, %v3072
      %v3146 = vadd.f32 %v3006, %v3074
      %v3147 = vadd.f32 %v3007, %v3077
      %v3148 = vadd.f32 %v3008, %v3079
      %v3149 = vadd.f32 %v3009, %v3082
      %v3150 = vadd.f32 %v3010, %v3084
      %v3151 = vadd.f32 %v3011, %v3087
      %v3152 = vadd.f32 %v3012, %v3089
      %v3153 = vadd.f32 %v3013, %v3092
      %v3154 = vadd.f32 %v3014, %v3094
      %v3155 = vadd.f32 %v3015, %v3097
      %v3156 = vadd.f32 %v3016, %v3099
      %v3157 = vadd.f32 %v3017, %v3102
      %v3158 = vadd.f32 %v3018, %v3104
      %v3159 = vadd.f32 %v3019, %v3107
      %v3160 = vadd.f32 %v3020, %v3109
      %v3161 = vadd.f32 %v3021, %v3112
      %v3162 = vadd.f32 %v3022, %v3114
      %v3163 = vadd.f32 %v3023, %v3117
      %v3164 = vadd.f32 %v3024, %v3119
      %v3165 = vadd.f32 %v3025, %v3122
      %v3166 = vadd.f32 %v3026, %v3124
      %v3167 = vadd.f32 %v3027, %v3127
      %v3168 = vadd.f32 %v3028, %v3129
      %v3169 = vadd.f32 %v3029, %v3132
      %v3170 = vadd.f32 %v3030, %v3134
      %v3171 = vadd.f32 %v3031, %v3137
      %v3172 = vadd.f32 %v3032, %v3139
      %v3173 = vld [vmem:[%s4] sm:$0x1]
      %v3175 = vperm.slane %v3173, 0
      %v3177 = vadd.f32 %v3141, %v3175
      %v3178 = vadd.f32 %v3142, %v3175
      %v3179 = vadd.f32 %v3143, %v3175
      %v3180 = vadd.f32 %v3144, %v3175
      %v3181 = vadd.f32 %v3145, %v3175
      %v3182 = vadd.f32 %v3146, %v3175
      %v3183 = vadd.f32 %v3147, %v3175
      %v3184 = vadd.f32 %v3148, %v3175
      %v3185 = vadd.f32 %v3149, %v3175
      %v3186 = vadd.f32 %v3150, %v3175
      %v3187 = vadd.f32 %v3151, %v3175
      %v3188 = vadd.f32 %v3152, %v3175
      %v3189 = vadd.f32 %v3153, %v3175
      %v3190 = vadd.f32 %v3154, %v3175
      %v3191 = vadd.f32 %v3155, %v3175
      %v3192 = vadd.f32 %v3156, %v3175
      %v3193 = vadd.f32 %v3157, %v3175
      %v3194 = vadd.f32 %v3158, %v3175
      %v3195 = vadd.f32 %v3159, %v3175
      %v3196 = vadd.f32 %v3160, %v3175
      %v3197 = vadd.f32 %v3161, %v3175
      %v3198 = vadd.f32 %v3162, %v3175
      %v3199 = vadd.f32 %v3163, %v3175
      %v3200 = vadd.f32 %v3164, %v3175
      %v3201 = vadd.f32 %v3165, %v3175
      %v3202 = vadd.f32 %v3166, %v3175
      %v3203 = vadd.f32 %v3167, %v3175
      %v3204 = vadd.f32 %v3168, %v3175
      %v3205 = vadd.f32 %v3169, %v3175
      %v3206 = vadd.f32 %v3170, %v3175
      %v3207 = vadd.f32 %v3171, %v3175
      %v3208 = vadd.f32 %v3172, %v3175
      %v3209 = vmax.f32 %v3177, 0.0
      %v3210 = vmax.f32 %v3178, 0.0
      %v3211 = vmax.f32 %v3179, 0.0
      %v3212 = vmax.f32 %v3180, 0.0
      %v3213 = vmax.f32 %v3181, 0.0
      %v3214 = vmax.f32 %v3182, 0.0
      %v3215 = vmax.f32 %v3183, 0.0
      %v3216 = vmax.f32 %v3184, 0.0
      %v3217 = vmax.f32 %v3185, 0.0
      %v3218 = vmax.f32 %v3186, 0.0
      %v3219 = vmax.f32 %v3187, 0.0
      %v3220 = vmax.f32 %v3188, 0.0
      %v3221 = vmax.f32 %v3189, 0.0
      %v3222 = vmax.f32 %v3190, 0.0
      %v3223 = vmax.f32 %v3191, 0.0
      %v3224 = vmax.f32 %v3192, 0.0
      %v3225 = vmax.f32 %v3193, 0.0
      %v3226 = vmax.f32 %v3194, 0.0
      %v3227 = vmax.f32 %v3195, 0.0
      %v3228 = vmax.f32 %v3196, 0.0
      %v3229 = vmax.f32 %v3197, 0.0
      %v3230 = vmax.f32 %v3198, 0.0
      %v3231 = vmax.f32 %v3199, 0.0
      %v3232 = vmax.f32 %v3200, 0.0
      %v3233 = vmax.f32 %v3201, 0.0
      %v3234 = vmax.f32 %v3202, 0.0
      %v3235 = vmax.f32 %v3203, 0.0
      %v3236 = vmax.f32 %v3204, 0.0
      %v3237 = vmax.f32 %v3205, 0.0
      %v3238 = vmax.f32 %v3206, 0.0
      %v3239 = vmax.f32 %v3207, 0.0
      %v3240 = vmax.f32 %v3208, 0.0
      %v3241 = vpack.c.bf16 %v3209, %v3209
      %v3242 = vpack.c.bf16 %v3210, %v3210
      %v3243 = vpack.c.bf16 %v3211, %v3211
      %v3244 = vpack.c.bf16 %v3212, %v3212
      %v3245 = vpack.c.bf16 %v3213, %v3213
      %v3246 = vpack.c.bf16 %v3214, %v3214
      %v3247 = vpack.c.bf16 %v3215, %v3215
      %v3248 = vpack.c.bf16 %v3216, %v3216
      %v3249 = vpack.c.bf16 %v3217, %v3217
      %v3250 = vpack.c.bf16 %v3218, %v3218
      %v3251 = vpack.c.bf16 %v3219, %v3219
      %v3252 = vpack.c.bf16 %v3220, %v3220
      %v3253 = vpack.c.bf16 %v3221, %v3221
      %v3254 = vpack.c.bf16 %v3222, %v3222
      %v3255 = vpack.c.bf16 %v3223, %v3223
      %v3256 = vpack.c.bf16 %v3224, %v3224
      %v3257 = vpack.c.bf16 %v3225, %v3225
      %v3258 = vpack.c.bf16 %v3226, %v3226
      %v3259 = vpack.c.bf16 %v3227, %v3227
      %v3260 = vpack.c.bf16 %v3228, %v3228
      %v3261 = vpack.c.bf16 %v3229, %v3229
      %v3262 = vpack.c.bf16 %v3230, %v3230
      %v3263 = vpack.c.bf16 %v3231, %v3231
      %v3264 = vpack.c.bf16 %v3232, %v3232
      %v3265 = vpack.c.bf16 %v3233, %v3233
      %v3266 = vpack.c.bf16 %v3234, %v3234
      %v3267 = vpack.c.bf16 %v3235, %v3235
      %v3268 = vpack.c.bf16 %v3236, %v3236
      %v3269 = vpack.c.bf16 %v3237, %v3237
      %v3270 = vpack.c.bf16 %v3238, %v3238
      %v3271 = vpack.c.bf16 %v3239, %v3239
      %v3272 = vpack.c.bf16 %v3240, %v3240
      %3273 = vst.msk [vmem:[%s224] sm:$0xf] %vm549, %v3241
      %3274 = vst.msk [vmem:[%s224 + $0x4] sm:$0xf] %vm549, %v3242
      %3275 = vst.msk [vmem:[%s224 + $0x8] sm:$0xf] %vm549, %v3243
      %3276 = vst.msk [vmem:[%s224 + $0xc] sm:$0xf] %vm549, %v3244
      %3277 = vst.msk [vmem:[%s224 + $0x10] sm:$0xf] %vm549, %v3245
      %3278 = vst.msk [vmem:[%s224 + $0x14] sm:$0xf] %vm549, %v3246
      %3279 = vst.msk [vmem:[%s224 + $0x18] sm:$0xf] %vm549, %v3247
      %3280 = vst.msk [vmem:[%s224 + $0x1c] sm:$0xf] %vm549, %v3248
      %3281 = vst.msk [vmem:[%s224 + $0x20] sm:$0xf] %vm549, %v3249
      %3282 = vst.msk [vmem:[%s224 + $0x24] sm:$0xf] %vm549, %v3250
      %3283 = vst.msk [vmem:[%s224 + $0x28] sm:$0xf] %vm549, %v3251
      %3284 = vst.msk [vmem:[%s224 + $0x2c] sm:$0xf] %vm549, %v3252
      %3285 = vst.msk [vmem:[%s224 + $0x30] sm:$0xf] %vm549, %v3253
      %3286 = vst.msk [vmem:[%s224 + $0x34] sm:$0xf] %vm549, %v3254
      %3287 = vst.msk [vmem:[%s224 + $0x38] sm:$0xf] %vm549, %v3255
      %3288 = vst.msk [vmem:[%s224 + $0x3c] sm:$0xf] %vm549, %v3256
      %3289 = vst.msk [vmem:[%s224 + $0x40] sm:$0xf] %vm549, %v3257
      %3290 = vst.msk [vmem:[%s224 + $0x44] sm:$0xf] %vm549, %v3258
      %3291 = vst.msk [vmem:[%s224 + $0x48] sm:$0xf] %vm549, %v3259
      %3292 = vst.msk [vmem:[%s224 + $0x4c] sm:$0xf] %vm549, %v3260
      %3293 = vst.msk [vmem:[%s224 + $0x50] sm:$0xf] %vm549, %v3261
      %3294 = vst.msk [vmem:[%s224 + $0x54] sm:$0xf] %vm549, %v3262
      %3295 = vst.msk [vmem:[%s224 + $0x58] sm:$0xf] %vm549, %v3263
      %3296 = vst.msk [vmem:[%s224 + $0x5c] sm:$0xf] %vm549, %v3264
      %3297 = vst.msk [vmem:[%s224 + $0x60] sm:$0xf] %vm549, %v3265
      %3298 = vst.msk [vmem:[%s224 + $0x64] sm:$0xf] %vm549, %v3266
      %3299 = vst.msk [vmem:[%s224 + $0x68] sm:$0xf] %vm549, %v3267
      %3300 = vst.msk [vmem:[%s224 + $0x6c] sm:$0xf] %vm549, %v3268
      %3301 = vst.msk [vmem:[%s224 + $0x70] sm:$0xf] %vm549, %v3269
      %3302 = vst.msk [vmem:[%s224 + $0x74] sm:$0xf] %vm549, %v3270
      %3303 = vst.msk [vmem:[%s224 + $0x78] sm:$0xf] %vm549, %v3271
      %3304 = vst.msk [vmem:[%s224 + $0x7c] sm:$0xf] %vm549, %v3272
      %p3305 = scmp.lt.s32.totalorder %s16, 1
      %s3306 = scalar_select %p3305, %s16, 1
      %s3307 = smul.addr %s3306, 32
      %s3308 = smul.addr %s3307, 4
      %s3309 = scalar_lea.vmem %s5, %s3308
      // Predicated region
      $region41: #{tpu_custom_call.1} parent=39 // pred_check
        %p3310 = pneg %p144
      $region42: #{tpu_custom_call.1} parent=39 // pred_check_branch
        %3312 = sbr.rel (%p3310) target = $region44
      $region43: #{tpu_custom_call.1} parent=39 // pred_region
        _
      $region44: #{tpu_custom_call.1} parent=39 // pred_fallthru
        _
    $region40: #{tpu_custom_call.1} parent=5 // pred_fallthru
      _
    %p3313 = scmp.le.s32.totalorder 2, %s11
    // Predicated region
    $region45: #{tpu_custom_call.1} parent=5 // pred_check
      %p3314 = pneg %p3313
    $region46: #{tpu_custom_call.1} parent=5 // pred_check_branch
      %3316 = sbr.rel (%p3314) target = $region48
    $region47: #{tpu_custom_call.1} parent=5 // pred_region
      %s3317 = ssub.s32 %s11, 2
      // Predicated region
      $region49: #{tpu_custom_call.1} parent=47 // pred_check
        %p3318 = pneg %p150
      $region50: #{tpu_custom_call.1} parent=47 // pred_check_branch
        %3320 = sbr.rel (%p3318) target = $region52
      $region51: #{tpu_custom_call.1} parent=47 // pred_region
        %p3321 = scmp.lt.s32.totalorder %s17, 1
        %s3322 = scalar_select %p3321, %s17, 1
        %s3323 = smul.addr %s3322, 32
        %s3324 = smul.addr %s3323, 4
        %s3325 = scalar_lea.vmem %s5, %s3324
      $region52: #{tpu_custom_call.1} parent=47 // pred_fallthru
        _
    $region48: #{tpu_custom_call.1} parent=5 // pred_fallthru
      _
  $region6: #{tpu_custom_call.1} parent=0 // loop_footer
    %s15 = sadd.s32 1, %s11
  $region7: #{tpu_custom_call.1} parent=0 // loop_footer_branch
    %10 = sbr.rel target = $region3
  $region8: #{tpu_custom_call.1} parent=0 // loop_exit
    _

</llo_original>
